<compile_context>
chip_gen: v5e
topology: v5e:2x2
jax: 0.10.0
libtpu: 0.0.40
codegen_flags: <defaults>
</compile_context>

<pallas_src>
import jax
import jax.numpy as jnp
import numpy as np
from jax.experimental import pallas as pl
from jax.experimental.pallas import tpu as pltpu


def biencoder_kernel(lbl_ref, h1_ref, h2_ref, m1_ref, m2_ref, w_ref, bias_ref,
                     logits_ref, nll_ref,
                     acc1_ref, acc2_ref, msum1_ref, msum2_ref):
    s = pl.program_id(1)
    ns = pl.num_programs(1)

    # ---- init accumulators at the start of each batch tile's seq sweep ------
    @pl.when(s == 0)
    def _init():
        acc1_ref[...] = jnp.zeros_like(acc1_ref)
        acc2_ref[...] = jnp.zeros_like(acc2_ref)
        msum1_ref[...] = jnp.zeros_like(msum1_ref)
        msum2_ref[...] = jnp.zeros_like(msum2_ref)

    h1 = h1_ref[...]                      # [tb, ts, H]  (bf16)
    h2 = h2_ref[...]                      # [tb, ts, H]  (bf16)
    m1 = m1_ref[...]                      # [tb, ts]     (f32)
    m2 = m2_ref[...]                      # [tb, ts]     (f32)

    # ---- pooling partial sums on the MXU: sum_s m[b,s] * h[b,s,:] -----------
    # bf16 x bf16 products with f32 accumulation (exact for 0/1 masks).
    acc1_ref[...] += jnp.einsum(
        'bqs,bsh->bqh', m1[:, None, :].astype(h1.dtype), h1,
        preferred_element_type=jnp.float32)[:, 0, :]
    acc2_ref[...] += jnp.einsum(
        'bqs,bsh->bqh', m2[:, None, :].astype(h2.dtype), h2,
        preferred_element_type=jnp.float32)[:, 0, :]
    msum1_ref[...] += jnp.sum(m1, axis=-1, keepdims=True)
    msum2_ref[...] += jnp.sum(m2, axis=-1, keepdims=True)

    # ---- finalize: pooled means -> bilinear -> per-example CE ---------------
    @pl.when(s == ns - 1)
    def _finalize():
        e1 = acc1_ref[...] / msum1_ref[...]          # [tb, H] f32
        e2 = acc2_ref[...] / msum2_ref[...]          # [tb, H] f32

        w = w_ref[...]                               # [C, H, H] f32
        bias = bias_ref[...]                         # [1, C]    f32

        # logits[b,c] = e1[b]^T W[c] e2[b] + bias[c]
        # (C is small here, so the [tb, C, H] intermediate is a few KiB.)
        t = jnp.einsum('bi,cij->bcj', e1, w, preferred_element_type=jnp.float32)
        logits = jnp.sum(t * e2[:, None, :], axis=-1) + bias     # [tb, C]
        logits_ref[...] = logits.astype(logits_ref.dtype)

        # cross-entropy (per-example NLL); one-hot built in-register from labels
        lbl = lbl_ref[...]                                       # [tb, 1] int32
        classes = jax.lax.broadcasted_iota(jnp.int32, logits.shape, 1)
        onehot = (classes == lbl).astype(jnp.float32)            # [tb, C]
        mx = jnp.max(logits, axis=-1, keepdims=True)
        lse = mx + jnp.log(jnp.sum(jnp.exp(logits - mx), axis=-1, keepdims=True))
        nll_ref[...] = jnp.sum(onehot * (lse - logits), axis=-1, keepdims=True)


def biencoder_forward(h1, h2, mask1, mask2, w, bias, labels, *, tb=8, ts=128):
    """h1, h2: [B,S,H] (bf16 or f32); mask1/2: [B,S]; w: [C,H,H]; bias: [C];
    labels: [B] int32.  Returns (logits [B,C] f32, scalar CE loss)."""
    B, S, H = h1.shape
    C = w.shape[0]

    # Tile-size fallbacks so small/odd shapes still satisfy block constraints.
    if B % tb != 0:
        tb = B
    if S % ts != 0:
        ts = S

    m1 = mask1.astype(jnp.float32)
    m2 = mask2.astype(jnp.float32)
    w_f32 = w.astype(jnp.float32)
    bias2d = bias.reshape(1, C).astype(jnp.float32)
    labels2d = labels.reshape(B, 1).astype(jnp.int32)

    grid = (B // tb, S // ts)

    logits, nll = pl.pallas_call(
        biencoder_kernel,
        out_shape=(jax.ShapeDtypeStruct((B, C), jnp.float32),
                   jax.ShapeDtypeStruct((B, 1), jnp.float32)),
        grid_spec=pltpu.PrefetchScalarGridSpec(
            num_scalar_prefetch=0,
            grid=grid,
            in_specs=[
                pl.BlockSpec((tb, 1), lambda b, s: (b, 0)),          # labels
                pl.BlockSpec((tb, ts, H), lambda b, s: (b, s, 0)),   # h1
                pl.BlockSpec((tb, ts, H), lambda b, s: (b, s, 0)),   # h2
                pl.BlockSpec((tb, ts), lambda b, s: (b, s)),         # mask1
                pl.BlockSpec((tb, ts), lambda b, s: (b, s)),         # mask2
                pl.BlockSpec((C, H, H), lambda b, s: (0, 0, 0)),     # bilinear W
                pl.BlockSpec((1, C), lambda b, s: (0, 0)),           # bias
            ],
            out_specs=(
                pl.BlockSpec((tb, C), lambda b, s: (b, 0)),          # logits
                pl.BlockSpec((tb, 1), lambda b, s: (b, 0)),          # per-ex NLL
            ),
            scratch_shapes=[
                pltpu.VMEM((tb, H), jnp.float32),   # sum(m1 * h1)
                pltpu.VMEM((tb, H), jnp.float32),   # sum(m2 * h2)
                pltpu.VMEM((tb, 1), jnp.float32),   # sum(m1)
                pltpu.VMEM((tb, 1), jnp.float32),   # sum(m2)
            ]),
        compiler_params=pltpu.CompilerParams(
            dimension_semantics=("parallel", "arbitrary"),
            vmem_limit_bytes=32 * 1024 * 1024),
    )(labels2d, h1, h2, m1, m2, w_f32, bias2d)

    # Final mean over B per-example losses (kept outside the kernel because the
    # batch grid axis is "parallel" across TensorCores).
    loss = jnp.mean(nll)
    return logits, loss


def reference_forward(h1, h2, mask1, mask2, w, bias, labels):
    h1 = h1.astype(jnp.float32)
    h2 = h2.astype(jnp.float32)
    m1 = mask1.astype(jnp.float32)[:, :, None]
    m2 = mask2.astype(jnp.float32)[:, :, None]
    e1 = (h1 * m1).sum(axis=1) / m1.sum(axis=1)
    e2 = (h2 * m2).sum(axis=1) / m2.sum(axis=1)
    logits = jnp.einsum('bi,cij,bj->bc', e1, w, e2) + bias[None, :]
    logp = jax.nn.log_softmax(logits, axis=-1)
    loss = -jnp.mean(jnp.take_along_axis(logp, labels[:, None], axis=-1))
    return logits, loss


if __name__ == "__main__":
    # Small but tiling-friendly shapes: grid = (2 batch tiles, 2 seq tiles).
    B, S, H, C = 16, 256, 128, 2

    key = jax.random.PRNGKey(0)
    k1, k2, kw, kb, kl, kn1, kn2 = jax.random.split(key, 7)

    # "encoder outputs": last_hidden_state for the two inputs, in bf16
    h1 = jax.random.normal(k1, (B, S, H), dtype=jnp.float32).astype(jnp.bfloat16)
    h2 = jax.random.normal(k2, (B, S, H), dtype=jnp.float32).astype(jnp.bfloat16)

    # attention masks with ragged valid lengths (>= 1 token each)
    len1 = jax.random.randint(kn1, (B,), minval=1, maxval=S + 1)
    len2 = jax.random.randint(kn2, (B,), minval=1, maxval=S + 1)
    mask1 = (jnp.arange(S)[None, :] < len1[:, None]).astype(jnp.float32)
    mask2 = (jnp.arange(S)[None, :] < len2[:, None]).astype(jnp.float32)

    # nn.Bilinear(hidden, hidden, num_classes) parameters
    bound = 1.0 / np.sqrt(H)
    w = jax.random.uniform(kw, (C, H, H), minval=-bound, maxval=bound,
                           dtype=jnp.float32)
    bias = jax.random.uniform(kb, (C,), minval=-bound, maxval=bound,
                              dtype=jnp.float32)

    labels = jax.random.randint(kl, (B,), minval=0, maxval=C).astype(jnp.int32)

    logits, loss = biencoder_forward(h1, h2, mask1, mask2, w, bias, labels)
    jax.block_until_ready((logits, loss))

    ref_logits, ref_loss = reference_forward(h1, h2, mask1, mask2, w, bias, labels)
    np.testing.assert_allclose(np.asarray(logits), np.asarray(ref_logits),
                               rtol=1e-5, atol=1e-5)
    np.testing.assert_allclose(np.asarray(loss), np.asarray(ref_loss),
                               rtol=1e-5, atol=1e-5)

    print("KERNEL_OK")
</pallas_src>

<mosaic_0001>
module attributes {stable_mosaic.version = 11 : i64} {
  func.func @biencoder_kernel(%arg0: i32, %arg1: i32, %arg2: memref<8x1xi32, #tpu.memory_space<vmem>>, %arg3: memref<8x128x128xbf16, #tpu.memory_space<vmem>>, %arg4: memref<8x128x128xbf16, #tpu.memory_space<vmem>>, %arg5: memref<8x128xf32, #tpu.memory_space<vmem>>, %arg6: memref<8x128xf32, #tpu.memory_space<vmem>>, %arg7: memref<2x128x128xf32, #tpu.memory_space<vmem>>, %arg8: memref<1x2xf32, #tpu.memory_space<vmem>>, %arg9: memref<8x2xf32, #tpu.memory_space<vmem>>, %arg10: memref<8x1xf32, #tpu.memory_space<vmem>>, %arg11: memref<8x128xf32, #tpu.memory_space<vmem>>, %arg12: memref<8x128xf32, #tpu.memory_space<vmem>>, %arg13: memref<8x1xf32, #tpu.memory_space<vmem>>, %arg14: memref<8x1xf32, #tpu.memory_space<vmem>>) attributes {dimension_semantics = [#tpu.dimension_semantics<parallel>, #tpu.dimension_semantics<arbitrary>], iteration_bounds = array<i64: 2, 2>, scalar_prefetch = 0 : i64, scratch_operands = 4 : i64, tpu.core_type = #tpu.core_type<tc>, window_params = [{transform_indices = @transform_0, window_bounds = array<i64: 8, 1>}, {transform_indices = @transform_1, window_bounds = array<i64: 8, 128, 128>}, {transform_indices = @transform_2, window_bounds = array<i64: 8, 128, 128>}, {transform_indices = @transform_3, window_bounds = array<i64: 8, 128>}, {transform_indices = @transform_4, window_bounds = array<i64: 8, 128>}, {pipeline_mode = #tpu.pipeline_mode<synchronous>, transform_indices = @transform_5, window_bounds = array<i64: 2, 128, 128>}, {pipeline_mode = #tpu.pipeline_mode<synchronous>, transform_indices = @transform_6, window_bounds = array<i64: 1, 2>}, {transform_indices = @transform_7, window_bounds = array<i64: 8, 2>}, {transform_indices = @transform_8, window_bounds = array<i64: 8, 1>}]} {
    %c0_i32 = arith.constant 0 : i32
    %0 = arith.cmpi eq, %arg1, %c0_i32 : i32
    %1 = arith.extui %0 : i1 to i32
    %c0_i32_0 = arith.constant 0 : i32
    %2 = arith.cmpi ne, %1, %c0_i32_0 : i32
    scf.if %2 {
      %cst_30 = arith.constant 0.000000e+00 : f32
      %34 = vector.broadcast %cst_30 : f32 to vector<8x128xf32>
      %c0_31 = arith.constant 0 : index
      %c0_32 = arith.constant 0 : index
      %35 = vector.load %arg11[%c0_31, %c0_32] : memref<8x128xf32, #tpu.memory_space<vmem>>, vector<8x128xf32>
      tpu.vector_store %arg11[%c0_31, %c0_32], %34 {strides = array<i32>} : memref<8x128xf32, #tpu.memory_space<vmem>>, vector<8x128xf32>,
      %cst_33 = arith.constant 0.000000e+00 : f32
      %36 = vector.broadcast %cst_33 : f32 to vector<8x128xf32>
      %c0_34 = arith.constant 0 : index
      %c0_35 = arith.constant 0 : index
      %37 = vector.load %arg12[%c0_34, %c0_35] : memref<8x128xf32, #tpu.memory_space<vmem>>, vector<8x128xf32>
      tpu.vector_store %arg12[%c0_34, %c0_35], %36 {strides = array<i32>} : memref<8x128xf32, #tpu.memory_space<vmem>>, vector<8x128xf32>,
      %cst_36 = arith.constant 0.000000e+00 : f32
      %38 = vector.broadcast %cst_36 : f32 to vector<8x1xf32>
      %c0_37 = arith.constant 0 : index
      %c0_38 = arith.constant 0 : index
      %39 = vector.load %arg13[%c0_37, %c0_38] : memref<8x1xf32, #tpu.memory_space<vmem>>, vector<8x1xf32>
      tpu.vector_store %arg13[%c0_37, %c0_38], %38 {strides = array<i32>} : memref<8x1xf32, #tpu.memory_space<vmem>>, vector<8x1xf32>,
      %cst_39 = arith.constant 0.000000e+00 : f32
      %40 = vector.broadcast %cst_39 : f32 to vector<8x1xf32>
      %c0_40 = arith.constant 0 : index
      %c0_41 = arith.constant 0 : index
      %41 = vector.load %arg14[%c0_40, %c0_41] : memref<8x1xf32, #tpu.memory_space<vmem>>, vector<8x1xf32>
      tpu.vector_store %arg14[%c0_40, %c0_41], %40 {strides = array<i32>} : memref<8x1xf32, #tpu.memory_space<vmem>>, vector<8x1xf32>,
    } else {
    }
    %c0 = arith.constant 0 : index
    %c0_1 = arith.constant 0 : index
    %c0_2 = arith.constant 0 : index
    %3 = vector.load %arg3[%c0, %c0_1, %c0_2] : memref<8x128x128xbf16, #tpu.memory_space<vmem>>, vector<8x128x128xbf16>
    %c0_3 = arith.constant 0 : index
    %c0_4 = arith.constant 0 : index
    %c0_5 = arith.constant 0 : index
    %4 = vector.load %arg4[%c0_3, %c0_4, %c0_5] : memref<8x128x128xbf16, #tpu.memory_space<vmem>>, vector<8x128x128xbf16>
    %c0_6 = arith.constant 0 : index
    %c0_7 = arith.constant 0 : index
    %5 = vector.load %arg5[%c0_6, %c0_7] : memref<8x128xf32, #tpu.memory_space<vmem>>, vector<8x128xf32>
    %c0_8 = arith.constant 0 : index
    %c0_9 = arith.constant 0 : index
    %6 = vector.load %arg6[%c0_8, %c0_9] : memref<8x128xf32, #tpu.memory_space<vmem>>, vector<8x128xf32>
    %c0_10 = arith.constant 0 : index
    %c0_11 = arith.constant 0 : index
    %7 = vector.load %arg11[%c0_10, %c0_11] : memref<8x128xf32, #tpu.memory_space<vmem>>, vector<8x128xf32>
    %8 = vector.shape_cast %5 : vector<8x128xf32> to vector<8x1x128xf32>
    %9 = arith.truncf %8 : vector<8x1x128xf32> to vector<8x1x128xbf16>
    "tpu.trace_start"() <{level = 10 : i32, message = "bqs,bsh->bqh"}> : () -> ()
    %cst = arith.constant dense<0.000000e+00> : vector<8x1x128xf32>
    %10 = tpu.matmul %9, %3, %cst {dimension_numbers = #tpu.dot_dimension_numbers<[2], [1], [1], [2], [0, 0, 0, 1, 1, 2], [0], [0]>} : vector<8x1x128xbf16>, vector<8x128x128xbf16>, vector<8x1x128xf32> -> vector<8x1x128xf32>
    "tpu.trace_stop"() : () -> ()
    %11 = vector.shape_cast %10 : vector<8x1x128xf32> to vector<8x128xf32>
    %12 = arith.addf %7, %11 : vector<8x128xf32>
    %c0_12 = arith.constant 0 : index
    %c0_13 = arith.constant 0 : index
    %13 = vector.load %arg11[%c0_12, %c0_13] : memref<8x128xf32, #tpu.memory_space<vmem>>, vector<8x128xf32>
    tpu.vector_store %arg11[%c0_12, %c0_13], %12 {strides = array<i32>} : memref<8x128xf32, #tpu.memory_space<vmem>>, vector<8x128xf32>,
    %c0_14 = arith.constant 0 : index
    %c0_15 = arith.constant 0 : index
    %14 = vector.load %arg12[%c0_14, %c0_15] : memref<8x128xf32, #tpu.memory_space<vmem>>, vector<8x128xf32>
    %15 = vector.shape_cast %6 : vector<8x128xf32> to vector<8x1x128xf32>
    %16 = arith.truncf %15 : vector<8x1x128xf32> to vector<8x1x128xbf16>
    "tpu.trace_start"() <{level = 10 : i32, message = "bqs,bsh->bqh"}> : () -> ()
    %cst_16 = arith.constant dense<0.000000e+00> : vector<8x1x128xf32>
    %17 = tpu.matmul %16, %4, %cst_16 {dimension_numbers = #tpu.dot_dimension_numbers<[2], [1], [1], [2], [0, 0, 0, 1, 1, 2], [0], [0]>} : vector<8x1x128xbf16>, vector<8x128x128xbf16>, vector<8x1x128xf32> -> vector<8x1x128xf32>
    "tpu.trace_stop"() : () -> ()
    %18 = vector.shape_cast %17 : vector<8x1x128xf32> to vector<8x128xf32>
    %19 = arith.addf %14, %18 : vector<8x128xf32>
    %c0_17 = arith.constant 0 : index
    %c0_18 = arith.constant 0 : index
    %20 = vector.load %arg12[%c0_17, %c0_18] : memref<8x128xf32, #tpu.memory_space<vmem>>, vector<8x128xf32>
    tpu.vector_store %arg12[%c0_17, %c0_18], %19 {strides = array<i32>} : memref<8x128xf32, #tpu.memory_space<vmem>>, vector<8x128xf32>,
    %c0_19 = arith.constant 0 : index
    %c0_20 = arith.constant 0 : index
    %21 = vector.load %arg13[%c0_19, %c0_20] : memref<8x1xf32, #tpu.memory_space<vmem>>, vector<8x1xf32>
    %cst_21 = arith.constant dense<0.000000e+00> : vector<8xf32>
    %22 = vector.multi_reduction <add>, %5, %cst_21 [1] : vector<8x128xf32> to vector<8xf32>
    %23 = vector.shape_cast %22 : vector<8xf32> to vector<8x1xf32>
    %24 = arith.addf %21, %23 : vector<8x1xf32>
    %c0_22 = arith.constant 0 : index
    %c0_23 = arith.constant 0 : index
    %25 = vector.load %arg13[%c0_22, %c0_23] : memref<8x1xf32, #tpu.memory_space<vmem>>, vector<8x1xf32>
    tpu.vector_store %arg13[%c0_22, %c0_23], %24 {strides = array<i32>} : memref<8x1xf32, #tpu.memory_space<vmem>>, vector<8x1xf32>,
    %c0_24 = arith.constant 0 : index
    %c0_25 = arith.constant 0 : index
    %26 = vector.load %arg14[%c0_24, %c0_25] : memref<8x1xf32, #tpu.memory_space<vmem>>, vector<8x1xf32>
    %cst_26 = arith.constant dense<0.000000e+00> : vector<8xf32>
    %27 = vector.multi_reduction <add>, %6, %cst_26 [1] : vector<8x128xf32> to vector<8xf32>
    %28 = vector.shape_cast %27 : vector<8xf32> to vector<8x1xf32>
    %29 = arith.addf %26, %28 : vector<8x1xf32>
    %c0_27 = arith.constant 0 : index
    %c0_28 = arith.constant 0 : index
    %30 = vector.load %arg14[%c0_27, %c0_28] : memref<8x1xf32, #tpu.memory_space<vmem>>, vector<8x1xf32>
    tpu.vector_store %arg14[%c0_27, %c0_28], %29 {strides = array<i32>} : memref<8x1xf32, #tpu.memory_space<vmem>>, vector<8x1xf32>,
    %c1_i32 = arith.constant 1 : i32
    %31 = arith.cmpi eq, %arg1, %c1_i32 : i32
    %32 = arith.extui %31 : i1 to i32
    %c0_i32_29 = arith.constant 0 : i32
    %33 = arith.cmpi ne, %32, %c0_i32_29 : i32
    scf.if %33 {
      %c0_30 = arith.constant 0 : index
      %c0_31 = arith.constant 0 : index
      %34 = vector.load %arg11[%c0_30, %c0_31] : memref<8x128xf32, #tpu.memory_space<vmem>>, vector<8x128xf32>
      %c0_32 = arith.constant 0 : index
      %c0_33 = arith.constant 0 : index
      %35 = vector.load %arg13[%c0_32, %c0_33] : memref<8x1xf32, #tpu.memory_space<vmem>>, vector<8x1xf32>
      %36 = vector.broadcast %35 : vector<8x1xf32> to vector<8x128xf32>
      %37 = arith.divf %34, %36 : vector<8x128xf32>
      %c0_34 = arith.constant 0 : index
      %c0_35 = arith.constant 0 : index
      %38 = vector.load %arg12[%c0_34, %c0_35] : memref<8x128xf32, #tpu.memory_space<vmem>>, vector<8x128xf32>
      %c0_36 = arith.constant 0 : index
      %c0_37 = arith.constant 0 : index
      %39 = vector.load %arg14[%c0_36, %c0_37] : memref<8x1xf32, #tpu.memory_space<vmem>>, vector<8x1xf32>
      %40 = vector.broadcast %39 : vector<8x1xf32> to vector<8x128xf32>
      %41 = arith.divf %38, %40 : vector<8x128xf32>
      %c0_38 = arith.constant 0 : index
      %c0_39 = arith.constant 0 : index
      %c0_40 = arith.constant 0 : index
      %42 = vector.load %arg7[%c0_38, %c0_39, %c0_40] : memref<2x128x128xf32, #tpu.memory_space<vmem>>, vector<2x128x128xf32>
      %c0_41 = arith.constant 0 : index
      %c0_42 = arith.constant 0 : index
      %43 = vector.load %arg8[%c0_41, %c0_42] : memref<1x2xf32, #tpu.memory_space<vmem>>, vector<1x2xf32>
      "tpu.trace_start"() <{level = 10 : i32, message = "bi,cij->bcj"}> : () -> ()
      %cst_43 = arith.constant dense<0.000000e+00> : vector<8x2x128xf32>
      %44 = tpu.matmul %37, %42, %cst_43 {dimension_numbers = #tpu.dot_dimension_numbers<[1], [1], [0], [0, 2], [0, 0, 1, 0, 1, 2], [], []>} : vector<8x128xf32>, vector<2x128x128xf32>, vector<8x2x128xf32> -> vector<8x2x128xf32>
      "tpu.trace_stop"() : () -> ()
      %45 = vector.shape_cast %41 : vector<8x128xf32> to vector<8x1x128xf32>
      %46 = vector.broadcast %45 : vector<8x1x128xf32> to vector<8x2x128xf32>
      %47 = arith.mulf %44, %46 : vector<8x2x128xf32>
      %cst_44 = arith.constant dense<0.000000e+00> : vector<8x2xf32>
      %48 = vector.multi_reduction <add>, %47, %cst_44 [2] : vector<8x2x128xf32> to vector<8x2xf32>
      %49 = vector.broadcast %43 : vector<1x2xf32> to vector<8x2xf32>
      %50 = arith.addf %48, %49 : vector<8x2xf32>
      %c0_45 = arith.constant 0 : index
      %c0_46 = arith.constant 0 : index
      %51 = vector.load %arg9[%c0_45, %c0_46] : memref<8x2xf32, #tpu.memory_space<vmem>>, vector<8x2xf32>
      tpu.vector_store %arg9[%c0_45, %c0_46], %50 {strides = array<i32>} : memref<8x2xf32, #tpu.memory_space<vmem>>, vector<8x2xf32>,
      %c0_47 = arith.constant 0 : index
      %c0_48 = arith.constant 0 : index
      %52 = vector.load %arg2[%c0_47, %c0_48] : memref<8x1xi32, #tpu.memory_space<vmem>>, vector<8x1xi32>
      %53 = tpu.iota {dimensions = array<i32: 1>} : vector<8x2xi32>
      %54 = vector.broadcast %52 : vector<8x1xi32> to vector<8x2xi32>
      %55 = arith.cmpi eq, %53, %54 : vector<8x2xi32>
      %56 = arith.extui %55 : vector<8x2xi1> to vector<8x2xi32>
      %57 = arith.sitofp %56 : vector<8x2xi32> to vector<8x2xf32>
      %cst_49 = arith.constant dense<0xFF800000> : vector<8xf32>
      %58 = vector.multi_reduction <maximumf>, %50, %cst_49 [1] : vector<8x2xf32> to vector<8xf32>
      %59 = vector.shape_cast %58 : vector<8xf32> to vector<8x1xf32>
      %60 = vector.broadcast %59 : vector<8x1xf32> to vector<8x2xf32>
      %61 = arith.subf %50, %60 : vector<8x2xf32>
      %62 = math.exp %61 : vector<8x2xf32>
      %cst_50 = arith.constant dense<0.000000e+00> : vector<8xf32>
      %63 = vector.multi_reduction <add>, %62, %cst_50 [1] : vector<8x2xf32> to vector<8xf32>
      %64 = vector.shape_cast %63 : vector<8xf32> to vector<8x1xf32>
      %65 = math.log %64 : vector<8x1xf32>
      %66 = arith.addf %59, %65 : vector<8x1xf32>
      %67 = vector.broadcast %66 : vector<8x1xf32> to vector<8x2xf32>
      %68 = arith.subf %67, %50 : vector<8x2xf32>
      %69 = arith.mulf %57, %68 : vector<8x2xf32>
      %cst_51 = arith.constant dense<0.000000e+00> : vector<8xf32>
      %70 = vector.multi_reduction <add>, %69, %cst_51 [1] : vector<8x2xf32> to vector<8xf32>
      %71 = vector.shape_cast %70 : vector<8xf32> to vector<8x1xf32>
      %c0_52 = arith.constant 0 : index
      %c0_53 = arith.constant 0 : index
      %72 = vector.load %arg10[%c0_52, %c0_53] : memref<8x1xf32, #tpu.memory_space<vmem>>, vector<8x1xf32>
      tpu.vector_store %arg10[%c0_52, %c0_53], %71 {strides = array<i32>} : memref<8x1xf32, #tpu.memory_space<vmem>>, vector<8x1xf32>,
    } else {
    }
    return
  }
  func.func @transform_0(%arg0: i32, %arg1: i32) -> (i32, i32) {
    %c0_i32 = arith.constant 0 : i32
    %c0_i32_0 = arith.constant 0 : i32
    return %arg0, %c0_i32 : i32, i32
  }
  func.func @transform_1(%arg0: i32, %arg1: i32) -> (i32, i32, i32) {
    %c0_i32 = arith.constant 0 : i32
    %c0_i32_0 = arith.constant 0 : i32
    return %arg0, %arg1, %c0_i32 : i32, i32, i32
  }
  func.func @transform_2(%arg0: i32, %arg1: i32) -> (i32, i32, i32) {
    %c0_i32 = arith.constant 0 : i32
    %c0_i32_0 = arith.constant 0 : i32
    return %arg0, %arg1, %c0_i32 : i32, i32, i32
  }
  func.func @transform_3(%arg0: i32, %arg1: i32) -> (i32, i32) {
    %c0_i32 = arith.constant 0 : i32
    return %arg0, %arg1 : i32, i32
  }
  func.func @transform_4(%arg0: i32, %arg1: i32) -> (i32, i32) {
    %c0_i32 = arith.constant 0 : i32
    return %arg0, %arg1 : i32, i32
  }
  func.func @transform_5(%arg0: i32, %arg1: i32) -> (i32, i32, i32) {
    %c0_i32 = arith.constant 0 : i32
    %c0_i32_0 = arith.constant 0 : i32
    %c0_i32_1 = arith.constant 0 : i32
    %c0_i32_2 = arith.constant 0 : i32
    return %c0_i32, %c0_i32_0, %c0_i32_1 : i32, i32, i32
  }
  func.func @transform_6(%arg0: i32, %arg1: i32) -> (i32, i32) {
    %c0_i32 = arith.constant 0 : i32
    %c0_i32_0 = arith.constant 0 : i32
    %c0_i32_1 = arith.constant 0 : i32
    return %c0_i32, %c0_i32_0 : i32, i32
  }
  func.func @transform_7(%arg0: i32, %arg1: i32) -> (i32, i32) {
    %c0_i32 = arith.constant 0 : i32
    %c0_i32_0 = arith.constant 0 : i32
    return %arg0, %c0_i32 : i32, i32
  }
  func.func @transform_8(%arg0: i32, %arg1: i32) -> (i32, i32) {
    %c0_i32 = arith.constant 0 : i32
    %c0_i32_0 = arith.constant 0 : i32
    return %arg0, %c0_i32 : i32, i32
  }
}

</mosaic_0001>

<llo_original>
// kernel: tpu_custom_call.1
$region0: #{tpu_custom_call.1}
  #allocation0 [shape = 'u32[]', space=smem, size = 0x4, offset = 0x4, fixed_abs, tag = 'smem constant byte address 0x4 - core index']
  #allocation1 [shape = 'u32[72,128]{1,0:T(1,128)}', space=vmem, size = 0x9000, scoped, tag = 'internal scratch']
  #allocation2 [shape = 'f32[8,128]{1,0:T(8,128)}', space=vmem, size = 0x1000, scoped, tag = 'scratch operand']
  #allocation3 [shape = 'f32[8,128]{1,0:T(8,128)}', space=vmem, size = 0x1000, scoped, tag = 'scratch operand']
  #allocation4 [shape = 'f32[8,1]{1,0:T(8,128)}', space=vmem, size = 0x1000, scoped, tag = 'scratch operand']
  #allocation5 [shape = 'f32[8,1]{1,0:T(8,128)}', space=vmem, size = 0x1000, scoped, tag = 'scratch operand']
  #allocation14 [shape = 's32[]', space=sflag, size = 0x4, offset = 0, fixed_abs, tag = 'sflag constant byte address 0x0 - dummy sync flag']
  #allocation16 [shape = 's32[]', space=sflag, size = 0x4, offset = 0, fixed_abs, tag = 'sflag constant byte address 0x0 - dummy sync flag']
  %s0 = inlined_call_operand.vmem [shape: s32[16,1], index: 0, kind: input, shape index: {}]
  %s1 = inlined_call_operand.hbm [shape: bf16[16,256,128], index: 1, kind: input, shape index: {}]
  %s2 = inlined_call_operand.hbm [shape: bf16[16,256,128], index: 2, kind: input, shape index: {}]
  %s3 = inlined_call_operand.hbm [shape: f32[16,256], index: 3, kind: input, shape index: {}]
  %s4 = inlined_call_operand.hbm [shape: f32[16,256], index: 4, kind: input, shape index: {}]
  %s5 = inlined_call_operand.hbm [shape: f32[2,128,128], index: 5, kind: input, shape index: {}]
  %s6 = inlined_call_operand.vmem [shape: f32[1,2], index: 6, kind: input, shape index: {}]
  %s7 = inlined_call_operand.vmem [shape: f32[16,2], index: 7, kind: output, shape index: {0}]
  %s8 = inlined_call_operand.vmem [shape: f32[16,1], index: 8, kind: output, shape index: {1}]
  %9 = xla_tuple %s7, %s8
  %s10 = sld [smem:[#allocation0]]
  $region97: #{tpu_custom_call.1} parent=0
    _
  %s12 = ssub.s32 1, %s10
  %s13 = scalar_select 0, %s12, %s10
  $region1: #{tpu_custom_call.1} parent=0
    #allocation6 [shape = 'u8[524288]{0}', space=vmem, size = 0x80000, scoped, tag = 'input window, operand 1']
    #allocation7 [shape = 's32[2]{0}', space=sflag, size = 0x8, scoped, tag = 'scoped memory for tpu_custom_call.1']
    #allocation8 [shape = 'u8[524288]{0}', space=vmem, size = 0x80000, scoped, tag = 'input window, operand 2']
    #allocation9 [shape = 's32[2]{0}', space=sflag, size = 0x8, scoped, tag = 'scoped memory for tpu_custom_call.1']
    #allocation10 [shape = 'u8[8192]{0}', space=vmem, size = 0x2000, scoped, tag = 'input window, operand 3']
    #allocation11 [shape = 'u8[8192]{0}', space=vmem, size = 0x2000, scoped, tag = 'input window, operand 4']
    #allocation12 [shape = 's32[2]{0}', space=sflag, size = 0x8, scoped, tag = 'scoped memory for tpu_custom_call.1']
    #allocation13 [shape = 'u8[131072]{0}', space=vmem, size = 0x20000, scoped, tag = 'input window, operand 5, single buffered']
    %14 = vsyncpa [#allocation7], 0
    %s15 = scalar_lea.sflag [#allocation7], 1
    %16 = vsyncpa %s15, 0
    %17 = vsyncpa [#allocation9], 0
    %s18 = scalar_lea.sflag [#allocation9], 1
    %19 = vsyncpa %s18, 0
    %20 = vsyncpa [#allocation12], 0
    %s21 = scalar_lea.sflag [#allocation12], 1
    %22 = vsyncpa %s21, 0
    loop: start=0, step=1, limit=6
    $region2: #{tpu_custom_call.1} parent=1 // loop_pre_header
      _
    $region3: #{tpu_custom_call.1} parent=1 // loop_header
      %s24 = sphi 0, %s28
      %p25 = scmp.ge.s32.totalorder %s24, 6
      %s31 = sphi 0, %s43
      %s32 = sphi 0, %s39
      %s33 = sphi 0, %s31
      %s34 = sphi 0, %s32
      %s35 = sphi 0, %s33
      %s36 = sphi 0, %s34
      %s46 = sphi 0, %s48
      %s49 = sphi 0, %s46
      %s50 = sphi 0, %s49
      %s66 = sphi 0, %s50
      %s74 = sphi 0, %s76
      %s77 = sphi 0, %s74
      %s78 = sphi 0, %s77
      %s94 = sphi 0, %s78
      %s102 = sphi 0, %s104
      %s105 = sphi 0, %s102
      %s106 = sphi 0, %s105
      %s122 = sphi 0, %s106
      %s130 = sphi 0, %s132
      %s133 = sphi 0, %s130
      %s134 = sphi 0, %s133
      %s150 = sphi 0, %s134
      %s158 = sphi 0, %s160
      %s161 = sphi 0, %s158
      %s162 = sphi 0, %s161
      %s178 = sphi 0, %s162
      %s182 = sphi 0, %s182
      %s184 = sphi 0, %s182
      %s185 = sphi 0, %s184
      %s199 = sphi 0, %s185
      %s203 = sphi 0, %s203
      %s205 = sphi 0, %s203
      %s206 = sphi 0, %s205
      %s220 = sphi 0, %s206
      %s226 = sphi 0, %s228
      %s229 = sphi 0, %s226
      %s230 = sphi 0, %s229
      %s246 = sphi 0, %s230
      %s252 = sphi 0, %s254
      %s255 = sphi 0, %s252
      %s256 = sphi 0, %s255
      %s272 = sphi 0, %s256
    $region4: #{tpu_custom_call.1} parent=1 // loop_header_branch
      %27 = sbr.rel (%p25) target = $region8
    $region5: #{tpu_custom_call.1} parent=1 // loop_body
      %s29 = ssub.s32 %s24, 1
      %s30 = ssub.s32 %s24, 2
      %s37 = sadd.s32 1, %s32
      %p38 = scmp.ge.s32.totalorder %s37, 2
      %s39 = scalar_select %p38, 0, %s37
      %s40 = sadd.s32 1, %s31
      %s41 = scalar_select %p38, %s40, %s31
      %p42 = scmp.ge.s32.totalorder %s41, 2
      %s43 = scalar_select %p42, 0, %s41
      %s44 = ssub.s32 %s31, %s43
      %p45 = scmp.eq.s32.totalorder %s44, 0
      %s47 = sadd.s32 %s46, 1
      %s48 = scalar_select %p45, %s46, %s47
      %p51 = pneg %p45
      %p52 = scmp.eq.s32.totalorder %s24, 3
      %p53 = por %p51, %p52
      %p54 = scmp.ne.s32.totalorder %s46, %s49
      %p55 = scmp.eq.s32.totalorder %s24, 0
      %p56 = por %p54, %p55
      %p57 = scmp.ne.s32.totalorder %s46, %s49
      %p58 = scmp.eq.s32.totalorder %s29, 3
      %p59 = por %p57, %p58
      %p60 = scmp.ne.s32.totalorder %s49, %s50
      %p61 = scmp.eq.s32.totalorder %s29, 0
      %p62 = por %p60, %p61
      %p63 = scmp.ne.s32.totalorder %s49, %s50
      %p64 = scmp.eq.s32.totalorder %s30, 3
      %p65 = por %p63, %p64
      %p67 = scmp.ne.s32.totalorder %s50, %s66
      %p68 = scmp.eq.s32.totalorder %s30, 0
      %p69 = por %p67, %p68
      %s70 = ssub.s32 %s31, %s43
      %s71 = ssub.s32 %s32, %s39
      %s72 = sor.u32 %s70, %s71
      %p73 = scmp.eq.s32.totalorder %s72, 0
      %s75 = sadd.s32 %s74, 1
      %s76 = scalar_select %p73, %s74, %s75
      %p79 = pneg %p73
      %p80 = scmp.eq.s32.totalorder %s24, 3
      %p81 = por %p79, %p80
      %p82 = scmp.ne.s32.totalorder %s74, %s77
      %p83 = scmp.eq.s32.totalorder %s24, 0
      %p84 = por %p82, %p83
      %p85 = scmp.ne.s32.totalorder %s74, %s77
      %p86 = scmp.eq.s32.totalorder %s29, 3
      %p87 = por %p85, %p86
      %p88 = scmp.ne.s32.totalorder %s77, %s78
      %p89 = scmp.eq.s32.totalorder %s29, 0
      %p90 = por %p88, %p89
      %p91 = scmp.ne.s32.totalorder %s77, %s78
      %p92 = scmp.eq.s32.totalorder %s30, 3
      %p93 = por %p91, %p92
      %p95 = scmp.ne.s32.totalorder %s78, %s94
      %p96 = scmp.eq.s32.totalorder %s30, 0
      %p97 = por %p95, %p96
      %s98 = ssub.s32 %s31, %s43
      %s99 = ssub.s32 %s32, %s39
      %s100 = sor.u32 %s98, %s99
      %p101 = scmp.eq.s32.totalorder %s100, 0
      %s103 = sadd.s32 %s102, 1
      %s104 = scalar_select %p101, %s102, %s103
      %p107 = pneg %p101
      %p108 = scmp.eq.s32.totalorder %s24, 3
      %p109 = por %p107, %p108
      %p110 = scmp.ne.s32.totalorder %s102, %s105
      %p111 = scmp.eq.s32.totalorder %s24, 0
      %p112 = por %p110, %p111
      %p113 = scmp.ne.s32.totalorder %s102, %s105
      %p114 = scmp.eq.s32.totalorder %s29, 3
      %p115 = por %p113, %p114
      %p116 = scmp.ne.s32.totalorder %s105, %s106
      %p117 = scmp.eq.s32.totalorder %s29, 0
      %p118 = por %p116, %p117
      %p119 = scmp.ne.s32.totalorder %s105, %s106
      %p120 = scmp.eq.s32.totalorder %s30, 3
      %p121 = por %p119, %p120
      %p123 = scmp.ne.s32.totalorder %s106, %s122
      %p124 = scmp.eq.s32.totalorder %s30, 0
      %p125 = por %p123, %p124
      %s126 = ssub.s32 %s31, %s43
      %s127 = ssub.s32 %s32, %s39
      %s128 = sor.u32 %s126, %s127
      %p129 = scmp.eq.s32.totalorder %s128, 0
      %s131 = sadd.s32 %s130, 1
      %s132 = scalar_select %p129, %s130, %s131
      %p135 = pneg %p129
      %p136 = scmp.eq.s32.totalorder %s24, 3
      %p137 = por %p135, %p136
      %p138 = scmp.ne.s32.totalorder %s130, %s133
      %p139 = scmp.eq.s32.totalorder %s24, 0
      %p140 = por %p138, %p139
      %p141 = scmp.ne.s32.totalorder %s130, %s133
      %p142 = scmp.eq.s32.totalorder %s29, 3
      %p143 = por %p141, %p142
      %p144 = scmp.ne.s32.totalorder %s133, %s134
      %p145 = scmp.eq.s32.totalorder %s29, 0
      %p146 = por %p144, %p145
      %p147 = scmp.ne.s32.totalorder %s133, %s134
      %p148 = scmp.eq.s32.totalorder %s30, 3
      %p149 = por %p147, %p148
      %p151 = scmp.ne.s32.totalorder %s134, %s150
      %p152 = scmp.eq.s32.totalorder %s30, 0
      %p153 = por %p151, %p152
      %s154 = ssub.s32 %s31, %s43
      %s155 = ssub.s32 %s32, %s39
      %s156 = sor.u32 %s154, %s155
      %p157 = scmp.eq.s32.totalorder %s156, 0
      %s159 = sadd.s32 %s158, 1
      %s160 = scalar_select %p157, %s158, %s159
      %p163 = pneg %p157
      %p164 = scmp.eq.s32.totalorder %s24, 3
      %p165 = por %p163, %p164
      %p166 = scmp.ne.s32.totalorder %s158, %s161
      %p167 = scmp.eq.s32.totalorder %s24, 0
      %p168 = por %p166, %p167
      %p169 = scmp.ne.s32.totalorder %s158, %s161
      %p170 = scmp.eq.s32.totalorder %s29, 3
      %p171 = por %p169, %p170
      %p172 = scmp.ne.s32.totalorder %s161, %s162
      %p173 = scmp.eq.s32.totalorder %s29, 0
      %p174 = por %p172, %p173
      %p175 = scmp.ne.s32.totalorder %s161, %s162
      %p176 = scmp.eq.s32.totalorder %s30, 3
      %p177 = por %p175, %p176
      %p179 = scmp.ne.s32.totalorder %s162, %s178
      %p180 = scmp.eq.s32.totalorder %s30, 0
      %p181 = por %p179, %p180
      %s183 = sadd.s32 %s182, 1
      %p186 = scmp.eq.s32.totalorder %s24, 3
      %p187 = scmp.ne.s32.totalorder %s182, %s184
      %p188 = scmp.eq.s32.totalorder %s24, 0
      %p189 = por %p187, %p188
      %p190 = scmp.ne.s32.totalorder %s182, %s184
      %p191 = scmp.eq.s32.totalorder %s29, 3
      %p192 = por %p190, %p191
      %p193 = scmp.ne.s32.totalorder %s184, %s185
      %p194 = scmp.eq.s32.totalorder %s29, 0
      %p195 = por %p193, %p194
      %p196 = scmp.ne.s32.totalorder %s184, %s185
      %p197 = scmp.eq.s32.totalorder %s30, 3
      %p198 = por %p196, %p197
      %p200 = scmp.ne.s32.totalorder %s185, %s199
      %p201 = scmp.eq.s32.totalorder %s30, 0
      %p202 = por %p200, %p201
      %s204 = sadd.s32 %s203, 1
      %p207 = scmp.eq.s32.totalorder %s24, 3
      %p208 = scmp.ne.s32.totalorder %s203, %s205
      %p209 = scmp.eq.s32.totalorder %s24, 0
      %p210 = por %p208, %p209
      %p211 = scmp.ne.s32.totalorder %s203, %s205
      %p212 = scmp.eq.s32.totalorder %s29, 3
      %p213 = por %p211, %p212
      %p214 = scmp.ne.s32.totalorder %s205, %s206
      %p215 = scmp.eq.s32.totalorder %s29, 0
      %p216 = por %p214, %p215
      %p217 = scmp.ne.s32.totalorder %s205, %s206
      %p218 = scmp.eq.s32.totalorder %s30, 3
      %p219 = por %p217, %p218
      %p221 = scmp.ne.s32.totalorder %s206, %s220
      %p222 = scmp.eq.s32.totalorder %s30, 0
      %p223 = por %p221, %p222
      %s224 = ssub.s32 %s31, %s43
      %p225 = scmp.eq.s32.totalorder %s224, 0
      %s227 = sadd.s32 %s226, 1
      %s228 = scalar_select %p225, %s226, %s227
      %p231 = pneg %p225
      %p232 = scmp.eq.s32.totalorder %s24, 3
      %p233 = por %p231, %p232
      %p234 = scmp.ne.s32.totalorder %s226, %s229
      %p235 = scmp.eq.s32.totalorder %s24, 0
      %p236 = por %p234, %p235
      %p237 = scmp.ne.s32.totalorder %s226, %s229
      %p238 = scmp.eq.s32.totalorder %s29, 3
      %p239 = por %p237, %p238
      %p240 = scmp.ne.s32.totalorder %s229, %s230
      %p241 = scmp.eq.s32.totalorder %s29, 0
      %p242 = por %p240, %p241
      %p243 = scmp.ne.s32.totalorder %s229, %s230
      %p244 = scmp.eq.s32.totalorder %s30, 3
      %p245 = por %p243, %p244
      %p247 = scmp.ne.s32.totalorder %s230, %s246
      %p248 = scmp.eq.s32.totalorder %s30, 0
      %p249 = por %p247, %p248
      %s250 = ssub.s32 %s31, %s43
      %p251 = scmp.eq.s32.totalorder %s250, 0
      %s253 = sadd.s32 %s252, 1
      %s254 = scalar_select %p251, %s252, %s253
      %p257 = pneg %p251
      %p258 = scmp.eq.s32.totalorder %s24, 3
      %p259 = por %p257, %p258
      %p260 = scmp.ne.s32.totalorder %s252, %s255
      %p261 = scmp.eq.s32.totalorder %s24, 0
      %p262 = por %p260, %p261
      %p263 = scmp.ne.s32.totalorder %s252, %s255
      %p264 = scmp.eq.s32.totalorder %s29, 3
      %p265 = por %p263, %p264
      %p266 = scmp.ne.s32.totalorder %s255, %s256
      %p267 = scmp.eq.s32.totalorder %s29, 0
      %p268 = por %p266, %p267
      %p269 = scmp.ne.s32.totalorder %s255, %s256
      %p270 = scmp.eq.s32.totalorder %s30, 3
      %p271 = por %p269, %p270
      %p273 = scmp.ne.s32.totalorder %s256, %s272
      %p274 = scmp.eq.s32.totalorder %s30, 0
      %p275 = por %p273, %p274
      %p276 = scmp.le.s32.totalorder 1, %s24
      %p277 = scmp.lt.s32.totalorder %s24, 5
      %p278 = pnand %p276, %p277
      %p279 = pneg %p278
      // Predicated region
      $region9: #{tpu_custom_call.1} parent=5 // pred_check
        _
      $region10: #{tpu_custom_call.1} parent=5 // pred_check_branch
        %281 = sbr.rel (%p278) target = $region12
      $region11: #{tpu_custom_call.1} parent=5 // pred_region
        %s282 = ssub.s32 %s24, 1
        // Predicated region
        $region13: #{tpu_custom_call.1} parent=11 // pred_check
          %p283 = pneg %p195
        $region14: #{tpu_custom_call.1} parent=11 // pred_check_branch
          %285 = sbr.rel (%p283) target = $region16
        $region15: #{tpu_custom_call.1} parent=11 // pred_region
          %287 = vsyncadd [#allocation12], 0
          %s288 = sshll.u32 %s5, 4
          %s289 = int_to_ptr.hbm [resolvable:$true] %s288
          %s290 = sshll.u32 [#allocation13], 4
          %s291 = int_to_ptr.vmem [resolvable:$true] %s290
          %296 = dma.hbm_to_vmem [thread:$0]  %s289, 4096, %s291, [#allocation12], 128, 128, 8
        $region16: #{tpu_custom_call.1} parent=11 // pred_fallthru
          _
        // Predicated region
        $region17: #{tpu_custom_call.1} parent=11 // pred_check
          %p297 = pneg %p216
        $region18: #{tpu_custom_call.1} parent=11 // pred_check_branch
          %299 = sbr.rel (%p297) target = $region20
        $region19: #{tpu_custom_call.1} parent=11 // pred_region
          _
        $region20: #{tpu_custom_call.1} parent=11 // pred_fallthru
          _
      $region12: #{tpu_custom_call.1} parent=5 // pred_fallthru
        _
      %p300 = scmp.lt.s32.totalorder %s24, 4
      // Predicated region
      $region21: #{tpu_custom_call.1} parent=5 // pred_check
        %p301 = pneg %p300
      $region22: #{tpu_custom_call.1} parent=5 // pred_check_branch
        %303 = sbr.rel (%p301) target = $region24
      $region23: #{tpu_custom_call.1} parent=5 // pred_region
        // Predicated region
        $region25: #{tpu_custom_call.1} parent=23 // pred_check
          %p304 = pneg %p56
        $region26: #{tpu_custom_call.1} parent=23 // pred_check_branch
          %306 = sbr.rel (%p304) target = $region28
        $region27: #{tpu_custom_call.1} parent=23 // pred_region
          %p307 = scmp.lt.s32.totalorder %s31, 1
          %s308 = scalar_select %p307, %s31, 1
          %s309 = smul.addr %s308, 8
          %s310 = scalar_lea.vmem %s0, %s309
        $region28: #{tpu_custom_call.1} parent=23 // pred_fallthru
          _
        // Predicated region
        $region29: #{tpu_custom_call.1} parent=23 // pred_check
          %p311 = pneg %p84
        $region30: #{tpu_custom_call.1} parent=23 // pred_check_branch
          %313 = sbr.rel (%p311) target = $region32
        $region31: #{tpu_custom_call.1} parent=23 // pred_region
          #allocation15 [shape = 'u32[6]{0}', space=smem, size = 0x18, scoped, tag = 'DMA stride descriptor']
          %s314 = sand.u32 %s74, 1
          %s315 = scalar_lea.sflag [#allocation7], %s314
          %s316 = sand.u32 %s74, 1
          %s317 = smul.addr %s316, 512
          %s318 = scalar_lea.vmem [#allocation6], %s317
          %s319 = smul.u32 8, %s31
          %s320 = smul.u32 16, %s32
          %322 = vsyncadd %s315, 0
          %s323 = smul.addr %s319, 32
          %s324 = sadd.s32 %s320, %s323
          %s325 = smul.addr %s324, 4
          %s326 = scalar_lea.hbm %s1, %s325
          %s328 = sshll.u32 1, 14
          %s329 = sxor.u32 4294967295, %s328
          %s331 = sld [smem:[#allocation0]]
          %s332 = sadd.s32 2, %s331
          %s334 = sshll.u32 7, 26
          %s335 = sxor.u32 4294967295, %s334
          %s336 = sand.u32 0, %s335
          %s337 = sshll.u32 %s332, 26
          %s338 = sor.u32 %s336, %s337
          %s339 = sshll.u32 %s326, 4
          %s340 = int_to_ptr.hbm [resolvable:$true] %s339
          %s341 = sshll.u32 %s318, 4
          %s342 = int_to_ptr.vmem [resolvable:$true] %s341
          %348 = sst [smem:[#allocation15]] 2048
          %s349 = scalar_lea.smem [#allocation15], 1
          %350 = sst [smem:[%s349]] 1024
          %s351 = scalar_lea.smem [#allocation15], 2
          %352 = sst [smem:[%s351]] 16
          %s353 = scalar_lea.smem [#allocation15], 3
          %354 = sst [smem:[%s353]] 64
          %s355 = scalar_lea.smem [#allocation15], 4
          %356 = sst [smem:[%s355]] 64
          %s357 = scalar_lea.smem [#allocation15], 5
          %358 = sst [smem:[%s357]] 4
          %360 = dma.general %s340, 8192, %s342, %s315, [#allocation14], [#allocation15], %s338, 0
        $region32: #{tpu_custom_call.1} parent=23 // pred_fallthru
          _
        // Predicated region
        $region33: #{tpu_custom_call.1} parent=23 // pred_check
          %p361 = pneg %p112
        $region34: #{tpu_custom_call.1} parent=23 // pred_check_branch
          %363 = sbr.rel (%p361) target = $region36
        $region35: #{tpu_custom_call.1} parent=23 // pred_region
          #allocation17 [shape = 'u32[6]{0}', space=smem, size = 0x18, scoped, tag = 'DMA stride descriptor']
          %s364 = sand.u32 %s24, 1
          %s365 = scalar_lea.sflag [#allocation9], %s364
          %s366 = sand.u32 %s102, 1
          %s367 = smul.addr %s366, 512
          %s368 = scalar_lea.vmem [#allocation8], %s367
          %s369 = smul.u32 8, %s31
          %s370 = smul.u32 16, %s32
          %372 = vsyncadd %s365, 0
          %s373 = smul.addr %s369, 32
          %s374 = sadd.s32 %s370, %s373
          %s375 = smul.addr %s374, 4
          %s376 = scalar_lea.hbm %s2, %s375
          %s378 = sshll.u32 1, 14
          %s379 = sxor.u32 4294967295, %s378
          %s381 = sld [smem:[#allocation0]]
          %s382 = sadd.s32 2, %s381
          %s384 = sshll.u32 7, 26
          %s385 = sxor.u32 4294967295, %s384
          %s386 = sand.u32 0, %s385
          %s387 = sshll.u32 %s382, 26
          %s388 = sor.u32 %s386, %s387
          %s389 = sshll.u32 %s376, 4
          %s390 = int_to_ptr.hbm [resolvable:$true] %s389
          %s391 = sshll.u32 %s368, 4
          %s392 = int_to_ptr.vmem [resolvable:$true] %s391
          %398 = sst [smem:[#allocation17]] 2048
          %s399 = scalar_lea.smem [#allocation17], 1
          %400 = sst [smem:[%s399]] 1024
          %s401 = scalar_lea.smem [#allocation17], 2
          %402 = sst [smem:[%s401]] 16
          %s403 = scalar_lea.smem [#allocation17], 3
          %404 = sst [smem:[%s403]] 64
          %s405 = scalar_lea.smem [#allocation17], 4
          %406 = sst [smem:[%s405]] 64
          %s407 = scalar_lea.smem [#allocation17], 5
          %408 = sst [smem:[%s407]] 4
          %410 = dma.general %s390, 8192, %s392, %s365, [#allocation16], [#allocation17], %s388, 0
        $region36: #{tpu_custom_call.1} parent=23 // pred_fallthru
          _
        // Predicated region
        $region37: #{tpu_custom_call.1} parent=23 // pred_check
          %p411 = pneg %p140
        $region38: #{tpu_custom_call.1} parent=23 // pred_check_branch
          %413 = sbr.rel (%p411) target = $region40
        $region39: #{tpu_custom_call.1} parent=23 // pred_region
          %s414 = sand.u32 %s24, 1
          %s415 = scalar_lea.sflag [#allocation9], %s414
          %s416 = sand.u32 %s130, 1
          %s417 = smul.addr %s416, 8
          %s418 = scalar_lea.vmem [#allocation10], %s417
          %420 = vsyncadd %s415, 0
          %s421 = smul.addr %s31, 2
          %s422 = sadd.s32 %s32, %s421
          %s423 = smul.addr %s422, 8
          %s424 = scalar_lea.hbm %s3, %s423
          %s426 = sshll.u32 %s424, 4
          %s427 = int_to_ptr.hbm [resolvable:$true] %s426
          %s428 = sshll.u32 %s418, 4
          %s429 = int_to_ptr.vmem [resolvable:$true] %s428
          %431 = dma.hbm_to_vmem [thread:$0]  %s427, 128, %s429, %s415
        $region40: #{tpu_custom_call.1} parent=23 // pred_fallthru
          _
        // Predicated region
        $region41: #{tpu_custom_call.1} parent=23 // pred_check
          %p432 = pneg %p168
        $region42: #{tpu_custom_call.1} parent=23 // pred_check_branch
          %434 = sbr.rel (%p432) target = $region44
        $region43: #{tpu_custom_call.1} parent=23 // pred_region
          %s435 = sand.u32 %s24, 1
          %s436 = scalar_lea.sflag [#allocation12], %s435
          %s437 = sand.u32 %s158, 1
          %s438 = smul.addr %s437, 8
          %s439 = scalar_lea.vmem [#allocation11], %s438
          %441 = vsyncadd %s436, 0
          %s442 = smul.addr %s31, 2
          %s443 = sadd.s32 %s32, %s442
          %s444 = smul.addr %s443, 8
          %s445 = scalar_lea.hbm %s4, %s444
          %s447 = sshll.u32 %s445, 4
          %s448 = int_to_ptr.hbm [resolvable:$true] %s447
          %s449 = sshll.u32 %s439, 4
          %s450 = int_to_ptr.vmem [resolvable:$true] %s449
          %452 = dma.hbm_to_vmem [thread:$0]  %s448, 128, %s450, %s436
        $region44: #{tpu_custom_call.1} parent=23 // pred_fallthru
          _
      $region24: #{tpu_custom_call.1} parent=5 // pred_fallthru
        _
      %p453 = scmp.le.s32.totalorder 1, %s24
      %p454 = scmp.lt.s32.totalorder %s24, 5
      %p455 = pnand %p453, %p454
      %p456 = pneg %p455
      // Predicated region
      $region45: #{tpu_custom_call.1} parent=5 // pred_check
        _
      $region46: #{tpu_custom_call.1} parent=5 // pred_check_branch
        %458 = sbr.rel (%p455) target = $region48
      $region47: #{tpu_custom_call.1} parent=5 // pred_region
        %s459 = ssub.s32 %s24, 1
        %s460 = sand.u32 %s77, 1
        %s461 = scalar_lea.sflag [#allocation7], %s460
        %s462 = sand.u32 %s77, 1
        %s463 = smul.addr %s462, 512
        %s464 = scalar_lea.vmem [#allocation6], %s463
        // Predicated region
        $region49: #{tpu_custom_call.1} parent=47 // pred_check
          %p465 = pneg %p90
        $region50: #{tpu_custom_call.1} parent=47 // pred_check_branch
          %467 = sbr.rel (%p465) target = $region52
        $region51: #{tpu_custom_call.1} parent=47 // pred_region
          %469 = dma.done %s461, 8192
        $region52: #{tpu_custom_call.1} parent=47 // pred_fallthru
          _
        %s470 = sand.u32 %s29, 1
        %s471 = scalar_lea.sflag [#allocation9], %s470
        %s472 = sand.u32 %s105, 1
        %s473 = smul.addr %s472, 512
        %s474 = scalar_lea.vmem [#allocation8], %s473
        // Predicated region
        $region53: #{tpu_custom_call.1} parent=47 // pred_check
          %p475 = pneg %p118
        $region54: #{tpu_custom_call.1} parent=47 // pred_check_branch
          %477 = sbr.rel (%p475) target = $region56
        $region55: #{tpu_custom_call.1} parent=47 // pred_region
          %479 = dma.done %s471, 8192
        $region56: #{tpu_custom_call.1} parent=47 // pred_fallthru
          _
        %s480 = sand.u32 %s29, 1
        %s481 = scalar_lea.sflag [#allocation9], %s480
        %s482 = sand.u32 %s133, 1
        %s483 = smul.addr %s482, 8
        %s484 = scalar_lea.vmem [#allocation10], %s483
        // Predicated region
        $region57: #{tpu_custom_call.1} parent=47 // pred_check
          %p485 = pneg %p146
        $region58: #{tpu_custom_call.1} parent=47 // pred_check_branch
          %487 = sbr.rel (%p485) target = $region60
        $region59: #{tpu_custom_call.1} parent=47 // pred_region
          %489 = dma.done %s481, 128
        $region60: #{tpu_custom_call.1} parent=47 // pred_fallthru
          _
        %s490 = sand.u32 %s29, 1
        %s491 = scalar_lea.sflag [#allocation12], %s490
        %s492 = sand.u32 %s161, 1
        %s493 = smul.addr %s492, 8
        %s494 = scalar_lea.vmem [#allocation11], %s493
        // Predicated region
        $region61: #{tpu_custom_call.1} parent=47 // pred_check
          %p495 = pneg %p174
        $region62: #{tpu_custom_call.1} parent=47 // pred_check_branch
          %497 = sbr.rel (%p495) target = $region64
        $region63: #{tpu_custom_call.1} parent=47 // pred_region
          %499 = dma.done %s491, 128
        $region64: #{tpu_custom_call.1} parent=47 // pred_fallthru
          _
        // Predicated region
        $region65: #{tpu_custom_call.1} parent=47 // pred_check
          %p500 = pneg %p195
        $region66: #{tpu_custom_call.1} parent=47 // pred_check_branch
          %502 = sbr.rel (%p500) target = $region68
        $region67: #{tpu_custom_call.1} parent=47 // pred_region
          %504 = dma.done [#allocation12], 4096
        $region68: #{tpu_custom_call.1} parent=47 // pred_fallthru
          _
        %p505 = scmp.lt.s32.totalorder %s33, 1
        %s506 = scalar_select %p505, %s33, 1
        %s507 = smul.addr %s506, 8
        %s508 = scalar_lea.vmem %s0, %s507
        %p509 = pneg %p62
        %p510 = pneg %p59
        %s511 = sand.u32 %s77, 1
        %s512 = scalar_lea.sflag [#allocation7], %s511
        %s513 = sand.u32 %s77, 1
        %s514 = smul.addr %s513, 512
        %s515 = scalar_lea.vmem [#allocation6], %s514
        %p516 = pneg %p90
        %p517 = pneg %p87
        %s518 = sand.u32 %s29, 1
        %s519 = scalar_lea.sflag [#allocation9], %s518
        %s520 = sand.u32 %s105, 1
        %s521 = smul.addr %s520, 512
        %s522 = scalar_lea.vmem [#allocation8], %s521
        %p523 = pneg %p118
        %p524 = pneg %p115
        %s525 = sand.u32 %s29, 1
        %s526 = scalar_lea.sflag [#allocation9], %s525
        %s527 = sand.u32 %s133, 1
        %s528 = smul.addr %s527, 8
        %s529 = scalar_lea.vmem [#allocation10], %s528
        %p530 = pneg %p146
        %p531 = pneg %p143
        %s532 = sand.u32 %s29, 1
        %s533 = scalar_lea.sflag [#allocation12], %s532
        %s534 = sand.u32 %s161, 1
        %s535 = smul.addr %s534, 8
        %s536 = scalar_lea.vmem [#allocation11], %s535
        %p537 = pneg %p174
        %p538 = pneg %p171
        %p539 = pneg %p195
        %p540 = pneg %p192
        %p541 = pneg %p216
        %p542 = pneg %p213
        %p543 = pneg %p242
        %p544 = pneg %p239
        %p545 = scmp.lt.s32.totalorder %s33, 1
        %s546 = scalar_select %p545, %s33, 1
        %s547 = smul.addr %s546, 8
        %s548 = scalar_lea.vmem %s7, %s547
        %p549 = pneg %p268
        %p550 = pneg %p265
        %p551 = scmp.lt.s32.totalorder %s33, 1
        %s552 = scalar_select %p551, %s33, 1
        %s553 = smul.addr %s552, 8
        %s554 = scalar_lea.vmem %s8, %s553
        %p555 = scmp.lt.s32.totalorder %s33, 1
        %s556 = scalar_select %p555, %s33, 1
        %s557 = smul.addr %s556, 8
        %s558 = scalar_lea.vmem %s0, %s557
        %s559 = smul.u32 8, %s33
        %s560 = smul.u32 16, %s34
        %s561 = smul.u32 8, %s33
        %s562 = smul.u32 16, %s34
        %p563 = scmp.lt.s32.totalorder %s33, 1
        %s564 = scalar_select %p563, %s33, 1
        %s565 = smul.addr %s564, 8
        %s566 = scalar_lea.vmem %s7, %s565
        %p567 = scmp.lt.s32.totalorder %s33, 1
        %s568 = scalar_select %p567, %s33, 1
        %s569 = smul.addr %s568, 8
        %s570 = scalar_lea.vmem %s8, %s569
        %p571 = scmp.eq.s32.totalorder %s34, 0
        // Predicated region
        $region69: #{tpu_custom_call.1} parent=47 // pred_check
          %p572 = pneg %p571
        $region70: #{tpu_custom_call.1} parent=47 // pred_check_branch
          %574 = sbr.rel (%p572) target = $region72
        $region71: #{tpu_custom_call.1} parent=47 // pred_region
          %575 = vst [vmem:[#allocation2] sm:$0xff] 0.0
          %576 = vst [vmem:[#allocation3] sm:$0xff] 0.0
          %vm577 = vcmask 7168
          %578 = vst.msk [vmem:[#allocation4] sm:$0xff] %vm577, 0.0
          %579 = vst.msk [vmem:[#allocation5] sm:$0xff] %vm577, 0.0
        $region72: #{tpu_custom_call.1} parent=47 // pred_fallthru
          _
        %v580 = vld [vmem:[%s464] sm:$0xf]
        %v581 = vld [vmem:[%s464 + $0x4] sm:$0xf]
        %v582 = vld [vmem:[%s464 + $0x8] sm:$0xf]
        %v583 = vld [vmem:[%s464 + $0xc] sm:$0xf]
        %v584 = vld [vmem:[%s464 + $0x10] sm:$0xf]
        %v585 = vld [vmem:[%s464 + $0x14] sm:$0xf]
        %v586 = vld [vmem:[%s464 + $0x18] sm:$0xf]
        %v587 = vld [vmem:[%s464 + $0x1c] sm:$0xf]
        %v588 = vld [vmem:[%s464 + $0x20] sm:$0xf]
        %v589 = vld [vmem:[%s464 + $0x24] sm:$0xf]
        %v590 = vld [vmem:[%s464 + $0x28] sm:$0xf]
        %v591 = vld [vmem:[%s464 + $0x2c] sm:$0xf]
        %v592 = vld [vmem:[%s464 + $0x30] sm:$0xf]
        %v593 = vld [vmem:[%s464 + $0x34] sm:$0xf]
        %v594 = vld [vmem:[%s464 + $0x38] sm:$0xf]
        %v595 = vld [vmem:[%s464 + $0x3c] sm:$0xf]
        %v596 = vld [vmem:[%s464 + $0x40] sm:$0xf]
        %v597 = vld [vmem:[%s464 + $0x44] sm:$0xf]
        %v598 = vld [vmem:[%s464 + $0x48] sm:$0xf]
        %v599 = vld [vmem:[%s464 + $0x4c] sm:$0xf]
        %v600 = vld [vmem:[%s464 + $0x50] sm:$0xf]
        %v601 = vld [vmem:[%s464 + $0x54] sm:$0xf]
        %v602 = vld [vmem:[%s464 + $0x58] sm:$0xf]
        %v603 = vld [vmem:[%s464 + $0x5c] sm:$0xf]
        %v604 = vld [vmem:[%s464 + $0x60] sm:$0xf]
        %v605 = vld [vmem:[%s464 + $0x64] sm:$0xf]
        %v606 = vld [vmem:[%s464 + $0x68] sm:$0xf]
        %v607 = vld [vmem:[%s464 + $0x6c] sm:$0xf]
        %v608 = vld [vmem:[%s464 + $0x70] sm:$0xf]
        %v609 = vld [vmem:[%s464 + $0x74] sm:$0xf]
        %v610 = vld [vmem:[%s464 + $0x78] sm:$0xf]
        %v611 = vld [vmem:[%s464 + $0x7c] sm:$0xf]
        %v612 = vld [vmem:[%s464 + $0x80] sm:$0xf]
        %v613 = vld [vmem:[%s464 + $0x84] sm:$0xf]
        %v614 = vld [vmem:[%s464 + $0x88] sm:$0xf]
        %v615 = vld [vmem:[%s464 + $0x8c] sm:$0xf]
        %v616 = vld [vmem:[%s464 + $0x90] sm:$0xf]
        %v617 = vld [vmem:[%s464 + $0x94] sm:$0xf]
        %v618 = vld [vmem:[%s464 + $0x98] sm:$0xf]
        %v619 = vld [vmem:[%s464 + $0x9c] sm:$0xf]
        %v620 = vld [vmem:[%s464 + $0xa0] sm:$0xf]
        %v621 = vld [vmem:[%s464 + $0xa4] sm:$0xf]
        %v622 = vld [vmem:[%s464 + $0xa8] sm:$0xf]
        %v623 = vld [vmem:[%s464 + $0xac] sm:$0xf]
        %v624 = vld [vmem:[%s464 + $0xb0] sm:$0xf]
        %v625 = vld [vmem:[%s464 + $0xb4] sm:$0xf]
        %v626 = vld [vmem:[%s464 + $0xb8] sm:$0xf]
        %v627 = vld [vmem:[%s464 + $0xbc] sm:$0xf]
        %v628 = vld [vmem:[%s464 + $0xc0] sm:$0xf]
        %v629 = vld [vmem:[%s464 + $0xc4] sm:$0xf]
        %v630 = vld [vmem:[%s464 + $0xc8] sm:$0xf]
        %v631 = vld [vmem:[%s464 + $0xcc] sm:$0xf]
        %v632 = vld [vmem:[%s464 + $0xd0] sm:$0xf]
        %v633 = vld [vmem:[%s464 + $0xd4] sm:$0xf]
        %v634 = vld [vmem:[%s464 + $0xd8] sm:$0xf]
        %v635 = vld [vmem:[%s464 + $0xdc] sm:$0xf]
        %v636 = vld [vmem:[%s464 + $0xe0] sm:$0xf]
        %v637 = vld [vmem:[%s464 + $0xe4] sm:$0xf]
        %v638 = vld [vmem:[%s464 + $0xe8] sm:$0xf]
        %v639 = vld [vmem:[%s464 + $0xec] sm:$0xf]
        %v640 = vld [vmem:[%s464 + $0xf0] sm:$0xf]
        %v641 = vld [vmem:[%s464 + $0xf4] sm:$0xf]
        %v642 = vld [vmem:[%s464 + $0xf8] sm:$0xf]
        %v643 = vld [vmem:[%s464 + $0xfc] sm:$0xf]
        %v644 = vld [vmem:[%s464 + $0x100] sm:$0xf]
        %v645 = vld [vmem:[%s464 + $0x104] sm:$0xf]
        %v646 = vld [vmem:[%s464 + $0x108] sm:$0xf]
        %v647 = vld [vmem:[%s464 + $0x10c] sm:$0xf]
        %v648 = vld [vmem:[%s464 + $0x110] sm:$0xf]
        %v649 = vld [vmem:[%s464 + $0x114] sm:$0xf]
        %v650 = vld [vmem:[%s464 + $0x118] sm:$0xf]
        %v651 = vld [vmem:[%s464 + $0x11c] sm:$0xf]
        %v652 = vld [vmem:[%s464 + $0x120] sm:$0xf]
        %v653 = vld [vmem:[%s464 + $0x124] sm:$0xf]
        %v654 = vld [vmem:[%s464 + $0x128] sm:$0xf]
        %v655 = vld [vmem:[%s464 + $0x12c] sm:$0xf]
        %v656 = vld [vmem:[%s464 + $0x130] sm:$0xf]
        %v657 = vld [vmem:[%s464 + $0x134] sm:$0xf]
        %v658 = vld [vmem:[%s464 + $0x138] sm:$0xf]
        %v659 = vld [vmem:[%s464 + $0x13c] sm:$0xf]
        %v660 = vld [vmem:[%s464 + $0x140] sm:$0xf]
        %v661 = vld [vmem:[%s464 + $0x144] sm:$0xf]
        %v662 = vld [vmem:[%s464 + $0x148] sm:$0xf]
        %v663 = vld [vmem:[%s464 + $0x14c] sm:$0xf]
        %v664 = vld [vmem:[%s464 + $0x150] sm:$0xf]
        %v665 = vld [vmem:[%s464 + $0x154] sm:$0xf]
        %v666 = vld [vmem:[%s464 + $0x158] sm:$0xf]
        %v667 = vld [vmem:[%s464 + $0x15c] sm:$0xf]
        %v668 = vld [vmem:[%s464 + $0x160] sm:$0xf]
        %v669 = vld [vmem:[%s464 + $0x164] sm:$0xf]
        %v670 = vld [vmem:[%s464 + $0x168] sm:$0xf]
        %v671 = vld [vmem:[%s464 + $0x16c] sm:$0xf]
        %v672 = vld [vmem:[%s464 + $0x170] sm:$0xf]
        %v673 = vld [vmem:[%s464 + $0x174] sm:$0xf]
        %v674 = vld [vmem:[%s464 + $0x178] sm:$0xf]
        %v675 = vld [vmem:[%s464 + $0x17c] sm:$0xf]
        %v676 = vld [vmem:[%s464 + $0x180] sm:$0xf]
        %v677 = vld [vmem:[%s464 + $0x184] sm:$0xf]
        %v678 = vld [vmem:[%s464 + $0x188] sm:$0xf]
        %v679 = vld [vmem:[%s464 + $0x18c] sm:$0xf]
        %v680 = vld [vmem:[%s464 + $0x190] sm:$0xf]
        %v681 = vld [vmem:[%s464 + $0x194] sm:$0xf]
        %v682 = vld [vmem:[%s464 + $0x198] sm:$0xf]
        %v683 = vld [vmem:[%s464 + $0x19c] sm:$0xf]
        %v684 = vld [vmem:[%s464 + $0x1a0] sm:$0xf]
        %v685 = vld [vmem:[%s464 + $0x1a4] sm:$0xf]
        %v686 = vld [vmem:[%s464 + $0x1a8] sm:$0xf]
        %v687 = vld [vmem:[%s464 + $0x1ac] sm:$0xf]
        %v688 = vld [vmem:[%s464 + $0x1b0] sm:$0xf]
        %v689 = vld [vmem:[%s464 + $0x1b4] sm:$0xf]
        %v690 = vld [vmem:[%s464 + $0x1b8] sm:$0xf]
        %v691 = vld [vmem:[%s464 + $0x1bc] sm:$0xf]
        %v692 = vld [vmem:[%s464 + $0x1c0] sm:$0xf]
        %v693 = vld [vmem:[%s464 + $0x1c4] sm:$0xf]
        %v694 = vld [vmem:[%s464 + $0x1c8] sm:$0xf]
        %v695 = vld [vmem:[%s464 + $0x1cc] sm:$0xf]
        %v696 = vld [vmem:[%s464 + $0x1d0] sm:$0xf]
        %v697 = vld [vmem:[%s464 + $0x1d4] sm:$0xf]
        %v698 = vld [vmem:[%s464 + $0x1d8] sm:$0xf]
        %v699 = vld [vmem:[%s464 + $0x1dc] sm:$0xf]
        %v700 = vld [vmem:[%s464 + $0x1e0] sm:$0xf]
        %v701 = vld [vmem:[%s464 + $0x1e4] sm:$0xf]
        %v702 = vld [vmem:[%s464 + $0x1e8] sm:$0xf]
        %v703 = vld [vmem:[%s464 + $0x1ec] sm:$0xf]
        %v704 = vld [vmem:[%s464 + $0x1f0] sm:$0xf]
        %v705 = vld [vmem:[%s464 + $0x1f4] sm:$0xf]
        %v706 = vld [vmem:[%s464 + $0x1f8] sm:$0xf]
        %v707 = vld [vmem:[%s464 + $0x1fc] sm:$0xf]
        %v708 = vld [vmem:[%s474] sm:$0xf]
        %v709 = vld [vmem:[%s474 + $0x4] sm:$0xf]
        %v710 = vld [vmem:[%s474 + $0x8] sm:$0xf]
        %v711 = vld [vmem:[%s474 + $0xc] sm:$0xf]
        %v712 = vld [vmem:[%s474 + $0x10] sm:$0xf]
        %v713 = vld [vmem:[%s474 + $0x14] sm:$0xf]
        %v714 = vld [vmem:[%s474 + $0x18] sm:$0xf]
        %v715 = vld [vmem:[%s474 + $0x1c] sm:$0xf]
        %v716 = vld [vmem:[%s474 + $0x20] sm:$0xf]
        %v717 = vld [vmem:[%s474 + $0x24] sm:$0xf]
        %v718 = vld [vmem:[%s474 + $0x28] sm:$0xf]
        %v719 = vld [vmem:[%s474 + $0x2c] sm:$0xf]
        %v720 = vld [vmem:[%s474 + $0x30] sm:$0xf]
        %v721 = vld [vmem:[%s474 + $0x34] sm:$0xf]
        %v722 = vld [vmem:[%s474 + $0x38] sm:$0xf]
        %v723 = vld [vmem:[%s474 + $0x3c] sm:$0xf]
        %v724 = vld [vmem:[%s474 + $0x40] sm:$0xf]
        %v725 = vld [vmem:[%s474 + $0x44] sm:$0xf]
        %v726 = vld [vmem:[%s474 + $0x48] sm:$0xf]
        %v727 = vld [vmem:[%s474 + $0x4c] sm:$0xf]
        %v728 = vld [vmem:[%s474 + $0x50] sm:$0xf]
        %v729 = vld [vmem:[%s474 + $0x54] sm:$0xf]
        %v730 = vld [vmem:[%s474 + $0x58] sm:$0xf]
        %v731 = vld [vmem:[%s474 + $0x5c] sm:$0xf]
        %v732 = vld [vmem:[%s474 + $0x60] sm:$0xf]
        %v733 = vld [vmem:[%s474 + $0x64] sm:$0xf]
        %v734 = vld [vmem:[%s474 + $0x68] sm:$0xf]
        %v735 = vld [vmem:[%s474 + $0x6c] sm:$0xf]
        %v736 = vld [vmem:[%s474 + $0x70] sm:$0xf]
        %v737 = vld [vmem:[%s474 + $0x74] sm:$0xf]
        %v738 = vld [vmem:[%s474 + $0x78] sm:$0xf]
        %v739 = vld [vmem:[%s474 + $0x7c] sm:$0xf]
        %v740 = vld [vmem:[%s474 + $0x80] sm:$0xf]
        %v741 = vld [vmem:[%s474 + $0x84] sm:$0xf]
        %v742 = vld [vmem:[%s474 + $0x88] sm:$0xf]
        %v743 = vld [vmem:[%s474 + $0x8c] sm:$0xf]
        %v744 = vld [vmem:[%s474 + $0x90] sm:$0xf]
        %v745 = vld [vmem:[%s474 + $0x94] sm:$0xf]
        %v746 = vld [vmem:[%s474 + $0x98] sm:$0xf]
        %v747 = vld [vmem:[%s474 + $0x9c] sm:$0xf]
        %v748 = vld [vmem:[%s474 + $0xa0] sm:$0xf]
        %v749 = vld [vmem:[%s474 + $0xa4] sm:$0xf]
        %v750 = vld [vmem:[%s474 + $0xa8] sm:$0xf]
        %v751 = vld [vmem:[%s474 + $0xac] sm:$0xf]
        %v752 = vld [vmem:[%s474 + $0xb0] sm:$0xf]
        %v753 = vld [vmem:[%s474 + $0xb4] sm:$0xf]
        %v754 = vld [vmem:[%s474 + $0xb8] sm:$0xf]
        %v755 = vld [vmem:[%s474 + $0xbc] sm:$0xf]
        %v756 = vld [vmem:[%s474 + $0xc0] sm:$0xf]
        %v757 = vld [vmem:[%s474 + $0xc4] sm:$0xf]
        %v758 = vld [vmem:[%s474 + $0xc8] sm:$0xf]
        %v759 = vld [vmem:[%s474 + $0xcc] sm:$0xf]
        %v760 = vld [vmem:[%s474 + $0xd0] sm:$0xf]
        %v761 = vld [vmem:[%s474 + $0xd4] sm:$0xf]
        %v762 = vld [vmem:[%s474 + $0xd8] sm:$0xf]
        %v763 = vld [vmem:[%s474 + $0xdc] sm:$0xf]
        %v764 = vld [vmem:[%s474 + $0xe0] sm:$0xf]
        %v765 = vld [vmem:[%s474 + $0xe4] sm:$0xf]
        %v766 = vld [vmem:[%s474 + $0xe8] sm:$0xf]
        %v767 = vld [vmem:[%s474 + $0xec] sm:$0xf]
        %v768 = vld [vmem:[%s474 + $0xf0] sm:$0xf]
        %v769 = vld [vmem:[%s474 + $0xf4] sm:$0xf]
        %v770 = vld [vmem:[%s474 + $0xf8] sm:$0xf]
        %v771 = vld [vmem:[%s474 + $0xfc] sm:$0xf]
        %v772 = vld [vmem:[%s474 + $0x100] sm:$0xf]
        %v773 = vld [vmem:[%s474 + $0x104] sm:$0xf]
        %v774 = vld [vmem:[%s474 + $0x108] sm:$0xf]
        %v775 = vld [vmem:[%s474 + $0x10c] sm:$0xf]
        %v776 = vld [vmem:[%s474 + $0x110] sm:$0xf]
        %v777 = vld [vmem:[%s474 + $0x114] sm:$0xf]
        %v778 = vld [vmem:[%s474 + $0x118] sm:$0xf]
        %v779 = vld [vmem:[%s474 + $0x11c] sm:$0xf]
        %v780 = vld [vmem:[%s474 + $0x120] sm:$0xf]
        %v781 = vld [vmem:[%s474 + $0x124] sm:$0xf]
        %v782 = vld [vmem:[%s474 + $0x128] sm:$0xf]
        %v783 = vld [vmem:[%s474 + $0x12c] sm:$0xf]
        %v784 = vld [vmem:[%s474 + $0x130] sm:$0xf]
        %v785 = vld [vmem:[%s474 + $0x134] sm:$0xf]
        %v786 = vld [vmem:[%s474 + $0x138] sm:$0xf]
        %v787 = vld [vmem:[%s474 + $0x13c] sm:$0xf]
        %v788 = vld [vmem:[%s474 + $0x140] sm:$0xf]
        %v789 = vld [vmem:[%s474 + $0x144] sm:$0xf]
        %v790 = vld [vmem:[%s474 + $0x148] sm:$0xf]
        %v791 = vld [vmem:[%s474 + $0x14c] sm:$0xf]
        %v792 = vld [vmem:[%s474 + $0x150] sm:$0xf]
        %v793 = vld [vmem:[%s474 + $0x154] sm:$0xf]
        %v794 = vld [vmem:[%s474 + $0x158] sm:$0xf]
        %v795 = vld [vmem:[%s474 + $0x15c] sm:$0xf]
        %v796 = vld [vmem:[%s474 + $0x160] sm:$0xf]
        %v797 = vld [vmem:[%s474 + $0x164] sm:$0xf]
        %v798 = vld [vmem:[%s474 + $0x168] sm:$0xf]
        %v799 = vld [vmem:[%s474 + $0x16c] sm:$0xf]
        %v800 = vld [vmem:[%s474 + $0x170] sm:$0xf]
        %v801 = vld [vmem:[%s474 + $0x174] sm:$0xf]
        %v802 = vld [vmem:[%s474 + $0x178] sm:$0xf]
        %v803 = vld [vmem:[%s474 + $0x17c] sm:$0xf]
        %v804 = vld [vmem:[%s474 + $0x180] sm:$0xf]
        %v805 = vld [vmem:[%s474 + $0x184] sm:$0xf]
        %v806 = vld [vmem:[%s474 + $0x188] sm:$0xf]
        %v807 = vld [vmem:[%s474 + $0x18c] sm:$0xf]
        %v808 = vld [vmem:[%s474 + $0x190] sm:$0xf]
        %v809 = vld [vmem:[%s474 + $0x194] sm:$0xf]
        %v810 = vld [vmem:[%s474 + $0x198] sm:$0xf]
        %v811 = vld [vmem:[%s474 + $0x19c] sm:$0xf]
        %v812 = vld [vmem:[%s474 + $0x1a0] sm:$0xf]
        %v813 = vld [vmem:[%s474 + $0x1a4] sm:$0xf]
        %v814 = vld [vmem:[%s474 + $0x1a8] sm:$0xf]
        %v815 = vld [vmem:[%s474 + $0x1ac] sm:$0xf]
        %v816 = vld [vmem:[%s474 + $0x1b0] sm:$0xf]
        %v817 = vld [vmem:[%s474 + $0x1b4] sm:$0xf]
        %v818 = vld [vmem:[%s474 + $0x1b8] sm:$0xf]
        %v819 = vld [vmem:[%s474 + $0x1bc] sm:$0xf]
        %v820 = vld [vmem:[%s474 + $0x1c0] sm:$0xf]
        %v821 = vld [vmem:[%s474 + $0x1c4] sm:$0xf]
        %v822 = vld [vmem:[%s474 + $0x1c8] sm:$0xf]
        %v823 = vld [vmem:[%s474 + $0x1cc] sm:$0xf]
        %v824 = vld [vmem:[%s474 + $0x1d0] sm:$0xf]
        %v825 = vld [vmem:[%s474 + $0x1d4] sm:$0xf]
        %v826 = vld [vmem:[%s474 + $0x1d8] sm:$0xf]
        %v827 = vld [vmem:[%s474 + $0x1dc] sm:$0xf]
        %v828 = vld [vmem:[%s474 + $0x1e0] sm:$0xf]
        %v829 = vld [vmem:[%s474 + $0x1e4] sm:$0xf]
        %v830 = vld [vmem:[%s474 + $0x1e8] sm:$0xf]
        %v831 = vld [vmem:[%s474 + $0x1ec] sm:$0xf]
        %v832 = vld [vmem:[%s474 + $0x1f0] sm:$0xf]
        %v833 = vld [vmem:[%s474 + $0x1f4] sm:$0xf]
        %v834 = vld [vmem:[%s474 + $0x1f8] sm:$0xf]
        %v835 = vld [vmem:[%s474 + $0x1fc] sm:$0xf]
        %v836 = vld [vmem:[%s484] sm:$0xff]
        %v837 = vld [vmem:[%s494] sm:$0xff]
        %v838 = vld [vmem:[#allocation2] sm:$0xff]
        %v840 = vrot.slane %v836, 1
        %v841 = vrot.slane %v836, 2
        %v842 = vrot.slane %v836, 3
        %v843 = vrot.slane %v836, 4
        %v844 = vrot.slane %v836, 5
        %v845 = vrot.slane %v836, 6
        %v846 = vrot.slane %v836, 7
        %v854 = vpack.c.bf16 %v836, %v836
        %v855 = vpack.c.bf16 %v840, %v840
        %v856 = vpack.c.bf16 %v841, %v841
        %v857 = vpack.c.bf16 %v842, %v842
        %v858 = vpack.c.bf16 %v843, %v843
        %v859 = vpack.c.bf16 %v844, %v844
        %v860 = vpack.c.bf16 %v845, %v845
        %v861 = vpack.c.bf16 %v846, %v846
        %v878 = vunpack.c.l.b16 %v580
        %v879 = vunpack.c.l.b16 %v581
        %v880 = vunpack.c.l.b16 %v582
        %v881 = vunpack.c.l.b16 %v583
        %v882 = vunpack.c.l.b16 %v584
        %v883 = vunpack.c.l.b16 %v585
        %v884 = vunpack.c.l.b16 %v586
        %v885 = vunpack.c.l.b16 %v587
        %v886 = vunpack.c.l.b16 %v588
        %v887 = vunpack.c.l.b16 %v589
        %v888 = vunpack.c.l.b16 %v590
        %v889 = vunpack.c.l.b16 %v591
        %v890 = vunpack.c.l.b16 %v592
        %v891 = vunpack.c.l.b16 %v593
        %v892 = vunpack.c.l.b16 %v594
        %v893 = vunpack.c.l.b16 %v595
        %v894 = vpack.c.b16 %v879, %v878
        %v895 = vpack.c.b16 %v881, %v880
        %v896 = vpack.c.b16 %v883, %v882
        %v897 = vpack.c.b16 %v885, %v884
        %v898 = vpack.c.b16 %v887, %v886
        %v899 = vpack.c.b16 %v889, %v888
        %v900 = vpack.c.b16 %v891, %v890
        %v901 = vpack.c.b16 %v893, %v892
        %910 = vmatpush.bf16.msra.mxu0 %v901
        %911 = vmatpush.bf16.msra.mxu0 %v900
        %912 = vmatpush.bf16.msra.mxu0 %v899
        %913 = vmatpush.bf16.msra.mxu0 %v898
        %914 = vmatpush.bf16.msra.mxu0 %v897
        %915 = vmatpush.bf16.msra.mxu0 %v896
        %916 = vmatpush.bf16.msra.mxu0 %v895
        %917 = vmatpush.bf16.msra.mxu0 %v894
        %918 = vmatmul.bf16.gmra.mxu0 %v854
        %v919 = vpop.f32.mrf.mxu0
        %v920 = vadd.f32 0.0, %v919
        %v921 = vpop.f32.mrf.mxu0
        %922 = vdwg.mxu0
        %v939 = vunpack.c.l.b16 %v596
        %v940 = vunpack.c.l.b16 %v597
        %v941 = vunpack.c.l.b16 %v598
        %v942 = vunpack.c.l.b16 %v599
        %v943 = vunpack.c.l.b16 %v600
        %v944 = vunpack.c.l.b16 %v601
        %v945 = vunpack.c.l.b16 %v602
        %v946 = vunpack.c.l.b16 %v603
        %v947 = vunpack.c.l.b16 %v604
        %v948 = vunpack.c.l.b16 %v605
        %v949 = vunpack.c.l.b16 %v606
        %v950 = vunpack.c.l.b16 %v607
        %v951 = vunpack.c.l.b16 %v608
        %v952 = vunpack.c.l.b16 %v609
        %v953 = vunpack.c.l.b16 %v610
        %v954 = vunpack.c.l.b16 %v611
        %v955 = vpack.c.b16 %v940, %v939
        %v956 = vpack.c.b16 %v942, %v941
        %v957 = vpack.c.b16 %v944, %v943
        %v958 = vpack.c.b16 %v946, %v945
        %v959 = vpack.c.b16 %v948, %v947
        %v960 = vpack.c.b16 %v950, %v949
        %v961 = vpack.c.b16 %v952, %v951
        %v962 = vpack.c.b16 %v954, %v953
        %971 = vmatpush.bf16.msra.mxu0 %v962
        %972 = vmatpush.bf16.msra.mxu0 %v961
        %973 = vmatpush.bf16.msra.mxu0 %v960
        %974 = vmatpush.bf16.msra.mxu0 %v959
        %975 = vmatpush.bf16.msra.mxu0 %v958
        %976 = vmatpush.bf16.msra.mxu0 %v957
        %977 = vmatpush.bf16.msra.mxu0 %v956
        %978 = vmatpush.bf16.msra.mxu0 %v955
        %979 = vmatmul.bf16.gmra.mxu0 %v855
        %v980 = vpop.f32.mrf.mxu0
        %v981 = vadd.f32 0.0, %v980
        %v982 = vpop.f32.mrf.mxu0
        %983 = vdwg.mxu0
        %v1000 = vunpack.c.l.b16 %v612
        %v1001 = vunpack.c.l.b16 %v613
        %v1002 = vunpack.c.l.b16 %v614
        %v1003 = vunpack.c.l.b16 %v615
        %v1004 = vunpack.c.l.b16 %v616
        %v1005 = vunpack.c.l.b16 %v617
        %v1006 = vunpack.c.l.b16 %v618
        %v1007 = vunpack.c.l.b16 %v619
        %v1008 = vunpack.c.l.b16 %v620
        %v1009 = vunpack.c.l.b16 %v621
        %v1010 = vunpack.c.l.b16 %v622
        %v1011 = vunpack.c.l.b16 %v623
        %v1012 = vunpack.c.l.b16 %v624
        %v1013 = vunpack.c.l.b16 %v625
        %v1014 = vunpack.c.l.b16 %v626
        %v1015 = vunpack.c.l.b16 %v627
        %v1016 = vpack.c.b16 %v1001, %v1000
        %v1017 = vpack.c.b16 %v1003, %v1002
        %v1018 = vpack.c.b16 %v1005, %v1004
        %v1019 = vpack.c.b16 %v1007, %v1006
        %v1020 = vpack.c.b16 %v1009, %v1008
        %v1021 = vpack.c.b16 %v1011, %v1010
        %v1022 = vpack.c.b16 %v1013, %v1012
        %v1023 = vpack.c.b16 %v1015, %v1014
        %1032 = vmatpush.bf16.msra.mxu0 %v1023
        %1033 = vmatpush.bf16.msra.mxu0 %v1022
        %1034 = vmatpush.bf16.msra.mxu0 %v1021
        %1035 = vmatpush.bf16.msra.mxu0 %v1020
        %1036 = vmatpush.bf16.msra.mxu0 %v1019
        %1037 = vmatpush.bf16.msra.mxu0 %v1018
        %1038 = vmatpush.bf16.msra.mxu0 %v1017
        %1039 = vmatpush.bf16.msra.mxu0 %v1016
        %1040 = vmatmul.bf16.gmra.mxu0 %v856
        %v1041 = vpop.f32.mrf.mxu0
        %v1042 = vadd.f32 0.0, %v1041
        %v1043 = vpop.f32.mrf.mxu0
        %1044 = vdwg.mxu0
        %v1061 = vunpack.c.l.b16 %v628
        %v1062 = vunpack.c.l.b16 %v629
        %v1063 = vunpack.c.l.b16 %v630
        %v1064 = vunpack.c.l.b16 %v631
        %v1065 = vunpack.c.l.b16 %v632
        %v1066 = vunpack.c.l.b16 %v633
        %v1067 = vunpack.c.l.b16 %v634
        %v1068 = vunpack.c.l.b16 %v635
        %v1069 = vunpack.c.l.b16 %v636
        %v1070 = vunpack.c.l.b16 %v637
        %v1071 = vunpack.c.l.b16 %v638
        %v1072 = vunpack.c.l.b16 %v639
        %v1073 = vunpack.c.l.b16 %v640
        %v1074 = vunpack.c.l.b16 %v641
        %v1075 = vunpack.c.l.b16 %v642
        %v1076 = vunpack.c.l.b16 %v643
        %v1077 = vpack.c.b16 %v1062, %v1061
        %v1078 = vpack.c.b16 %v1064, %v1063
        %v1079 = vpack.c.b16 %v1066, %v1065
        %v1080 = vpack.c.b16 %v1068, %v1067
        %v1081 = vpack.c.b16 %v1070, %v1069
        %v1082 = vpack.c.b16 %v1072, %v1071
        %v1083 = vpack.c.b16 %v1074, %v1073
        %v1084 = vpack.c.b16 %v1076, %v1075
        %1093 = vmatpush.bf16.msra.mxu0 %v1084
        %1094 = vmatpush.bf16.msra.mxu0 %v1083
        %1095 = vmatpush.bf16.msra.mxu0 %v1082
        %1096 = vmatpush.bf16.msra.mxu0 %v1081
        %1097 = vmatpush.bf16.msra.mxu0 %v1080
        %1098 = vmatpush.bf16.msra.mxu0 %v1079
        %1099 = vmatpush.bf16.msra.mxu0 %v1078
        %1100 = vmatpush.bf16.msra.mxu0 %v1077
        %1101 = vmatmul.bf16.gmra.mxu0 %v857
        %v1102 = vpop.f32.mrf.mxu0
        %v1103 = vadd.f32 0.0, %v1102
        %v1104 = vpop.f32.mrf.mxu0
        %1105 = vdwg.mxu0
        %v1122 = vunpack.c.l.b16 %v644
        %v1123 = vunpack.c.l.b16 %v645
        %v1124 = vunpack.c.l.b16 %v646
        %v1125 = vunpack.c.l.b16 %v647
        %v1126 = vunpack.c.l.b16 %v648
        %v1127 = vunpack.c.l.b16 %v649
        %v1128 = vunpack.c.l.b16 %v650
        %v1129 = vunpack.c.l.b16 %v651
        %v1130 = vunpack.c.l.b16 %v652
        %v1131 = vunpack.c.l.b16 %v653
        %v1132 = vunpack.c.l.b16 %v654
        %v1133 = vunpack.c.l.b16 %v655
        %v1134 = vunpack.c.l.b16 %v656
        %v1135 = vunpack.c.l.b16 %v657
        %v1136 = vunpack.c.l.b16 %v658
        %v1137 = vunpack.c.l.b16 %v659
        %v1138 = vpack.c.b16 %v1123, %v1122
        %v1139 = vpack.c.b16 %v1125, %v1124
        %v1140 = vpack.c.b16 %v1127, %v1126
        %v1141 = vpack.c.b16 %v1129, %v1128
        %v1142 = vpack.c.b16 %v1131, %v1130
        %v1143 = vpack.c.b16 %v1133, %v1132
        %v1144 = vpack.c.b16 %v1135, %v1134
        %v1145 = vpack.c.b16 %v1137, %v1136
        %1154 = vmatpush.bf16.msra.mxu0 %v1145
        %1155 = vmatpush.bf16.msra.mxu0 %v1144
        %1156 = vmatpush.bf16.msra.mxu0 %v1143
        %1157 = vmatpush.bf16.msra.mxu0 %v1142
        %1158 = vmatpush.bf16.msra.mxu0 %v1141
        %1159 = vmatpush.bf16.msra.mxu0 %v1140
        %1160 = vmatpush.bf16.msra.mxu0 %v1139
        %1161 = vmatpush.bf16.msra.mxu0 %v1138
        %1162 = vmatmul.bf16.gmra.mxu0 %v858
        %v1163 = vpop.f32.mrf.mxu0
        %v1164 = vadd.f32 0.0, %v1163
        %v1165 = vpop.f32.mrf.mxu0
        %1166 = vdwg.mxu0
        %v1183 = vunpack.c.l.b16 %v660
        %v1184 = vunpack.c.l.b16 %v661
        %v1185 = vunpack.c.l.b16 %v662
        %v1186 = vunpack.c.l.b16 %v663
        %v1187 = vunpack.c.l.b16 %v664
        %v1188 = vunpack.c.l.b16 %v665
        %v1189 = vunpack.c.l.b16 %v666
        %v1190 = vunpack.c.l.b16 %v667
        %v1191 = vunpack.c.l.b16 %v668
        %v1192 = vunpack.c.l.b16 %v669
        %v1193 = vunpack.c.l.b16 %v670
        %v1194 = vunpack.c.l.b16 %v671
        %v1195 = vunpack.c.l.b16 %v672
        %v1196 = vunpack.c.l.b16 %v673
        %v1197 = vunpack.c.l.b16 %v674
        %v1198 = vunpack.c.l.b16 %v675
        %v1199 = vpack.c.b16 %v1184, %v1183
        %v1200 = vpack.c.b16 %v1186, %v1185
        %v1201 = vpack.c.b16 %v1188, %v1187
        %v1202 = vpack.c.b16 %v1190, %v1189
        %v1203 = vpack.c.b16 %v1192, %v1191
        %v1204 = vpack.c.b16 %v1194, %v1193
        %v1205 = vpack.c.b16 %v1196, %v1195
        %v1206 = vpack.c.b16 %v1198, %v1197
        %1215 = vmatpush.bf16.msra.mxu0 %v1206
        %1216 = vmatpush.bf16.msra.mxu0 %v1205
        %1217 = vmatpush.bf16.msra.mxu0 %v1204
        %1218 = vmatpush.bf16.msra.mxu0 %v1203
        %1219 = vmatpush.bf16.msra.mxu0 %v1202
        %1220 = vmatpush.bf16.msra.mxu0 %v1201
        %1221 = vmatpush.bf16.msra.mxu0 %v1200
        %1222 = vmatpush.bf16.msra.mxu0 %v1199
        %1223 = vmatmul.bf16.gmra.mxu0 %v859
        %v1224 = vpop.f32.mrf.mxu0
        %v1225 = vadd.f32 0.0, %v1224
        %v1226 = vpop.f32.mrf.mxu0
        %1227 = vdwg.mxu0
        %v1244 = vunpack.c.l.b16 %v676
        %v1245 = vunpack.c.l.b16 %v677
        %v1246 = vunpack.c.l.b16 %v678
        %v1247 = vunpack.c.l.b16 %v679
        %v1248 = vunpack.c.l.b16 %v680
        %v1249 = vunpack.c.l.b16 %v681
        %v1250 = vunpack.c.l.b16 %v682
        %v1251 = vunpack.c.l.b16 %v683
        %v1252 = vunpack.c.l.b16 %v684
        %v1253 = vunpack.c.l.b16 %v685
        %v1254 = vunpack.c.l.b16 %v686
        %v1255 = vunpack.c.l.b16 %v687
        %v1256 = vunpack.c.l.b16 %v688
        %v1257 = vunpack.c.l.b16 %v689
        %v1258 = vunpack.c.l.b16 %v690
        %v1259 = vunpack.c.l.b16 %v691
        %v1260 = vpack.c.b16 %v1245, %v1244
        %v1261 = vpack.c.b16 %v1247, %v1246
        %v1262 = vpack.c.b16 %v1249, %v1248
        %v1263 = vpack.c.b16 %v1251, %v1250
        %v1264 = vpack.c.b16 %v1253, %v1252
        %v1265 = vpack.c.b16 %v1255, %v1254
        %v1266 = vpack.c.b16 %v1257, %v1256
        %v1267 = vpack.c.b16 %v1259, %v1258
        %1276 = vmatpush.bf16.msra.mxu0 %v1267
        %1277 = vmatpush.bf16.msra.mxu0 %v1266
        %1278 = vmatpush.bf16.msra.mxu0 %v1265
        %1279 = vmatpush.bf16.msra.mxu0 %v1264
        %1280 = vmatpush.bf16.msra.mxu0 %v1263
        %1281 = vmatpush.bf16.msra.mxu0 %v1262
        %1282 = vmatpush.bf16.msra.mxu0 %v1261
        %1283 = vmatpush.bf16.msra.mxu0 %v1260
        %1284 = vmatmul.bf16.gmra.mxu0 %v860
        %v1285 = vpop.f32.mrf.mxu0
        %v1286 = vadd.f32 0.0, %v1285
        %v1287 = vpop.f32.mrf.mxu0
        %1288 = vdwg.mxu0
        %v1305 = vunpack.c.l.b16 %v692
        %v1306 = vunpack.c.l.b16 %v693
        %v1307 = vunpack.c.l.b16 %v694
        %v1308 = vunpack.c.l.b16 %v695
        %v1309 = vunpack.c.l.b16 %v696
        %v1310 = vunpack.c.l.b16 %v697
        %v1311 = vunpack.c.l.b16 %v698
        %v1312 = vunpack.c.l.b16 %v699
        %v1313 = vunpack.c.l.b16 %v700
        %v1314 = vunpack.c.l.b16 %v701
        %v1315 = vunpack.c.l.b16 %v702
        %v1316 = vunpack.c.l.b16 %v703
        %v1317 = vunpack.c.l.b16 %v704
        %v1318 = vunpack.c.l.b16 %v705
        %v1319 = vunpack.c.l.b16 %v706
        %v1320 = vunpack.c.l.b16 %v707
        %v1321 = vpack.c.b16 %v1306, %v1305
        %v1322 = vpack.c.b16 %v1308, %v1307
        %v1323 = vpack.c.b16 %v1310, %v1309
        %v1324 = vpack.c.b16 %v1312, %v1311
        %v1325 = vpack.c.b16 %v1314, %v1313
        %v1326 = vpack.c.b16 %v1316, %v1315
        %v1327 = vpack.c.b16 %v1318, %v1317
        %v1328 = vpack.c.b16 %v1320, %v1319
        %1337 = vmatpush.bf16.msra.mxu0 %v1328
        %1338 = vmatpush.bf16.msra.mxu0 %v1327
        %1339 = vmatpush.bf16.msra.mxu0 %v1326
        %1340 = vmatpush.bf16.msra.mxu0 %v1325
        %1341 = vmatpush.bf16.msra.mxu0 %v1324
        %1342 = vmatpush.bf16.msra.mxu0 %v1323
        %1343 = vmatpush.bf16.msra.mxu0 %v1322
        %1344 = vmatpush.bf16.msra.mxu0 %v1321
        %1345 = vmatmul.bf16.gmra.mxu0 %v861
        %v1346 = vpop.f32.mrf.mxu0
        %v1347 = vadd.f32 0.0, %v1346
        %v1348 = vpop.f32.mrf.mxu0
        %1349 = vdwg.mxu0
        %v1358 = vrot.slane %v981, 7
        %vm1359 = vcmask 1041409
        %v1360 = vsel %vm1359, %v1358, %v920
        %v1361 = vrot.slane %v1042, 6
        %vm1362 = vcmask 1042434
        %v1363 = vsel %vm1362, %v1361, %v1360
        %v1364 = vrot.slane %v1103, 5
        %vm1365 = vcmask 1043459
        %v1366 = vsel %vm1365, %v1364, %v1363
        %v1367 = vrot.slane %v1164, 4
        %vm1368 = vcmask 1044484
        %v1369 = vsel %vm1368, %v1367, %v1366
        %v1370 = vrot.slane %v1225, 3
        %vm1371 = vcmask 1045509
        %v1372 = vsel %vm1371, %v1370, %v1369
        %v1373 = vrot.slane %v1286, 2
        %vm1374 = vcmask 1046534
        %v1375 = vsel %vm1374, %v1373, %v1372
        %v1376 = vrot.slane %v1347, 1
        %vm1377 = vcmask 1047559
        %v1378 = vsel %vm1377, %v1376, %v1375
        %v1380 = vadd.f32 %v838, %v1378
        %1381 = vst [vmem:[#allocation2] sm:$0xff] %v1380
        %v1382 = vld [vmem:[#allocation3] sm:$0xff]
        %v1384 = vrot.slane %v837, 1
        %v1385 = vrot.slane %v837, 2
        %v1386 = vrot.slane %v837, 3
        %v1387 = vrot.slane %v837, 4
        %v1388 = vrot.slane %v837, 5
        %v1389 = vrot.slane %v837, 6
        %v1390 = vrot.slane %v837, 7
        %v1398 = vpack.c.bf16 %v837, %v837
        %v1399 = vpack.c.bf16 %v1384, %v1384
        %v1400 = vpack.c.bf16 %v1385, %v1385
        %v1401 = vpack.c.bf16 %v1386, %v1386
        %v1402 = vpack.c.bf16 %v1387, %v1387
        %v1403 = vpack.c.bf16 %v1388, %v1388
        %v1404 = vpack.c.bf16 %v1389, %v1389
        %v1405 = vpack.c.bf16 %v1390, %v1390
        %v1422 = vunpack.c.l.b16 %v708
        %v1423 = vunpack.c.l.b16 %v709
        %v1424 = vunpack.c.l.b16 %v710
        %v1425 = vunpack.c.l.b16 %v711
        %v1426 = vunpack.c.l.b16 %v712
        %v1427 = vunpack.c.l.b16 %v713
        %v1428 = vunpack.c.l.b16 %v714
        %v1429 = vunpack.c.l.b16 %v715
        %v1430 = vunpack.c.l.b16 %v716
        %v1431 = vunpack.c.l.b16 %v717
        %v1432 = vunpack.c.l.b16 %v718
        %v1433 = vunpack.c.l.b16 %v719
        %v1434 = vunpack.c.l.b16 %v720
        %v1435 = vunpack.c.l.b16 %v721
        %v1436 = vunpack.c.l.b16 %v722
        %v1437 = vunpack.c.l.b16 %v723
        %v1438 = vpack.c.b16 %v1423, %v1422
        %v1439 = vpack.c.b16 %v1425, %v1424
        %v1440 = vpack.c.b16 %v1427, %v1426
        %v1441 = vpack.c.b16 %v1429, %v1428
        %v1442 = vpack.c.b16 %v1431, %v1430
        %v1443 = vpack.c.b16 %v1433, %v1432
        %v1444 = vpack.c.b16 %v1435, %v1434
        %v1445 = vpack.c.b16 %v1437, %v1436
        %1454 = vmatpush.bf16.msra.mxu0 %v1445
        %1455 = vmatpush.bf16.msra.mxu0 %v1444
        %1456 = vmatpush.bf16.msra.mxu0 %v1443
        %1457 = vmatpush.bf16.msra.mxu0 %v1442
        %1458 = vmatpush.bf16.msra.mxu0 %v1441
        %1459 = vmatpush.bf16.msra.mxu0 %v1440
        %1460 = vmatpush.bf16.msra.mxu0 %v1439
        %1461 = vmatpush.bf16.msra.mxu0 %v1438
        %1462 = vmatmul.bf16.gmra.mxu0 %v1398
        %v1463 = vpop.f32.mrf.mxu0
        %v1464 = vadd.f32 0.0, %v1463
        %v1465 = vpop.f32.mrf.mxu0
        %1466 = vdwg.mxu0
        %v1483 = vunpack.c.l.b16 %v724
        %v1484 = vunpack.c.l.b16 %v725
        %v1485 = vunpack.c.l.b16 %v726
        %v1486 = vunpack.c.l.b16 %v727
        %v1487 = vunpack.c.l.b16 %v728
        %v1488 = vunpack.c.l.b16 %v729
        %v1489 = vunpack.c.l.b16 %v730
        %v1490 = vunpack.c.l.b16 %v731
        %v1491 = vunpack.c.l.b16 %v732
        %v1492 = vunpack.c.l.b16 %v733
        %v1493 = vunpack.c.l.b16 %v734
        %v1494 = vunpack.c.l.b16 %v735
        %v1495 = vunpack.c.l.b16 %v736
        %v1496 = vunpack.c.l.b16 %v737
        %v1497 = vunpack.c.l.b16 %v738
        %v1498 = vunpack.c.l.b16 %v739
        %v1499 = vpack.c.b16 %v1484, %v1483
        %v1500 = vpack.c.b16 %v1486, %v1485
        %v1501 = vpack.c.b16 %v1488, %v1487
        %v1502 = vpack.c.b16 %v1490, %v1489
        %v1503 = vpack.c.b16 %v1492, %v1491
        %v1504 = vpack.c.b16 %v1494, %v1493
        %v1505 = vpack.c.b16 %v1496, %v1495
        %v1506 = vpack.c.b16 %v1498, %v1497
        %1515 = vmatpush.bf16.msra.mxu0 %v1506
        %1516 = vmatpush.bf16.msra.mxu0 %v1505
        %1517 = vmatpush.bf16.msra.mxu0 %v1504
        %1518 = vmatpush.bf16.msra.mxu0 %v1503
        %1519 = vmatpush.bf16.msra.mxu0 %v1502
        %1520 = vmatpush.bf16.msra.mxu0 %v1501
        %1521 = vmatpush.bf16.msra.mxu0 %v1500
        %1522 = vmatpush.bf16.msra.mxu0 %v1499
        %1523 = vmatmul.bf16.gmra.mxu0 %v1399
        %v1524 = vpop.f32.mrf.mxu0
        %v1525 = vadd.f32 0.0, %v1524
        %v1526 = vpop.f32.mrf.mxu0
        %1527 = vdwg.mxu0
        %v1544 = vunpack.c.l.b16 %v740
        %v1545 = vunpack.c.l.b16 %v741
        %v1546 = vunpack.c.l.b16 %v742
        %v1547 = vunpack.c.l.b16 %v743
        %v1548 = vunpack.c.l.b16 %v744
        %v1549 = vunpack.c.l.b16 %v745
        %v1550 = vunpack.c.l.b16 %v746
        %v1551 = vunpack.c.l.b16 %v747
        %v1552 = vunpack.c.l.b16 %v748
        %v1553 = vunpack.c.l.b16 %v749
        %v1554 = vunpack.c.l.b16 %v750
        %v1555 = vunpack.c.l.b16 %v751
        %v1556 = vunpack.c.l.b16 %v752
        %v1557 = vunpack.c.l.b16 %v753
        %v1558 = vunpack.c.l.b16 %v754
        %v1559 = vunpack.c.l.b16 %v755
        %v1560 = vpack.c.b16 %v1545, %v1544
        %v1561 = vpack.c.b16 %v1547, %v1546
        %v1562 = vpack.c.b16 %v1549, %v1548
        %v1563 = vpack.c.b16 %v1551, %v1550
        %v1564 = vpack.c.b16 %v1553, %v1552
        %v1565 = vpack.c.b16 %v1555, %v1554
        %v1566 = vpack.c.b16 %v1557, %v1556
        %v1567 = vpack.c.b16 %v1559, %v1558
        %1576 = vmatpush.bf16.msra.mxu0 %v1567
        %1577 = vmatpush.bf16.msra.mxu0 %v1566
        %1578 = vmatpush.bf16.msra.mxu0 %v1565
        %1579 = vmatpush.bf16.msra.mxu0 %v1564
        %1580 = vmatpush.bf16.msra.mxu0 %v1563
        %1581 = vmatpush.bf16.msra.mxu0 %v1562
        %1582 = vmatpush.bf16.msra.mxu0 %v1561
        %1583 = vmatpush.bf16.msra.mxu0 %v1560
        %1584 = vmatmul.bf16.gmra.mxu0 %v1400
        %v1585 = vpop.f32.mrf.mxu0
        %v1586 = vadd.f32 0.0, %v1585
        %v1587 = vpop.f32.mrf.mxu0
        %1588 = vdwg.mxu0
        %v1605 = vunpack.c.l.b16 %v756
        %v1606 = vunpack.c.l.b16 %v757
        %v1607 = vunpack.c.l.b16 %v758
        %v1608 = vunpack.c.l.b16 %v759
        %v1609 = vunpack.c.l.b16 %v760
        %v1610 = vunpack.c.l.b16 %v761
        %v1611 = vunpack.c.l.b16 %v762
        %v1612 = vunpack.c.l.b16 %v763
        %v1613 = vunpack.c.l.b16 %v764
        %v1614 = vunpack.c.l.b16 %v765
        %v1615 = vunpack.c.l.b16 %v766
        %v1616 = vunpack.c.l.b16 %v767
        %v1617 = vunpack.c.l.b16 %v768
        %v1618 = vunpack.c.l.b16 %v769
        %v1619 = vunpack.c.l.b16 %v770
        %v1620 = vunpack.c.l.b16 %v771
        %v1621 = vpack.c.b16 %v1606, %v1605
        %v1622 = vpack.c.b16 %v1608, %v1607
        %v1623 = vpack.c.b16 %v1610, %v1609
        %v1624 = vpack.c.b16 %v1612, %v1611
        %v1625 = vpack.c.b16 %v1614, %v1613
        %v1626 = vpack.c.b16 %v1616, %v1615
        %v1627 = vpack.c.b16 %v1618, %v1617
        %v1628 = vpack.c.b16 %v1620, %v1619
        %1637 = vmatpush.bf16.msra.mxu0 %v1628
        %1638 = vmatpush.bf16.msra.mxu0 %v1627
        %1639 = vmatpush.bf16.msra.mxu0 %v1626
        %1640 = vmatpush.bf16.msra.mxu0 %v1625
        %1641 = vmatpush.bf16.msra.mxu0 %v1624
        %1642 = vmatpush.bf16.msra.mxu0 %v1623
        %1643 = vmatpush.bf16.msra.mxu0 %v1622
        %1644 = vmatpush.bf16.msra.mxu0 %v1621
        %1645 = vmatmul.bf16.gmra.mxu0 %v1401
        %v1646 = vpop.f32.mrf.mxu0
        %v1647 = vadd.f32 0.0, %v1646
        %v1648 = vpop.f32.mrf.mxu0
        %1649 = vdwg.mxu0
        %v1666 = vunpack.c.l.b16 %v772
        %v1667 = vunpack.c.l.b16 %v773
        %v1668 = vunpack.c.l.b16 %v774
        %v1669 = vunpack.c.l.b16 %v775
        %v1670 = vunpack.c.l.b16 %v776
        %v1671 = vunpack.c.l.b16 %v777
        %v1672 = vunpack.c.l.b16 %v778
        %v1673 = vunpack.c.l.b16 %v779
        %v1674 = vunpack.c.l.b16 %v780
        %v1675 = vunpack.c.l.b16 %v781
        %v1676 = vunpack.c.l.b16 %v782
        %v1677 = vunpack.c.l.b16 %v783
        %v1678 = vunpack.c.l.b16 %v784
        %v1679 = vunpack.c.l.b16 %v785
        %v1680 = vunpack.c.l.b16 %v786
        %v1681 = vunpack.c.l.b16 %v787
        %v1682 = vpack.c.b16 %v1667, %v1666
        %v1683 = vpack.c.b16 %v1669, %v1668
        %v1684 = vpack.c.b16 %v1671, %v1670
        %v1685 = vpack.c.b16 %v1673, %v1672
        %v1686 = vpack.c.b16 %v1675, %v1674
        %v1687 = vpack.c.b16 %v1677, %v1676
        %v1688 = vpack.c.b16 %v1679, %v1678
        %v1689 = vpack.c.b16 %v1681, %v1680
        %1698 = vmatpush.bf16.msra.mxu0 %v1689
        %1699 = vmatpush.bf16.msra.mxu0 %v1688
        %1700 = vmatpush.bf16.msra.mxu0 %v1687
        %1701 = vmatpush.bf16.msra.mxu0 %v1686
        %1702 = vmatpush.bf16.msra.mxu0 %v1685
        %1703 = vmatpush.bf16.msra.mxu0 %v1684
        %1704 = vmatpush.bf16.msra.mxu0 %v1683
        %1705 = vmatpush.bf16.msra.mxu0 %v1682
        %1706 = vmatmul.bf16.gmra.mxu0 %v1402
        %v1707 = vpop.f32.mrf.mxu0
        %v1708 = vadd.f32 0.0, %v1707
        %v1709 = vpop.f32.mrf.mxu0
        %1710 = vdwg.mxu0
        %v1727 = vunpack.c.l.b16 %v788
        %v1728 = vunpack.c.l.b16 %v789
        %v1729 = vunpack.c.l.b16 %v790
        %v1730 = vunpack.c.l.b16 %v791
        %v1731 = vunpack.c.l.b16 %v792
        %v1732 = vunpack.c.l.b16 %v793
        %v1733 = vunpack.c.l.b16 %v794
        %v1734 = vunpack.c.l.b16 %v795
        %v1735 = vunpack.c.l.b16 %v796
        %v1736 = vunpack.c.l.b16 %v797
        %v1737 = vunpack.c.l.b16 %v798
        %v1738 = vunpack.c.l.b16 %v799
        %v1739 = vunpack.c.l.b16 %v800
        %v1740 = vunpack.c.l.b16 %v801
        %v1741 = vunpack.c.l.b16 %v802
        %v1742 = vunpack.c.l.b16 %v803
        %v1743 = vpack.c.b16 %v1728, %v1727
        %v1744 = vpack.c.b16 %v1730, %v1729
        %v1745 = vpack.c.b16 %v1732, %v1731
        %v1746 = vpack.c.b16 %v1734, %v1733
        %v1747 = vpack.c.b16 %v1736, %v1735
        %v1748 = vpack.c.b16 %v1738, %v1737
        %v1749 = vpack.c.b16 %v1740, %v1739
        %v1750 = vpack.c.b16 %v1742, %v1741
        %1759 = vmatpush.bf16.msra.mxu0 %v1750
        %1760 = vmatpush.bf16.msra.mxu0 %v1749
        %1761 = vmatpush.bf16.msra.mxu0 %v1748
        %1762 = vmatpush.bf16.msra.mxu0 %v1747
        %1763 = vmatpush.bf16.msra.mxu0 %v1746
        %1764 = vmatpush.bf16.msra.mxu0 %v1745
        %1765 = vmatpush.bf16.msra.mxu0 %v1744
        %1766 = vmatpush.bf16.msra.mxu0 %v1743
        %1767 = vmatmul.bf16.gmra.mxu0 %v1403
        %v1768 = vpop.f32.mrf.mxu0
        %v1769 = vadd.f32 0.0, %v1768
        %v1770 = vpop.f32.mrf.mxu0
        %1771 = vdwg.mxu0
        %v1788 = vunpack.c.l.b16 %v804
        %v1789 = vunpack.c.l.b16 %v805
        %v1790 = vunpack.c.l.b16 %v806
        %v1791 = vunpack.c.l.b16 %v807
        %v1792 = vunpack.c.l.b16 %v808
        %v1793 = vunpack.c.l.b16 %v809
        %v1794 = vunpack.c.l.b16 %v810
        %v1795 = vunpack.c.l.b16 %v811
        %v1796 = vunpack.c.l.b16 %v812
        %v1797 = vunpack.c.l.b16 %v813
        %v1798 = vunpack.c.l.b16 %v814
        %v1799 = vunpack.c.l.b16 %v815
        %v1800 = vunpack.c.l.b16 %v816
        %v1801 = vunpack.c.l.b16 %v817
        %v1802 = vunpack.c.l.b16 %v818
        %v1803 = vunpack.c.l.b16 %v819
        %v1804 = vpack.c.b16 %v1789, %v1788
        %v1805 = vpack.c.b16 %v1791, %v1790
        %v1806 = vpack.c.b16 %v1793, %v1792
        %v1807 = vpack.c.b16 %v1795, %v1794
        %v1808 = vpack.c.b16 %v1797, %v1796
        %v1809 = vpack.c.b16 %v1799, %v1798
        %v1810 = vpack.c.b16 %v1801, %v1800
        %v1811 = vpack.c.b16 %v1803, %v1802
        %1820 = vmatpush.bf16.msra.mxu0 %v1811
        %1821 = vmatpush.bf16.msra.mxu0 %v1810
        %1822 = vmatpush.bf16.msra.mxu0 %v1809
        %1823 = vmatpush.bf16.msra.mxu0 %v1808
        %1824 = vmatpush.bf16.msra.mxu0 %v1807
        %1825 = vmatpush.bf16.msra.mxu0 %v1806
        %1826 = vmatpush.bf16.msra.mxu0 %v1805
        %1827 = vmatpush.bf16.msra.mxu0 %v1804
        %1828 = vmatmul.bf16.gmra.mxu0 %v1404
        %v1829 = vpop.f32.mrf.mxu0
        %v1830 = vadd.f32 0.0, %v1829
        %v1831 = vpop.f32.mrf.mxu0
        %1832 = vdwg.mxu0
        %v1849 = vunpack.c.l.b16 %v820
        %v1850 = vunpack.c.l.b16 %v821
        %v1851 = vunpack.c.l.b16 %v822
        %v1852 = vunpack.c.l.b16 %v823
        %v1853 = vunpack.c.l.b16 %v824
        %v1854 = vunpack.c.l.b16 %v825
        %v1855 = vunpack.c.l.b16 %v826
        %v1856 = vunpack.c.l.b16 %v827
        %v1857 = vunpack.c.l.b16 %v828
        %v1858 = vunpack.c.l.b16 %v829
        %v1859 = vunpack.c.l.b16 %v830
        %v1860 = vunpack.c.l.b16 %v831
        %v1861 = vunpack.c.l.b16 %v832
        %v1862 = vunpack.c.l.b16 %v833
        %v1863 = vunpack.c.l.b16 %v834
        %v1864 = vunpack.c.l.b16 %v835
        %v1865 = vpack.c.b16 %v1850, %v1849
        %v1866 = vpack.c.b16 %v1852, %v1851
        %v1867 = vpack.c.b16 %v1854, %v1853
        %v1868 = vpack.c.b16 %v1856, %v1855
        %v1869 = vpack.c.b16 %v1858, %v1857
        %v1870 = vpack.c.b16 %v1860, %v1859
        %v1871 = vpack.c.b16 %v1862, %v1861
        %v1872 = vpack.c.b16 %v1864, %v1863
        %1881 = vmatpush.bf16.msra.mxu0 %v1872
        %1882 = vmatpush.bf16.msra.mxu0 %v1871
        %1883 = vmatpush.bf16.msra.mxu0 %v1870
        %1884 = vmatpush.bf16.msra.mxu0 %v1869
        %1885 = vmatpush.bf16.msra.mxu0 %v1868
        %1886 = vmatpush.bf16.msra.mxu0 %v1867
        %1887 = vmatpush.bf16.msra.mxu0 %v1866
        %1888 = vmatpush.bf16.msra.mxu0 %v1865
        %1889 = vmatmul.bf16.gmra.mxu0 %v1405
        %v1890 = vpop.f32.mrf.mxu0
        %v1891 = vadd.f32 0.0, %v1890
        %v1892 = vpop.f32.mrf.mxu0
        %1893 = vdwg.mxu0
        %v1902 = vrot.slane %v1525, 7
        %v1903 = vsel %vm1359, %v1902, %v1464
        %v1904 = vrot.slane %v1586, 6
        %v1905 = vsel %vm1362, %v1904, %v1903
        %v1906 = vrot.slane %v1647, 5
        %v1907 = vsel %vm1365, %v1906, %v1905
        %v1908 = vrot.slane %v1708, 4
        %v1909 = vsel %vm1368, %v1908, %v1907
        %v1910 = vrot.slane %v1769, 3
        %v1911 = vsel %vm1371, %v1910, %v1909
        %v1912 = vrot.slane %v1830, 2
        %v1913 = vsel %vm1374, %v1912, %v1911
        %v1914 = vrot.slane %v1891, 1
        %v1915 = vsel %vm1377, %v1914, %v1913
        %v1917 = vadd.f32 %v1382, %v1915
        %1918 = vst [vmem:[#allocation3] sm:$0xff] %v1917
        %v1919 = vld [vmem:[#allocation4] sm:$0xff]
        %1920 = vadd.xlane.f32.xlu0 %v836
        %v1921 = vpop.xlane.xlu0 %1920
        %v1922 = vadd.f32 %v1919, %v1921
        %vm1923 = vcmask 7168
        %1924 = vst.msk [vmem:[#allocation4] sm:$0xff] %vm1923, %v1922
        %v1925 = vld [vmem:[#allocation5] sm:$0xff]
        %1926 = vadd.xlane.f32.xlu0 %v837
        %v1927 = vpop.xlane.xlu0 %1926
        %v1928 = vadd.f32 %v1925, %v1927
        %1929 = vst.msk [vmem:[#allocation5] sm:$0xff] %vm1923, %v1928
        %p1930 = scmp.eq.s32.totalorder %s34, 1
        // Predicated region
        $region73: #{tpu_custom_call.1} parent=47 // pred_check
          %p1931 = pneg %p1930
        $region74: #{tpu_custom_call.1} parent=47 // pred_check_branch
          %1933 = sbr.rel (%p1931) target = $region76
        $region75: #{tpu_custom_call.1} parent=47 // pred_region
          %v1934 = vld [vmem:[#allocation2] sm:$0xff]
          %v1935 = vld [vmem:[#allocation4] sm:$0xff]
          %1937 = vset.pattern.permute.xlu0 0
          %1938 = vperm.xlu0 %1937, %v1935
          %v1939 = vpop.permute.xlu0 %1938
          %v1941 = vrcp.pop %v1939
          %v1942 = vmul.f32 %v1939, %v1941
          %v1943 = vsub.f32 1.0, %v1942
          %v1944 = vmul.f32 %v1941, %v1943
          %v1945 = vadd.f32 %v1941, %v1944
          %vm1946 = vweird.f32 %v1939
          %vm1947 = vweird.f32 %v1941
          %vm1948 = vmor %vm1946, %vm1947
          %v1949 = vsel %vm1948, %v1941, %v1945
          %v1950 = vand.u32 2147483647, %v1939
          %vm1951 = vcmp.eq.f32.partialorder %v1950, 8.507059e+37
          %v1952 = vand.u32 %v1939, 2147483648
          %v1953 = vor.u32 1.1754944e-38, %v1952
          %v1954 = vsel %vm1951, %v1953, %v1949
          %v1955 = vmul.f32 %v1934, %v1954
          %v1956 = vld [vmem:[#allocation3] sm:$0xff]
          %v1957 = vld [vmem:[#allocation5] sm:$0xff]
          %1959 = vset.pattern.permute.xlu0 0
          %1960 = vperm.xlu0 %1959, %v1957
          %v1961 = vpop.permute.xlu0 %1960
          %v1963 = vrcp.pop %v1961
          %v1964 = vmul.f32 %v1961, %v1963
          %v1965 = vsub.f32 1.0, %v1964
          %v1966 = vmul.f32 %v1963, %v1965
          %v1967 = vadd.f32 %v1963, %v1966
          %vm1968 = vweird.f32 %v1961
          %vm1969 = vweird.f32 %v1963
          %vm1970 = vmor %vm1968, %vm1969
          %v1971 = vsel %vm1970, %v1963, %v1967
          %v1972 = vand.u32 2147483647, %v1961
          %vm1973 = vcmp.eq.f32.partialorder %v1972, 8.507059e+37
          %v1974 = vand.u32 %v1961, 2147483648
          %v1975 = vor.u32 1.1754944e-38, %v1974
          %v1976 = vsel %vm1973, %v1975, %v1971
          %v1977 = vmul.f32 %v1956, %v1976
          %v1978 = vld [vmem:[#allocation13] sm:$0xff]
          %v1979 = vld [vmem:[#allocation13 + $0x8] sm:$0xff]
          %v1980 = vld [vmem:[#allocation13 + $0x10] sm:$0xff]
          %v1981 = vld [vmem:[#allocation13 + $0x18] sm:$0xff]
          %v1982 = vld [vmem:[#allocation13 + $0x20] sm:$0xff]
          %v1983 = vld [vmem:[#allocation13 + $0x28] sm:$0xff]
          %v1984 = vld [vmem:[#allocation13 + $0x30] sm:$0xff]
          %v1985 = vld [vmem:[#allocation13 + $0x38] sm:$0xff]
          %v1986 = vld [vmem:[#allocation13 + $0x40] sm:$0xff]
          %v1987 = vld [vmem:[#allocation13 + $0x48] sm:$0xff]
          %v1988 = vld [vmem:[#allocation13 + $0x50] sm:$0xff]
          %v1989 = vld [vmem:[#allocation13 + $0x58] sm:$0xff]
          %v1990 = vld [vmem:[#allocation13 + $0x60] sm:$0xff]
          %v1991 = vld [vmem:[#allocation13 + $0x68] sm:$0xff]
          %v1992 = vld [vmem:[#allocation13 + $0x70] sm:$0xff]
          %v1993 = vld [vmem:[#allocation13 + $0x78] sm:$0xff]
          %v1994 = vld [vmem:[#allocation13 + $0x80] sm:$0xff]
          %v1995 = vld [vmem:[#allocation13 + $0x88] sm:$0xff]
          %v1996 = vld [vmem:[#allocation13 + $0x90] sm:$0xff]
          %v1997 = vld [vmem:[#allocation13 + $0x98] sm:$0xff]
          %v1998 = vld [vmem:[#allocation13 + $0xa0] sm:$0xff]
          %v1999 = vld [vmem:[#allocation13 + $0xa8] sm:$0xff]
          %v2000 = vld [vmem:[#allocation13 + $0xb0] sm:$0xff]
          %v2001 = vld [vmem:[#allocation13 + $0xb8] sm:$0xff]
          %v2002 = vld [vmem:[#allocation13 + $0xc0] sm:$0xff]
          %v2003 = vld [vmem:[#allocation13 + $0xc8] sm:$0xff]
          %v2004 = vld [vmem:[#allocation13 + $0xd0] sm:$0xff]
          %v2005 = vld [vmem:[#allocation13 + $0xd8] sm:$0xff]
          %v2006 = vld [vmem:[#allocation13 + $0xe0] sm:$0xff]
          %v2007 = vld [vmem:[#allocation13 + $0xe8] sm:$0xff]
          %v2008 = vld [vmem:[#allocation13 + $0xf0] sm:$0xff]
          %v2009 = vld [vmem:[#allocation13 + $0xf8] sm:$0xff]
          %v2010 = vld [vmem:[%s6] sm:$0x1]
          %v2011 = vld [vmem:[#allocation13] sm:$0xff]
          %v2012 = vrot.slane %v1978, 4
          %vm2013 = vcmask 1047556
          %v2014 = vsel %vm2013, 0.0, %v2012
          %v2016 = vunpack.c.l.s4 1983009808
          %v2017 = vunpack.c.0.s8 %v2016
          %v2018 = vperm.slane %v2011, %v2017
          %v2020 = vunpack.c.l.s4 1983009808
          %v2021 = vunpack.c.0.s8 %v2020
          %v2022 = vperm.slane %v2014, %v2021
          %v2023 = vld [vmem:[#allocation13 + $0x80] sm:$0xff]
          %v2024 = vrot.slane %v1994, 4
          %v2025 = vsel %vm2013, 0.0, %v2024
          %v2027 = vunpack.c.l.s4 1983009808
          %v2028 = vunpack.c.0.s8 %v2027
          %v2029 = vperm.slane %v2023, %v2028
          %v2031 = vunpack.c.l.s4 1983009808
          %v2032 = vunpack.c.0.s8 %v2031
          %v2033 = vperm.slane %v2025, %v2032
          %v2034 = vrot.slane %v2029, 4
          %v2035 = vsel %vm2013, %v2034, %v2018
          %v2036 = vrot.slane %v2018, 4
          %v2037 = vsel %vm2013, %v2029, %v2036
          %v2039 = vunpack.c.l.s4 1934713408
          %v2040 = vunpack.c.0.s8 %v2039
          %v2041 = vperm.slane %v2035, %v2040
          %v2043 = vunpack.c.l.s4 1934713408
          %v2044 = vunpack.c.0.s8 %v2043
          %v2045 = vperm.slane %v2037, %v2044
          %v2046 = vrot.slane %v2033, 4
          %v2047 = vsel %vm2013, %v2046, %v2022
          %v2048 = vrot.slane %v2022, 4
          %v2049 = vsel %vm2013, %v2033, %v2048
          %v2051 = vunpack.c.l.s4 1934713408
          %v2052 = vunpack.c.0.s8 %v2051
          %v2053 = vperm.slane %v2047, %v2052
          %v2055 = vunpack.c.l.s4 1934713408
          %v2056 = vunpack.c.0.s8 %v2055
          %v2057 = vperm.slane %v2049, %v2056
          %v2058 = vrot.slane %v2041, 4
          %v2059 = vsel %vm2013, 0.0, %v2058
          %v2060 = vrot.slane %v2045, 4
          %v2061 = vsel %vm2013, 0.0, %v2060
          %v2062 = vrot.slane %v2053, 4
          %v2063 = vsel %vm2013, 0.0, %v2062
          %v2064 = vrot.slane %v2057, 4
          %v2065 = vsel %vm2013, 0.0, %v2064
          %v2066 = vld [vmem:[#allocation13 + $0x8] sm:$0xff]
          %v2067 = vrot.slane %v1979, 4
          %v2068 = vsel %vm2013, 0.0, %v2067
          %v2070 = vunpack.c.l.s4 1983009808
          %v2071 = vunpack.c.0.s8 %v2070
          %v2072 = vperm.slane %v2066, %v2071
          %v2074 = vunpack.c.l.s4 1983009808
          %v2075 = vunpack.c.0.s8 %v2074
          %v2076 = vperm.slane %v2068, %v2075
          %v2077 = vld [vmem:[#allocation13 + $0x88] sm:$0xff]
          %v2078 = vrot.slane %v1995, 4
          %v2079 = vsel %vm2013, 0.0, %v2078
          %v2081 = vunpack.c.l.s4 1983009808
          %v2082 = vunpack.c.0.s8 %v2081
          %v2083 = vperm.slane %v2077, %v2082
          %v2085 = vunpack.c.l.s4 1983009808
          %v2086 = vunpack.c.0.s8 %v2085
          %v2087 = vperm.slane %v2079, %v2086
          %v2088 = vrot.slane %v2083, 4
          %v2089 = vsel %vm2013, %v2088, %v2072
          %v2090 = vrot.slane %v2072, 4
          %v2091 = vsel %vm2013, %v2083, %v2090
          %v2093 = vunpack.c.l.s4 1934713408
          %v2094 = vunpack.c.0.s8 %v2093
          %v2095 = vperm.slane %v2089, %v2094
          %v2097 = vunpack.c.l.s4 1934713408
          %v2098 = vunpack.c.0.s8 %v2097
          %v2099 = vperm.slane %v2091, %v2098
          %v2100 = vrot.slane %v2087, 4
          %v2101 = vsel %vm2013, %v2100, %v2076
          %v2102 = vrot.slane %v2076, 4
          %v2103 = vsel %vm2013, %v2087, %v2102
          %v2105 = vunpack.c.l.s4 1934713408
          %v2106 = vunpack.c.0.s8 %v2105
          %v2107 = vperm.slane %v2101, %v2106
          %v2109 = vunpack.c.l.s4 1934713408
          %v2110 = vunpack.c.0.s8 %v2109
          %v2111 = vperm.slane %v2103, %v2110
          %v2112 = vrot.slane %v2095, 4
          %v2113 = vsel %vm2013, 0.0, %v2112
          %v2114 = vrot.slane %v2099, 4
          %v2115 = vsel %vm2013, 0.0, %v2114
          %v2116 = vrot.slane %v2107, 4
          %v2117 = vsel %vm2013, 0.0, %v2116
          %v2118 = vrot.slane %v2111, 4
          %v2119 = vsel %vm2013, 0.0, %v2118
          %v2120 = vld [vmem:[#allocation13 + $0x10] sm:$0xff]
          %v2121 = vrot.slane %v1980, 4
          %v2122 = vsel %vm2013, 0.0, %v2121
          %v2124 = vunpack.c.l.s4 1983009808
          %v2125 = vunpack.c.0.s8 %v2124
          %v2126 = vperm.slane %v2120, %v2125
          %v2128 = vunpack.c.l.s4 1983009808
          %v2129 = vunpack.c.0.s8 %v2128
          %v2130 = vperm.slane %v2122, %v2129
          %v2131 = vld [vmem:[#allocation13 + $0x90] sm:$0xff]
          %v2132 = vrot.slane %v1996, 4
          %v2133 = vsel %vm2013, 0.0, %v2132
          %v2135 = vunpack.c.l.s4 1983009808
          %v2136 = vunpack.c.0.s8 %v2135
          %v2137 = vperm.slane %v2131, %v2136
          %v2139 = vunpack.c.l.s4 1983009808
          %v2140 = vunpack.c.0.s8 %v2139
          %v2141 = vperm.slane %v2133, %v2140
          %v2142 = vrot.slane %v2137, 4
          %v2143 = vsel %vm2013, %v2142, %v2126
          %v2144 = vrot.slane %v2126, 4
          %v2145 = vsel %vm2013, %v2137, %v2144
          %v2147 = vunpack.c.l.s4 1934713408
          %v2148 = vunpack.c.0.s8 %v2147
          %v2149 = vperm.slane %v2143, %v2148
          %v2151 = vunpack.c.l.s4 1934713408
          %v2152 = vunpack.c.0.s8 %v2151
          %v2153 = vperm.slane %v2145, %v2152
          %v2154 = vrot.slane %v2141, 4
          %v2155 = vsel %vm2013, %v2154, %v2130
          %v2156 = vrot.slane %v2130, 4
          %v2157 = vsel %vm2013, %v2141, %v2156
          %v2159 = vunpack.c.l.s4 1934713408
          %v2160 = vunpack.c.0.s8 %v2159
          %v2161 = vperm.slane %v2155, %v2160
          %v2163 = vunpack.c.l.s4 1934713408
          %v2164 = vunpack.c.0.s8 %v2163
          %v2165 = vperm.slane %v2157, %v2164
          %v2166 = vrot.slane %v2149, 4
          %v2167 = vsel %vm2013, 0.0, %v2166
          %v2168 = vrot.slane %v2153, 4
          %v2169 = vsel %vm2013, 0.0, %v2168
          %v2170 = vrot.slane %v2161, 4
          %v2171 = vsel %vm2013, 0.0, %v2170
          %v2172 = vrot.slane %v2165, 4
          %v2173 = vsel %vm2013, 0.0, %v2172
          %v2174 = vld [vmem:[#allocation13 + $0x18] sm:$0xff]
          %v2175 = vrot.slane %v1981, 4
          %v2176 = vsel %vm2013, 0.0, %v2175
          %v2178 = vunpack.c.l.s4 1983009808
          %v2179 = vunpack.c.0.s8 %v2178
          %v2180 = vperm.slane %v2174, %v2179
          %v2182 = vunpack.c.l.s4 1983009808
          %v2183 = vunpack.c.0.s8 %v2182
          %v2184 = vperm.slane %v2176, %v2183
          %v2185 = vld [vmem:[#allocation13 + $0x98] sm:$0xff]
          %v2186 = vrot.slane %v1997, 4
          %v2187 = vsel %vm2013, 0.0, %v2186
          %v2189 = vunpack.c.l.s4 1983009808
          %v2190 = vunpack.c.0.s8 %v2189
          %v2191 = vperm.slane %v2185, %v2190
          %v2193 = vunpack.c.l.s4 1983009808
          %v2194 = vunpack.c.0.s8 %v2193
          %v2195 = vperm.slane %v2187, %v2194
          %v2196 = vrot.slane %v2191, 4
          %v2197 = vsel %vm2013, %v2196, %v2180
          %v2198 = vrot.slane %v2180, 4
          %v2199 = vsel %vm2013, %v2191, %v2198
          %v2201 = vunpack.c.l.s4 1934713408
          %v2202 = vunpack.c.0.s8 %v2201
          %v2203 = vperm.slane %v2197, %v2202
          %v2205 = vunpack.c.l.s4 1934713408
          %v2206 = vunpack.c.0.s8 %v2205
          %v2207 = vperm.slane %v2199, %v2206
          %v2208 = vrot.slane %v2195, 4
          %v2209 = vsel %vm2013, %v2208, %v2184
          %v2210 = vrot.slane %v2184, 4
          %v2211 = vsel %vm2013, %v2195, %v2210
          %v2213 = vunpack.c.l.s4 1934713408
          %v2214 = vunpack.c.0.s8 %v2213
          %v2215 = vperm.slane %v2209, %v2214
          %v2217 = vunpack.c.l.s4 1934713408
          %v2218 = vunpack.c.0.s8 %v2217
          %v2219 = vperm.slane %v2211, %v2218
          %v2220 = vrot.slane %v2203, 4
          %v2221 = vsel %vm2013, 0.0, %v2220
          %v2222 = vrot.slane %v2207, 4
          %v2223 = vsel %vm2013, 0.0, %v2222
          %v2224 = vrot.slane %v2215, 4
          %v2225 = vsel %vm2013, 0.0, %v2224
          %v2226 = vrot.slane %v2219, 4
          %v2227 = vsel %vm2013, 0.0, %v2226
          %v2228 = vld [vmem:[#allocation13 + $0x20] sm:$0xff]
          %v2229 = vrot.slane %v1982, 4
          %v2230 = vsel %vm2013, 0.0, %v2229
          %v2232 = vunpack.c.l.s4 1983009808
          %v2233 = vunpack.c.0.s8 %v2232
          %v2234 = vperm.slane %v2228, %v2233
          %v2236 = vunpack.c.l.s4 1983009808
          %v2237 = vunpack.c.0.s8 %v2236
          %v2238 = vperm.slane %v2230, %v2237
          %v2239 = vld [vmem:[#allocation13 + $0xa0] sm:$0xff]
          %v2240 = vrot.slane %v1998, 4
          %v2241 = vsel %vm2013, 0.0, %v2240
          %v2243 = vunpack.c.l.s4 1983009808
          %v2244 = vunpack.c.0.s8 %v2243
          %v2245 = vperm.slane %v2239, %v2244
          %v2247 = vunpack.c.l.s4 1983009808
          %v2248 = vunpack.c.0.s8 %v2247
          %v2249 = vperm.slane %v2241, %v2248
          %v2250 = vrot.slane %v2245, 4
          %v2251 = vsel %vm2013, %v2250, %v2234
          %v2252 = vrot.slane %v2234, 4
          %v2253 = vsel %vm2013, %v2245, %v2252
          %v2255 = vunpack.c.l.s4 1934713408
          %v2256 = vunpack.c.0.s8 %v2255
          %v2257 = vperm.slane %v2251, %v2256
          %v2259 = vunpack.c.l.s4 1934713408
          %v2260 = vunpack.c.0.s8 %v2259
          %v2261 = vperm.slane %v2253, %v2260
          %v2262 = vrot.slane %v2249, 4
          %v2263 = vsel %vm2013, %v2262, %v2238
          %v2264 = vrot.slane %v2238, 4
          %v2265 = vsel %vm2013, %v2249, %v2264
          %v2267 = vunpack.c.l.s4 1934713408
          %v2268 = vunpack.c.0.s8 %v2267
          %v2269 = vperm.slane %v2263, %v2268
          %v2271 = vunpack.c.l.s4 1934713408
          %v2272 = vunpack.c.0.s8 %v2271
          %v2273 = vperm.slane %v2265, %v2272
          %v2274 = vrot.slane %v2257, 4
          %v2275 = vsel %vm2013, 0.0, %v2274
          %v2276 = vrot.slane %v2261, 4
          %v2277 = vsel %vm2013, 0.0, %v2276
          %v2278 = vrot.slane %v2269, 4
          %v2279 = vsel %vm2013, 0.0, %v2278
          %v2280 = vrot.slane %v2273, 4
          %v2281 = vsel %vm2013, 0.0, %v2280
          %v2282 = vld [vmem:[#allocation13 + $0x28] sm:$0xff]
          %v2283 = vrot.slane %v1983, 4
          %v2284 = vsel %vm2013, 0.0, %v2283
          %v2286 = vunpack.c.l.s4 1983009808
          %v2287 = vunpack.c.0.s8 %v2286
          %v2288 = vperm.slane %v2282, %v2287
          %v2290 = vunpack.c.l.s4 1983009808
          %v2291 = vunpack.c.0.s8 %v2290
          %v2292 = vperm.slane %v2284, %v2291
          %v2293 = vld [vmem:[#allocation13 + $0xa8] sm:$0xff]
          %v2294 = vrot.slane %v1999, 4
          %v2295 = vsel %vm2013, 0.0, %v2294
          %v2297 = vunpack.c.l.s4 1983009808
          %v2298 = vunpack.c.0.s8 %v2297
          %v2299 = vperm.slane %v2293, %v2298
          %v2301 = vunpack.c.l.s4 1983009808
          %v2302 = vunpack.c.0.s8 %v2301
          %v2303 = vperm.slane %v2295, %v2302
          %v2304 = vrot.slane %v2299, 4
          %v2305 = vsel %vm2013, %v2304, %v2288
          %v2306 = vrot.slane %v2288, 4
          %v2307 = vsel %vm2013, %v2299, %v2306
          %v2309 = vunpack.c.l.s4 1934713408
          %v2310 = vunpack.c.0.s8 %v2309
          %v2311 = vperm.slane %v2305, %v2310
          %v2313 = vunpack.c.l.s4 1934713408
          %v2314 = vunpack.c.0.s8 %v2313
          %v2315 = vperm.slane %v2307, %v2314
          %v2316 = vrot.slane %v2303, 4
          %v2317 = vsel %vm2013, %v2316, %v2292
          %v2318 = vrot.slane %v2292, 4
          %v2319 = vsel %vm2013, %v2303, %v2318
          %v2321 = vunpack.c.l.s4 1934713408
          %v2322 = vunpack.c.0.s8 %v2321
          %v2323 = vperm.slane %v2317, %v2322
          %v2325 = vunpack.c.l.s4 1934713408
          %v2326 = vunpack.c.0.s8 %v2325
          %v2327 = vperm.slane %v2319, %v2326
          %v2328 = vrot.slane %v2311, 4
          %v2329 = vsel %vm2013, 0.0, %v2328
          %v2330 = vrot.slane %v2315, 4
          %v2331 = vsel %vm2013, 0.0, %v2330
          %v2332 = vrot.slane %v2323, 4
          %v2333 = vsel %vm2013, 0.0, %v2332
          %v2334 = vrot.slane %v2327, 4
          %v2335 = vsel %vm2013, 0.0, %v2334
          %v2336 = vld [vmem:[#allocation13 + $0x30] sm:$0xff]
          %v2337 = vrot.slane %v1984, 4
          %v2338 = vsel %vm2013, 0.0, %v2337
          %v2340 = vunpack.c.l.s4 1983009808
          %v2341 = vunpack.c.0.s8 %v2340
          %v2342 = vperm.slane %v2336, %v2341
          %v2344 = vunpack.c.l.s4 1983009808
          %v2345 = vunpack.c.0.s8 %v2344
          %v2346 = vperm.slane %v2338, %v2345
          %v2347 = vld [vmem:[#allocation13 + $0xb0] sm:$0xff]
          %v2348 = vrot.slane %v2000, 4
          %v2349 = vsel %vm2013, 0.0, %v2348
          %v2351 = vunpack.c.l.s4 1983009808
          %v2352 = vunpack.c.0.s8 %v2351
          %v2353 = vperm.slane %v2347, %v2352
          %v2355 = vunpack.c.l.s4 1983009808
          %v2356 = vunpack.c.0.s8 %v2355
          %v2357 = vperm.slane %v2349, %v2356
          %v2358 = vrot.slane %v2353, 4
          %v2359 = vsel %vm2013, %v2358, %v2342
          %v2360 = vrot.slane %v2342, 4
          %v2361 = vsel %vm2013, %v2353, %v2360
          %v2363 = vunpack.c.l.s4 1934713408
          %v2364 = vunpack.c.0.s8 %v2363
          %v2365 = vperm.slane %v2359, %v2364
          %v2367 = vunpack.c.l.s4 1934713408
          %v2368 = vunpack.c.0.s8 %v2367
          %v2369 = vperm.slane %v2361, %v2368
          %v2370 = vrot.slane %v2357, 4
          %v2371 = vsel %vm2013, %v2370, %v2346
          %v2372 = vrot.slane %v2346, 4
          %v2373 = vsel %vm2013, %v2357, %v2372
          %v2375 = vunpack.c.l.s4 1934713408
          %v2376 = vunpack.c.0.s8 %v2375
          %v2377 = vperm.slane %v2371, %v2376
          %v2379 = vunpack.c.l.s4 1934713408
          %v2380 = vunpack.c.0.s8 %v2379
          %v2381 = vperm.slane %v2373, %v2380
          %v2382 = vrot.slane %v2365, 4
          %v2383 = vsel %vm2013, 0.0, %v2382
          %v2384 = vrot.slane %v2369, 4
          %v2385 = vsel %vm2013, 0.0, %v2384
          %v2386 = vrot.slane %v2377, 4
          %v2387 = vsel %vm2013, 0.0, %v2386
          %v2388 = vrot.slane %v2381, 4
          %v2389 = vsel %vm2013, 0.0, %v2388
          %v2390 = vld [vmem:[#allocation13 + $0x38] sm:$0xff]
          %v2391 = vrot.slane %v1985, 4
          %v2392 = vsel %vm2013, 0.0, %v2391
          %v2394 = vunpack.c.l.s4 1983009808
          %v2395 = vunpack.c.0.s8 %v2394
          %v2396 = vperm.slane %v2390, %v2395
          %v2398 = vunpack.c.l.s4 1983009808
          %v2399 = vunpack.c.0.s8 %v2398
          %v2400 = vperm.slane %v2392, %v2399
          %v2401 = vld [vmem:[#allocation13 + $0xb8] sm:$0xff]
          %v2402 = vrot.slane %v2001, 4
          %v2403 = vsel %vm2013, 0.0, %v2402
          %v2405 = vunpack.c.l.s4 1983009808
          %v2406 = vunpack.c.0.s8 %v2405
          %v2407 = vperm.slane %v2401, %v2406
          %v2409 = vunpack.c.l.s4 1983009808
          %v2410 = vunpack.c.0.s8 %v2409
          %v2411 = vperm.slane %v2403, %v2410
          %v2412 = vrot.slane %v2407, 4
          %v2413 = vsel %vm2013, %v2412, %v2396
          %v2414 = vrot.slane %v2396, 4
          %v2415 = vsel %vm2013, %v2407, %v2414
          %v2417 = vunpack.c.l.s4 1934713408
          %v2418 = vunpack.c.0.s8 %v2417
          %v2419 = vperm.slane %v2413, %v2418
          %v2421 = vunpack.c.l.s4 1934713408
          %v2422 = vunpack.c.0.s8 %v2421
          %v2423 = vperm.slane %v2415, %v2422
          %v2424 = vrot.slane %v2411, 4
          %v2425 = vsel %vm2013, %v2424, %v2400
          %v2426 = vrot.slane %v2400, 4
          %v2427 = vsel %vm2013, %v2411, %v2426
          %v2429 = vunpack.c.l.s4 1934713408
          %v2430 = vunpack.c.0.s8 %v2429
          %v2431 = vperm.slane %v2425, %v2430
          %v2433 = vunpack.c.l.s4 1934713408
          %v2434 = vunpack.c.0.s8 %v2433
          %v2435 = vperm.slane %v2427, %v2434
          %v2436 = vrot.slane %v2419, 4
          %v2437 = vsel %vm2013, 0.0, %v2436
          %v2438 = vrot.slane %v2423, 4
          %v2439 = vsel %vm2013, 0.0, %v2438
          %v2440 = vrot.slane %v2431, 4
          %v2441 = vsel %vm2013, 0.0, %v2440
          %v2442 = vrot.slane %v2435, 4
          %v2443 = vsel %vm2013, 0.0, %v2442
          %v2444 = vld [vmem:[#allocation13 + $0x40] sm:$0xff]
          %v2445 = vrot.slane %v1986, 4
          %v2446 = vsel %vm2013, 0.0, %v2445
          %v2448 = vunpack.c.l.s4 1983009808
          %v2449 = vunpack.c.0.s8 %v2448
          %v2450 = vperm.slane %v2444, %v2449
          %v2452 = vunpack.c.l.s4 1983009808
          %v2453 = vunpack.c.0.s8 %v2452
          %v2454 = vperm.slane %v2446, %v2453
          %v2455 = vld [vmem:[#allocation13 + $0xc0] sm:$0xff]
          %v2456 = vrot.slane %v2002, 4
          %v2457 = vsel %vm2013, 0.0, %v2456
          %v2459 = vunpack.c.l.s4 1983009808
          %v2460 = vunpack.c.0.s8 %v2459
          %v2461 = vperm.slane %v2455, %v2460
          %v2463 = vunpack.c.l.s4 1983009808
          %v2464 = vunpack.c.0.s8 %v2463
          %v2465 = vperm.slane %v2457, %v2464
          %v2466 = vrot.slane %v2461, 4
          %v2467 = vsel %vm2013, %v2466, %v2450
          %v2468 = vrot.slane %v2450, 4
          %v2469 = vsel %vm2013, %v2461, %v2468
          %v2471 = vunpack.c.l.s4 1934713408
          %v2472 = vunpack.c.0.s8 %v2471
          %v2473 = vperm.slane %v2467, %v2472
          %v2475 = vunpack.c.l.s4 1934713408
          %v2476 = vunpack.c.0.s8 %v2475
          %v2477 = vperm.slane %v2469, %v2476
          %v2478 = vrot.slane %v2465, 4
          %v2479 = vsel %vm2013, %v2478, %v2454
          %v2480 = vrot.slane %v2454, 4
          %v2481 = vsel %vm2013, %v2465, %v2480
          %v2483 = vunpack.c.l.s4 1934713408
          %v2484 = vunpack.c.0.s8 %v2483
          %v2485 = vperm.slane %v2479, %v2484
          %v2487 = vunpack.c.l.s4 1934713408
          %v2488 = vunpack.c.0.s8 %v2487
          %v2489 = vperm.slane %v2481, %v2488
          %v2490 = vrot.slane %v2473, 4
          %v2491 = vsel %vm2013, 0.0, %v2490
          %v2492 = vrot.slane %v2477, 4
          %v2493 = vsel %vm2013, 0.0, %v2492
          %v2494 = vrot.slane %v2485, 4
          %v2495 = vsel %vm2013, 0.0, %v2494
          %v2496 = vrot.slane %v2489, 4
          %v2497 = vsel %vm2013, 0.0, %v2496
          %v2498 = vld [vmem:[#allocation13 + $0x48] sm:$0xff]
          %v2499 = vrot.slane %v1987, 4
          %v2500 = vsel %vm2013, 0.0, %v2499
          %v2502 = vunpack.c.l.s4 1983009808
          %v2503 = vunpack.c.0.s8 %v2502
          %v2504 = vperm.slane %v2498, %v2503
          %v2506 = vunpack.c.l.s4 1983009808
          %v2507 = vunpack.c.0.s8 %v2506
          %v2508 = vperm.slane %v2500, %v2507
          %v2509 = vld [vmem:[#allocation13 + $0xc8] sm:$0xff]
          %v2510 = vrot.slane %v2003, 4
          %v2511 = vsel %vm2013, 0.0, %v2510
          %v2513 = vunpack.c.l.s4 1983009808
          %v2514 = vunpack.c.0.s8 %v2513
          %v2515 = vperm.slane %v2509, %v2514
          %v2517 = vunpack.c.l.s4 1983009808
          %v2518 = vunpack.c.0.s8 %v2517
          %v2519 = vperm.slane %v2511, %v2518
          %v2520 = vrot.slane %v2515, 4
          %v2521 = vsel %vm2013, %v2520, %v2504
          %v2522 = vrot.slane %v2504, 4
          %v2523 = vsel %vm2013, %v2515, %v2522
          %v2525 = vunpack.c.l.s4 1934713408
          %v2526 = vunpack.c.0.s8 %v2525
          %v2527 = vperm.slane %v2521, %v2526
          %v2529 = vunpack.c.l.s4 1934713408
          %v2530 = vunpack.c.0.s8 %v2529
          %v2531 = vperm.slane %v2523, %v2530
          %v2532 = vrot.slane %v2519, 4
          %v2533 = vsel %vm2013, %v2532, %v2508
          %v2534 = vrot.slane %v2508, 4
          %v2535 = vsel %vm2013, %v2519, %v2534
          %v2537 = vunpack.c.l.s4 1934713408
          %v2538 = vunpack.c.0.s8 %v2537
          %v2539 = vperm.slane %v2533, %v2538
          %v2541 = vunpack.c.l.s4 1934713408
          %v2542 = vunpack.c.0.s8 %v2541
          %v2543 = vperm.slane %v2535, %v2542
          %v2544 = vrot.slane %v2527, 4
          %v2545 = vsel %vm2013, 0.0, %v2544
          %v2546 = vrot.slane %v2531, 4
          %v2547 = vsel %vm2013, 0.0, %v2546
          %v2548 = vrot.slane %v2539, 4
          %v2549 = vsel %vm2013, 0.0, %v2548
          %v2550 = vrot.slane %v2543, 4
          %v2551 = vsel %vm2013, 0.0, %v2550
          %v2552 = vld [vmem:[#allocation13 + $0x50] sm:$0xff]
          %v2553 = vrot.slane %v1988, 4
          %v2554 = vsel %vm2013, 0.0, %v2553
          %v2556 = vunpack.c.l.s4 1983009808
          %v2557 = vunpack.c.0.s8 %v2556
          %v2558 = vperm.slane %v2552, %v2557
          %v2560 = vunpack.c.l.s4 1983009808
          %v2561 = vunpack.c.0.s8 %v2560
          %v2562 = vperm.slane %v2554, %v2561
          %v2563 = vld [vmem:[#allocation13 + $0xd0] sm:$0xff]
          %v2564 = vrot.slane %v2004, 4
          %v2565 = vsel %vm2013, 0.0, %v2564
          %v2567 = vunpack.c.l.s4 1983009808
          %v2568 = vunpack.c.0.s8 %v2567
          %v2569 = vperm.slane %v2563, %v2568
          %v2571 = vunpack.c.l.s4 1983009808
          %v2572 = vunpack.c.0.s8 %v2571
          %v2573 = vperm.slane %v2565, %v2572
          %v2574 = vrot.slane %v2569, 4
          %v2575 = vsel %vm2013, %v2574, %v2558
          %v2576 = vrot.slane %v2558, 4
          %v2577 = vsel %vm2013, %v2569, %v2576
          %v2579 = vunpack.c.l.s4 1934713408
          %v2580 = vunpack.c.0.s8 %v2579
          %v2581 = vperm.slane %v2575, %v2580
          %v2583 = vunpack.c.l.s4 1934713408
          %v2584 = vunpack.c.0.s8 %v2583
          %v2585 = vperm.slane %v2577, %v2584
          %v2586 = vrot.slane %v2573, 4
          %v2587 = vsel %vm2013, %v2586, %v2562
          %v2588 = vrot.slane %v2562, 4
          %v2589 = vsel %vm2013, %v2573, %v2588
          %v2591 = vunpack.c.l.s4 1934713408
          %v2592 = vunpack.c.0.s8 %v2591
          %v2593 = vperm.slane %v2587, %v2592
          %v2595 = vunpack.c.l.s4 1934713408
          %v2596 = vunpack.c.0.s8 %v2595
          %v2597 = vperm.slane %v2589, %v2596
          %v2598 = vrot.slane %v2581, 4
          %v2599 = vsel %vm2013, 0.0, %v2598
          %v2600 = vrot.slane %v2585, 4
          %v2601 = vsel %vm2013, 0.0, %v2600
          %v2602 = vrot.slane %v2593, 4
          %v2603 = vsel %vm2013, 0.0, %v2602
          %v2604 = vrot.slane %v2597, 4
          %v2605 = vsel %vm2013, 0.0, %v2604
          %v2606 = vld [vmem:[#allocation13 + $0x58] sm:$0xff]
          %v2607 = vrot.slane %v1989, 4
          %v2608 = vsel %vm2013, 0.0, %v2607
          %v2610 = vunpack.c.l.s4 1983009808
          %v2611 = vunpack.c.0.s8 %v2610
          %v2612 = vperm.slane %v2606, %v2611
          %v2614 = vunpack.c.l.s4 1983009808
          %v2615 = vunpack.c.0.s8 %v2614
          %v2616 = vperm.slane %v2608, %v2615
          %v2617 = vld [vmem:[#allocation13 + $0xd8] sm:$0xff]
          %v2618 = vrot.slane %v2005, 4
          %v2619 = vsel %vm2013, 0.0, %v2618
          %v2621 = vunpack.c.l.s4 1983009808
          %v2622 = vunpack.c.0.s8 %v2621
          %v2623 = vperm.slane %v2617, %v2622
          %v2625 = vunpack.c.l.s4 1983009808
          %v2626 = vunpack.c.0.s8 %v2625
          %v2627 = vperm.slane %v2619, %v2626
          %v2628 = vrot.slane %v2623, 4
          %v2629 = vsel %vm2013, %v2628, %v2612
          %v2630 = vrot.slane %v2612, 4
          %v2631 = vsel %vm2013, %v2623, %v2630
          %v2633 = vunpack.c.l.s4 1934713408
          %v2634 = vunpack.c.0.s8 %v2633
          %v2635 = vperm.slane %v2629, %v2634
          %v2637 = vunpack.c.l.s4 1934713408
          %v2638 = vunpack.c.0.s8 %v2637
          %v2639 = vperm.slane %v2631, %v2638
          %v2640 = vrot.slane %v2627, 4
          %v2641 = vsel %vm2013, %v2640, %v2616
          %v2642 = vrot.slane %v2616, 4
          %v2643 = vsel %vm2013, %v2627, %v2642
          %v2645 = vunpack.c.l.s4 1934713408
          %v2646 = vunpack.c.0.s8 %v2645
          %v2647 = vperm.slane %v2641, %v2646
          %v2649 = vunpack.c.l.s4 1934713408
          %v2650 = vunpack.c.0.s8 %v2649
          %v2651 = vperm.slane %v2643, %v2650
          %v2652 = vrot.slane %v2635, 4
          %v2653 = vsel %vm2013, 0.0, %v2652
          %v2654 = vrot.slane %v2639, 4
          %v2655 = vsel %vm2013, 0.0, %v2654
          %v2656 = vrot.slane %v2647, 4
          %v2657 = vsel %vm2013, 0.0, %v2656
          %v2658 = vrot.slane %v2651, 4
          %v2659 = vsel %vm2013, 0.0, %v2658
          %v2660 = vld [vmem:[#allocation13 + $0x60] sm:$0xff]
          %v2661 = vrot.slane %v1990, 4
          %v2662 = vsel %vm2013, 0.0, %v2661
          %v2664 = vunpack.c.l.s4 1983009808
          %v2665 = vunpack.c.0.s8 %v2664
          %v2666 = vperm.slane %v2660, %v2665
          %v2668 = vunpack.c.l.s4 1983009808
          %v2669 = vunpack.c.0.s8 %v2668
          %v2670 = vperm.slane %v2662, %v2669
          %v2671 = vld [vmem:[#allocation13 + $0xe0] sm:$0xff]
          %v2672 = vrot.slane %v2006, 4
          %v2673 = vsel %vm2013, 0.0, %v2672
          %v2675 = vunpack.c.l.s4 1983009808
          %v2676 = vunpack.c.0.s8 %v2675
          %v2677 = vperm.slane %v2671, %v2676
          %v2679 = vunpack.c.l.s4 1983009808
          %v2680 = vunpack.c.0.s8 %v2679
          %v2681 = vperm.slane %v2673, %v2680
          %v2682 = vrot.slane %v2677, 4
          %v2683 = vsel %vm2013, %v2682, %v2666
          %v2684 = vrot.slane %v2666, 4
          %v2685 = vsel %vm2013, %v2677, %v2684
          %v2687 = vunpack.c.l.s4 1934713408
          %v2688 = vunpack.c.0.s8 %v2687
          %v2689 = vperm.slane %v2683, %v2688
          %v2691 = vunpack.c.l.s4 1934713408
          %v2692 = vunpack.c.0.s8 %v2691
          %v2693 = vperm.slane %v2685, %v2692
          %v2694 = vrot.slane %v2681, 4
          %v2695 = vsel %vm2013, %v2694, %v2670
          %v2696 = vrot.slane %v2670, 4
          %v2697 = vsel %vm2013, %v2681, %v2696
          %v2699 = vunpack.c.l.s4 1934713408
          %v2700 = vunpack.c.0.s8 %v2699
          %v2701 = vperm.slane %v2695, %v2700
          %v2703 = vunpack.c.l.s4 1934713408
          %v2704 = vunpack.c.0.s8 %v2703
          %v2705 = vperm.slane %v2697, %v2704
          %v2706 = vrot.slane %v2689, 4
          %v2707 = vsel %vm2013, 0.0, %v2706
          %v2708 = vrot.slane %v2693, 4
          %v2709 = vsel %vm2013, 0.0, %v2708
          %v2710 = vrot.slane %v2701, 4
          %v2711 = vsel %vm2013, 0.0, %v2710
          %v2712 = vrot.slane %v2705, 4
          %v2713 = vsel %vm2013, 0.0, %v2712
          %v2714 = vld [vmem:[#allocation13 + $0x68] sm:$0xff]
          %v2715 = vrot.slane %v1991, 4
          %v2716 = vsel %vm2013, 0.0, %v2715
          %v2718 = vunpack.c.l.s4 1983009808
          %v2719 = vunpack.c.0.s8 %v2718
          %v2720 = vperm.slane %v2714, %v2719
          %v2722 = vunpack.c.l.s4 1983009808
          %v2723 = vunpack.c.0.s8 %v2722
          %v2724 = vperm.slane %v2716, %v2723
          %v2725 = vld [vmem:[#allocation13 + $0xe8] sm:$0xff]
          %v2726 = vrot.slane %v2007, 4
          %v2727 = vsel %vm2013, 0.0, %v2726
          %v2729 = vunpack.c.l.s4 1983009808
          %v2730 = vunpack.c.0.s8 %v2729
          %v2731 = vperm.slane %v2725, %v2730
          %v2733 = vunpack.c.l.s4 1983009808
          %v2734 = vunpack.c.0.s8 %v2733
          %v2735 = vperm.slane %v2727, %v2734
          %v2736 = vrot.slane %v2731, 4
          %v2737 = vsel %vm2013, %v2736, %v2720
          %v2738 = vrot.slane %v2720, 4
          %v2739 = vsel %vm2013, %v2731, %v2738
          %v2741 = vunpack.c.l.s4 1934713408
          %v2742 = vunpack.c.0.s8 %v2741
          %v2743 = vperm.slane %v2737, %v2742
          %v2745 = vunpack.c.l.s4 1934713408
          %v2746 = vunpack.c.0.s8 %v2745
          %v2747 = vperm.slane %v2739, %v2746
          %v2748 = vrot.slane %v2735, 4
          %v2749 = vsel %vm2013, %v2748, %v2724
          %v2750 = vrot.slane %v2724, 4
          %v2751 = vsel %vm2013, %v2735, %v2750
          %v2753 = vunpack.c.l.s4 1934713408
          %v2754 = vunpack.c.0.s8 %v2753
          %v2755 = vperm.slane %v2749, %v2754
          %v2757 = vunpack.c.l.s4 1934713408
          %v2758 = vunpack.c.0.s8 %v2757
          %v2759 = vperm.slane %v2751, %v2758
          %v2760 = vrot.slane %v2743, 4
          %v2761 = vsel %vm2013, 0.0, %v2760
          %v2762 = vrot.slane %v2747, 4
          %v2763 = vsel %vm2013, 0.0, %v2762
          %v2764 = vrot.slane %v2755, 4
          %v2765 = vsel %vm2013, 0.0, %v2764
          %v2766 = vrot.slane %v2759, 4
          %v2767 = vsel %vm2013, 0.0, %v2766
          %v2768 = vld [vmem:[#allocation13 + $0x70] sm:$0xff]
          %v2769 = vrot.slane %v1992, 4
          %v2770 = vsel %vm2013, 0.0, %v2769
          %v2772 = vunpack.c.l.s4 1983009808
          %v2773 = vunpack.c.0.s8 %v2772
          %v2774 = vperm.slane %v2768, %v2773
          %v2776 = vunpack.c.l.s4 1983009808
          %v2777 = vunpack.c.0.s8 %v2776
          %v2778 = vperm.slane %v2770, %v2777
          %v2779 = vld [vmem:[#allocation13 + $0xf0] sm:$0xff]
          %v2780 = vrot.slane %v2008, 4
          %v2781 = vsel %vm2013, 0.0, %v2780
          %v2783 = vunpack.c.l.s4 1983009808
          %v2784 = vunpack.c.0.s8 %v2783
          %v2785 = vperm.slane %v2779, %v2784
          %v2787 = vunpack.c.l.s4 1983009808
          %v2788 = vunpack.c.0.s8 %v2787
          %v2789 = vperm.slane %v2781, %v2788
          %v2790 = vrot.slane %v2785, 4
          %v2791 = vsel %vm2013, %v2790, %v2774
          %v2792 = vrot.slane %v2774, 4
          %v2793 = vsel %vm2013, %v2785, %v2792
          %v2795 = vunpack.c.l.s4 1934713408
          %v2796 = vunpack.c.0.s8 %v2795
          %v2797 = vperm.slane %v2791, %v2796
          %v2799 = vunpack.c.l.s4 1934713408
          %v2800 = vunpack.c.0.s8 %v2799
          %v2801 = vperm.slane %v2793, %v2800
          %v2802 = vrot.slane %v2789, 4
          %v2803 = vsel %vm2013, %v2802, %v2778
          %v2804 = vrot.slane %v2778, 4
          %v2805 = vsel %vm2013, %v2789, %v2804
          %v2807 = vunpack.c.l.s4 1934713408
          %v2808 = vunpack.c.0.s8 %v2807
          %v2809 = vperm.slane %v2803, %v2808
          %v2811 = vunpack.c.l.s4 1934713408
          %v2812 = vunpack.c.0.s8 %v2811
          %v2813 = vperm.slane %v2805, %v2812
          %v2814 = vrot.slane %v2797, 4
          %v2815 = vsel %vm2013, 0.0, %v2814
          %v2816 = vrot.slane %v2801, 4
          %v2817 = vsel %vm2013, 0.0, %v2816
          %v2818 = vrot.slane %v2809, 4
          %v2819 = vsel %vm2013, 0.0, %v2818
          %v2820 = vrot.slane %v2813, 4
          %v2821 = vsel %vm2013, 0.0, %v2820
          %v2822 = vld [vmem:[#allocation13 + $0x78] sm:$0xff]
          %v2823 = vrot.slane %v1993, 4
          %v2824 = vsel %vm2013, 0.0, %v2823
          %v2826 = vunpack.c.l.s4 1983009808
          %v2827 = vunpack.c.0.s8 %v2826
          %v2828 = vperm.slane %v2822, %v2827
          %v2830 = vunpack.c.l.s4 1983009808
          %v2831 = vunpack.c.0.s8 %v2830
          %v2832 = vperm.slane %v2824, %v2831
          %v2833 = vld [vmem:[#allocation13 + $0xf8] sm:$0xff]
          %v2834 = vrot.slane %v2009, 4
          %v2835 = vsel %vm2013, 0.0, %v2834
          %v2837 = vunpack.c.l.s4 1983009808
          %v2838 = vunpack.c.0.s8 %v2837
          %v2839 = vperm.slane %v2833, %v2838
          %v2841 = vunpack.c.l.s4 1983009808
          %v2842 = vunpack.c.0.s8 %v2841
          %v2843 = vperm.slane %v2835, %v2842
          %v2844 = vrot.slane %v2839, 4
          %v2845 = vsel %vm2013, %v2844, %v2828
          %v2846 = vrot.slane %v2828, 4
          %v2847 = vsel %vm2013, %v2839, %v2846
          %v2849 = vunpack.c.l.s4 1934713408
          %v2850 = vunpack.c.0.s8 %v2849
          %v2851 = vperm.slane %v2845, %v2850
          %v2853 = vunpack.c.l.s4 1934713408
          %v2854 = vunpack.c.0.s8 %v2853
          %v2855 = vperm.slane %v2847, %v2854
          %v2856 = vrot.slane %v2843, 4
          %v2857 = vsel %vm2013, %v2856, %v2832
          %v2858 = vrot.slane %v2832, 4
          %v2859 = vsel %vm2013, %v2843, %v2858
          %v2861 = vunpack.c.l.s4 1934713408
          %v2862 = vunpack.c.0.s8 %v2861
          %v2863 = vperm.slane %v2857, %v2862
          %v2865 = vunpack.c.l.s4 1934713408
          %v2866 = vunpack.c.0.s8 %v2865
          %v2867 = vperm.slane %v2859, %v2866
          %v2868 = vrot.slane %v2851, 4
          %v2869 = vsel %vm2013, 0.0, %v2868
          %v2870 = vrot.slane %v2855, 4
          %v2871 = vsel %vm2013, 0.0, %v2870
          %v2872 = vrot.slane %v2863, 4
          %v2873 = vsel %vm2013, 0.0, %v2872
          %v2874 = vrot.slane %v2867, 4
          %v2875 = vsel %vm2013, 0.0, %v2874
          %v2876 = vsel %vm2013, %v2060, %v2041
          %v2878 = vunpack.c.l.s4 1983009808
          %v2879 = vunpack.c.0.s8 %v2878
          %v2880 = vperm.slane %v2876, %v2879
          %v2881 = vrot.slane %v2061, 4
          %v2882 = vsel %vm2013, %v2881, %v2059
          %v2884 = vunpack.c.l.s4 1983009808
          %v2885 = vunpack.c.0.s8 %v2884
          %v2886 = vperm.slane %v2882, %v2885
          %v2887 = vsel %vm2013, %v2064, %v2053
          %v2889 = vunpack.c.l.s4 1983009808
          %v2890 = vunpack.c.0.s8 %v2889
          %v2891 = vperm.slane %v2887, %v2890
          %v2892 = vrot.slane %v2065, 4
          %v2893 = vsel %vm2013, %v2892, %v2063
          %v2895 = vunpack.c.l.s4 1983009808
          %v2896 = vunpack.c.0.s8 %v2895
          %v2897 = vperm.slane %v2893, %v2896
          %v2898 = vrot.slane %v2886, 4
          %v2899 = vsel %vm2013, %v2898, %v2880
          %v2901 = vunpack.c.l.s4 1934713408
          %v2902 = vunpack.c.0.s8 %v2901
          %v2903 = vperm.slane %v2899, %v2902
          %v2904 = vrot.slane %v2897, 4
          %v2905 = vsel %vm2013, %v2904, %v2891
          %v2907 = vunpack.c.l.s4 1934713408
          %v2908 = vunpack.c.0.s8 %v2907
          %v2909 = vperm.slane %v2905, %v2908
          %v2910 = vrot.slane %v2909, 4
          %v2911 = vsel %vm2013, %v2910, %v2903
          %v2912 = vrot.slane %v2903, 4
          %v2913 = vsel %vm2013, %v2909, %v2912
          %v2914 = vsel %vm2013, %v2114, %v2095
          %v2916 = vunpack.c.l.s4 1983009808
          %v2917 = vunpack.c.0.s8 %v2916
          %v2918 = vperm.slane %v2914, %v2917
          %v2919 = vrot.slane %v2115, 4
          %v2920 = vsel %vm2013, %v2919, %v2113
          %v2922 = vunpack.c.l.s4 1983009808
          %v2923 = vunpack.c.0.s8 %v2922
          %v2924 = vperm.slane %v2920, %v2923
          %v2925 = vsel %vm2013, %v2118, %v2107
          %v2927 = vunpack.c.l.s4 1983009808
          %v2928 = vunpack.c.0.s8 %v2927
          %v2929 = vperm.slane %v2925, %v2928
          %v2930 = vrot.slane %v2119, 4
          %v2931 = vsel %vm2013, %v2930, %v2117
          %v2933 = vunpack.c.l.s4 1983009808
          %v2934 = vunpack.c.0.s8 %v2933
          %v2935 = vperm.slane %v2931, %v2934
          %v2936 = vrot.slane %v2924, 4
          %v2937 = vsel %vm2013, %v2936, %v2918
          %v2939 = vunpack.c.l.s4 1934713408
          %v2940 = vunpack.c.0.s8 %v2939
          %v2941 = vperm.slane %v2937, %v2940
          %v2942 = vrot.slane %v2935, 4
          %v2943 = vsel %vm2013, %v2942, %v2929
          %v2945 = vunpack.c.l.s4 1934713408
          %v2946 = vunpack.c.0.s8 %v2945
          %v2947 = vperm.slane %v2943, %v2946
          %v2948 = vrot.slane %v2947, 4
          %v2949 = vsel %vm2013, %v2948, %v2941
          %v2950 = vrot.slane %v2941, 4
          %v2951 = vsel %vm2013, %v2947, %v2950
          %v2952 = vsel %vm2013, %v2168, %v2149
          %v2954 = vunpack.c.l.s4 1983009808
          %v2955 = vunpack.c.0.s8 %v2954
          %v2956 = vperm.slane %v2952, %v2955
          %v2957 = vrot.slane %v2169, 4
          %v2958 = vsel %vm2013, %v2957, %v2167
          %v2960 = vunpack.c.l.s4 1983009808
          %v2961 = vunpack.c.0.s8 %v2960
          %v2962 = vperm.slane %v2958, %v2961
          %v2963 = vsel %vm2013, %v2172, %v2161
          %v2965 = vunpack.c.l.s4 1983009808
          %v2966 = vunpack.c.0.s8 %v2965
          %v2967 = vperm.slane %v2963, %v2966
          %v2968 = vrot.slane %v2173, 4
          %v2969 = vsel %vm2013, %v2968, %v2171
          %v2971 = vunpack.c.l.s4 1983009808
          %v2972 = vunpack.c.0.s8 %v2971
          %v2973 = vperm.slane %v2969, %v2972
          %v2974 = vrot.slane %v2962, 4
          %v2975 = vsel %vm2013, %v2974, %v2956
          %v2977 = vunpack.c.l.s4 1934713408
          %v2978 = vunpack.c.0.s8 %v2977
          %v2979 = vperm.slane %v2975, %v2978
          %v2980 = vrot.slane %v2973, 4
          %v2981 = vsel %vm2013, %v2980, %v2967
          %v2983 = vunpack.c.l.s4 1934713408
          %v2984 = vunpack.c.0.s8 %v2983
          %v2985 = vperm.slane %v2981, %v2984
          %v2986 = vrot.slane %v2985, 4
          %v2987 = vsel %vm2013, %v2986, %v2979
          %v2988 = vrot.slane %v2979, 4
          %v2989 = vsel %vm2013, %v2985, %v2988
          %v2990 = vsel %vm2013, %v2222, %v2203
          %v2992 = vunpack.c.l.s4 1983009808
          %v2993 = vunpack.c.0.s8 %v2992
          %v2994 = vperm.slane %v2990, %v2993
          %v2995 = vrot.slane %v2223, 4
          %v2996 = vsel %vm2013, %v2995, %v2221
          %v2998 = vunpack.c.l.s4 1983009808
          %v2999 = vunpack.c.0.s8 %v2998
          %v3000 = vperm.slane %v2996, %v2999
          %v3001 = vsel %vm2013, %v2226, %v2215
          %v3003 = vunpack.c.l.s4 1983009808
          %v3004 = vunpack.c.0.s8 %v3003
          %v3005 = vperm.slane %v3001, %v3004
          %v3006 = vrot.slane %v2227, 4
          %v3007 = vsel %vm2013, %v3006, %v2225
          %v3009 = vunpack.c.l.s4 1983009808
          %v3010 = vunpack.c.0.s8 %v3009
          %v3011 = vperm.slane %v3007, %v3010
          %v3012 = vrot.slane %v3000, 4
          %v3013 = vsel %vm2013, %v3012, %v2994
          %v3015 = vunpack.c.l.s4 1934713408
          %v3016 = vunpack.c.0.s8 %v3015
          %v3017 = vperm.slane %v3013, %v3016
          %v3018 = vrot.slane %v3011, 4
          %v3019 = vsel %vm2013, %v3018, %v3005
          %v3021 = vunpack.c.l.s4 1934713408
          %v3022 = vunpack.c.0.s8 %v3021
          %v3023 = vperm.slane %v3019, %v3022
          %v3024 = vrot.slane %v3023, 4
          %v3025 = vsel %vm2013, %v3024, %v3017
          %v3026 = vrot.slane %v3017, 4
          %v3027 = vsel %vm2013, %v3023, %v3026
          %v3028 = vsel %vm2013, %v2276, %v2257
          %v3030 = vunpack.c.l.s4 1983009808
          %v3031 = vunpack.c.0.s8 %v3030
          %v3032 = vperm.slane %v3028, %v3031
          %v3033 = vrot.slane %v2277, 4
          %v3034 = vsel %vm2013, %v3033, %v2275
          %v3036 = vunpack.c.l.s4 1983009808
          %v3037 = vunpack.c.0.s8 %v3036
          %v3038 = vperm.slane %v3034, %v3037
          %v3039 = vsel %vm2013, %v2280, %v2269
          %v3041 = vunpack.c.l.s4 1983009808
          %v3042 = vunpack.c.0.s8 %v3041
          %v3043 = vperm.slane %v3039, %v3042
          %v3044 = vrot.slane %v2281, 4
          %v3045 = vsel %vm2013, %v3044, %v2279
          %v3047 = vunpack.c.l.s4 1983009808
          %v3048 = vunpack.c.0.s8 %v3047
          %v3049 = vperm.slane %v3045, %v3048
          %v3050 = vrot.slane %v3038, 4
          %v3051 = vsel %vm2013, %v3050, %v3032
          %v3053 = vunpack.c.l.s4 1934713408
          %v3054 = vunpack.c.0.s8 %v3053
          %v3055 = vperm.slane %v3051, %v3054
          %v3056 = vrot.slane %v3049, 4
          %v3057 = vsel %vm2013, %v3056, %v3043
          %v3059 = vunpack.c.l.s4 1934713408
          %v3060 = vunpack.c.0.s8 %v3059
          %v3061 = vperm.slane %v3057, %v3060
          %v3062 = vrot.slane %v3061, 4
          %v3063 = vsel %vm2013, %v3062, %v3055
          %v3064 = vrot.slane %v3055, 4
          %v3065 = vsel %vm2013, %v3061, %v3064
          %v3066 = vsel %vm2013, %v2330, %v2311
          %v3068 = vunpack.c.l.s4 1983009808
          %v3069 = vunpack.c.0.s8 %v3068
          %v3070 = vperm.slane %v3066, %v3069
          %v3071 = vrot.slane %v2331, 4
          %v3072 = vsel %vm2013, %v3071, %v2329
          %v3074 = vunpack.c.l.s4 1983009808
          %v3075 = vunpack.c.0.s8 %v3074
          %v3076 = vperm.slane %v3072, %v3075
          %v3077 = vsel %vm2013, %v2334, %v2323
          %v3079 = vunpack.c.l.s4 1983009808
          %v3080 = vunpack.c.0.s8 %v3079
          %v3081 = vperm.slane %v3077, %v3080
          %v3082 = vrot.slane %v2335, 4
          %v3083 = vsel %vm2013, %v3082, %v2333
          %v3085 = vunpack.c.l.s4 1983009808
          %v3086 = vunpack.c.0.s8 %v3085
          %v3087 = vperm.slane %v3083, %v3086
          %v3088 = vrot.slane %v3076, 4
          %v3089 = vsel %vm2013, %v3088, %v3070
          %v3091 = vunpack.c.l.s4 1934713408
          %v3092 = vunpack.c.0.s8 %v3091
          %v3093 = vperm.slane %v3089, %v3092
          %v3094 = vrot.slane %v3087, 4
          %v3095 = vsel %vm2013, %v3094, %v3081
          %v3097 = vunpack.c.l.s4 1934713408
          %v3098 = vunpack.c.0.s8 %v3097
          %v3099 = vperm.slane %v3095, %v3098
          %v3100 = vrot.slane %v3099, 4
          %v3101 = vsel %vm2013, %v3100, %v3093
          %v3102 = vrot.slane %v3093, 4
          %v3103 = vsel %vm2013, %v3099, %v3102
          %v3104 = vsel %vm2013, %v2384, %v2365
          %v3106 = vunpack.c.l.s4 1983009808
          %v3107 = vunpack.c.0.s8 %v3106
          %v3108 = vperm.slane %v3104, %v3107
          %v3109 = vrot.slane %v2385, 4
          %v3110 = vsel %vm2013, %v3109, %v2383
          %v3112 = vunpack.c.l.s4 1983009808
          %v3113 = vunpack.c.0.s8 %v3112
          %v3114 = vperm.slane %v3110, %v3113
          %v3115 = vsel %vm2013, %v2388, %v2377
          %v3117 = vunpack.c.l.s4 1983009808
          %v3118 = vunpack.c.0.s8 %v3117
          %v3119 = vperm.slane %v3115, %v3118
          %v3120 = vrot.slane %v2389, 4
          %v3121 = vsel %vm2013, %v3120, %v2387
          %v3123 = vunpack.c.l.s4 1983009808
          %v3124 = vunpack.c.0.s8 %v3123
          %v3125 = vperm.slane %v3121, %v3124
          %v3126 = vrot.slane %v3114, 4
          %v3127 = vsel %vm2013, %v3126, %v3108
          %v3129 = vunpack.c.l.s4 1934713408
          %v3130 = vunpack.c.0.s8 %v3129
          %v3131 = vperm.slane %v3127, %v3130
          %v3132 = vrot.slane %v3125, 4
          %v3133 = vsel %vm2013, %v3132, %v3119
          %v3135 = vunpack.c.l.s4 1934713408
          %v3136 = vunpack.c.0.s8 %v3135
          %v3137 = vperm.slane %v3133, %v3136
          %v3138 = vrot.slane %v3137, 4
          %v3139 = vsel %vm2013, %v3138, %v3131
          %v3140 = vrot.slane %v3131, 4
          %v3141 = vsel %vm2013, %v3137, %v3140
          %v3142 = vsel %vm2013, %v2438, %v2419
          %v3144 = vunpack.c.l.s4 1983009808
          %v3145 = vunpack.c.0.s8 %v3144
          %v3146 = vperm.slane %v3142, %v3145
          %v3147 = vrot.slane %v2439, 4
          %v3148 = vsel %vm2013, %v3147, %v2437
          %v3150 = vunpack.c.l.s4 1983009808
          %v3151 = vunpack.c.0.s8 %v3150
          %v3152 = vperm.slane %v3148, %v3151
          %v3153 = vsel %vm2013, %v2442, %v2431
          %v3155 = vunpack.c.l.s4 1983009808
          %v3156 = vunpack.c.0.s8 %v3155
          %v3157 = vperm.slane %v3153, %v3156
          %v3158 = vrot.slane %v2443, 4
          %v3159 = vsel %vm2013, %v3158, %v2441
          %v3161 = vunpack.c.l.s4 1983009808
          %v3162 = vunpack.c.0.s8 %v3161
          %v3163 = vperm.slane %v3159, %v3162
          %v3164 = vrot.slane %v3152, 4
          %v3165 = vsel %vm2013, %v3164, %v3146
          %v3167 = vunpack.c.l.s4 1934713408
          %v3168 = vunpack.c.0.s8 %v3167
          %v3169 = vperm.slane %v3165, %v3168
          %v3170 = vrot.slane %v3163, 4
          %v3171 = vsel %vm2013, %v3170, %v3157
          %v3173 = vunpack.c.l.s4 1934713408
          %v3174 = vunpack.c.0.s8 %v3173
          %v3175 = vperm.slane %v3171, %v3174
          %v3176 = vrot.slane %v3175, 4
          %v3177 = vsel %vm2013, %v3176, %v3169
          %v3178 = vrot.slane %v3169, 4
          %v3179 = vsel %vm2013, %v3175, %v3178
          %v3180 = vsel %vm2013, %v2492, %v2473
          %v3182 = vunpack.c.l.s4 1983009808
          %v3183 = vunpack.c.0.s8 %v3182
          %v3184 = vperm.slane %v3180, %v3183
          %v3185 = vrot.slane %v2493, 4
          %v3186 = vsel %vm2013, %v3185, %v2491
          %v3188 = vunpack.c.l.s4 1983009808
          %v3189 = vunpack.c.0.s8 %v3188
          %v3190 = vperm.slane %v3186, %v3189
          %v3191 = vsel %vm2013, %v2496, %v2485
          %v3193 = vunpack.c.l.s4 1983009808
          %v3194 = vunpack.c.0.s8 %v3193
          %v3195 = vperm.slane %v3191, %v3194
          %v3196 = vrot.slane %v2497, 4
          %v3197 = vsel %vm2013, %v3196, %v2495
          %v3199 = vunpack.c.l.s4 1983009808
          %v3200 = vunpack.c.0.s8 %v3199
          %v3201 = vperm.slane %v3197, %v3200
          %v3202 = vrot.slane %v3190, 4
          %v3203 = vsel %vm2013, %v3202, %v3184
          %v3205 = vunpack.c.l.s4 1934713408
          %v3206 = vunpack.c.0.s8 %v3205
          %v3207 = vperm.slane %v3203, %v3206
          %v3208 = vrot.slane %v3201, 4
          %v3209 = vsel %vm2013, %v3208, %v3195
          %v3211 = vunpack.c.l.s4 1934713408
          %v3212 = vunpack.c.0.s8 %v3211
          %v3213 = vperm.slane %v3209, %v3212
          %v3214 = vrot.slane %v3213, 4
          %v3215 = vsel %vm2013, %v3214, %v3207
          %v3216 = vrot.slane %v3207, 4
          %v3217 = vsel %vm2013, %v3213, %v3216
          %v3218 = vsel %vm2013, %v2546, %v2527
          %v3220 = vunpack.c.l.s4 1983009808
          %v3221 = vunpack.c.0.s8 %v3220
          %v3222 = vperm.slane %v3218, %v3221
          %v3223 = vrot.slane %v2547, 4
          %v3224 = vsel %vm2013, %v3223, %v2545
          %v3226 = vunpack.c.l.s4 1983009808
          %v3227 = vunpack.c.0.s8 %v3226
          %v3228 = vperm.slane %v3224, %v3227
          %v3229 = vsel %vm2013, %v2550, %v2539
          %v3231 = vunpack.c.l.s4 1983009808
          %v3232 = vunpack.c.0.s8 %v3231
          %v3233 = vperm.slane %v3229, %v3232
          %v3234 = vrot.slane %v2551, 4
          %v3235 = vsel %vm2013, %v3234, %v2549
          %v3237 = vunpack.c.l.s4 1983009808
          %v3238 = vunpack.c.0.s8 %v3237
          %v3239 = vperm.slane %v3235, %v3238
          %v3240 = vrot.slane %v3228, 4
          %v3241 = vsel %vm2013, %v3240, %v3222
          %v3243 = vunpack.c.l.s4 1934713408
          %v3244 = vunpack.c.0.s8 %v3243
          %v3245 = vperm.slane %v3241, %v3244
          %v3246 = vrot.slane %v3239, 4
          %v3247 = vsel %vm2013, %v3246, %v3233
          %v3249 = vunpack.c.l.s4 1934713408
          %v3250 = vunpack.c.0.s8 %v3249
          %v3251 = vperm.slane %v3247, %v3250
          %v3252 = vrot.slane %v3251, 4
          %v3253 = vsel %vm2013, %v3252, %v3245
          %v3254 = vrot.slane %v3245, 4
          %v3255 = vsel %vm2013, %v3251, %v3254
          %v3256 = vsel %vm2013, %v2600, %v2581
          %v3258 = vunpack.c.l.s4 1983009808
          %v3259 = vunpack.c.0.s8 %v3258
          %v3260 = vperm.slane %v3256, %v3259
          %v3261 = vrot.slane %v2601, 4
          %v3262 = vsel %vm2013, %v3261, %v2599
          %v3264 = vunpack.c.l.s4 1983009808
          %v3265 = vunpack.c.0.s8 %v3264
          %v3266 = vperm.slane %v3262, %v3265
          %v3267 = vsel %vm2013, %v2604, %v2593
          %v3269 = vunpack.c.l.s4 1983009808
          %v3270 = vunpack.c.0.s8 %v3269
          %v3271 = vperm.slane %v3267, %v3270
          %v3272 = vrot.slane %v2605, 4
          %v3273 = vsel %vm2013, %v3272, %v2603
          %v3275 = vunpack.c.l.s4 1983009808
          %v3276 = vunpack.c.0.s8 %v3275
          %v3277 = vperm.slane %v3273, %v3276
          %v3278 = vrot.slane %v3266, 4
          %v3279 = vsel %vm2013, %v3278, %v3260
          %v3281 = vunpack.c.l.s4 1934713408
          %v3282 = vunpack.c.0.s8 %v3281
          %v3283 = vperm.slane %v3279, %v3282
          %v3284 = vrot.slane %v3277, 4
          %v3285 = vsel %vm2013, %v3284, %v3271
          %v3287 = vunpack.c.l.s4 1934713408
          %v3288 = vunpack.c.0.s8 %v3287
          %v3289 = vperm.slane %v3285, %v3288
          %v3290 = vrot.slane %v3289, 4
          %v3291 = vsel %vm2013, %v3290, %v3283
          %v3292 = vrot.slane %v3283, 4
          %v3293 = vsel %vm2013, %v3289, %v3292
          %v3294 = vsel %vm2013, %v2654, %v2635
          %v3296 = vunpack.c.l.s4 1983009808
          %v3297 = vunpack.c.0.s8 %v3296
          %v3298 = vperm.slane %v3294, %v3297
          %v3299 = vrot.slane %v2655, 4
          %v3300 = vsel %vm2013, %v3299, %v2653
          %v3302 = vunpack.c.l.s4 1983009808
          %v3303 = vunpack.c.0.s8 %v3302
          %v3304 = vperm.slane %v3300, %v3303
          %v3305 = vsel %vm2013, %v2658, %v2647
          %v3307 = vunpack.c.l.s4 1983009808
          %v3308 = vunpack.c.0.s8 %v3307
          %v3309 = vperm.slane %v3305, %v3308
          %v3310 = vrot.slane %v2659, 4
          %v3311 = vsel %vm2013, %v3310, %v2657
          %v3313 = vunpack.c.l.s4 1983009808
          %v3314 = vunpack.c.0.s8 %v3313
          %v3315 = vperm.slane %v3311, %v3314
          %v3316 = vrot.slane %v3304, 4
          %v3317 = vsel %vm2013, %v3316, %v3298
          %v3319 = vunpack.c.l.s4 1934713408
          %v3320 = vunpack.c.0.s8 %v3319
          %v3321 = vperm.slane %v3317, %v3320
          %v3322 = vrot.slane %v3315, 4
          %v3323 = vsel %vm2013, %v3322, %v3309
          %v3325 = vunpack.c.l.s4 1934713408
          %v3326 = vunpack.c.0.s8 %v3325
          %v3327 = vperm.slane %v3323, %v3326
          %v3328 = vrot.slane %v3327, 4
          %v3329 = vsel %vm2013, %v3328, %v3321
          %v3330 = vrot.slane %v3321, 4
          %v3331 = vsel %vm2013, %v3327, %v3330
          %v3332 = vsel %vm2013, %v2708, %v2689
          %v3334 = vunpack.c.l.s4 1983009808
          %v3335 = vunpack.c.0.s8 %v3334
          %v3336 = vperm.slane %v3332, %v3335
          %v3337 = vrot.slane %v2709, 4
          %v3338 = vsel %vm2013, %v3337, %v2707
          %v3340 = vunpack.c.l.s4 1983009808
          %v3341 = vunpack.c.0.s8 %v3340
          %v3342 = vperm.slane %v3338, %v3341
          %v3343 = vsel %vm2013, %v2712, %v2701
          %v3345 = vunpack.c.l.s4 1983009808
          %v3346 = vunpack.c.0.s8 %v3345
          %v3347 = vperm.slane %v3343, %v3346
          %v3348 = vrot.slane %v2713, 4
          %v3349 = vsel %vm2013, %v3348, %v2711
          %v3351 = vunpack.c.l.s4 1983009808
          %v3352 = vunpack.c.0.s8 %v3351
          %v3353 = vperm.slane %v3349, %v3352
          %v3354 = vrot.slane %v3342, 4
          %v3355 = vsel %vm2013, %v3354, %v3336
          %v3357 = vunpack.c.l.s4 1934713408
          %v3358 = vunpack.c.0.s8 %v3357
          %v3359 = vperm.slane %v3355, %v3358
          %v3360 = vrot.slane %v3353, 4
          %v3361 = vsel %vm2013, %v3360, %v3347
          %v3363 = vunpack.c.l.s4 1934713408
          %v3364 = vunpack.c.0.s8 %v3363
          %v3365 = vperm.slane %v3361, %v3364
          %v3366 = vrot.slane %v3365, 4
          %v3367 = vsel %vm2013, %v3366, %v3359
          %v3368 = vrot.slane %v3359, 4
          %v3369 = vsel %vm2013, %v3365, %v3368
          %v3370 = vsel %vm2013, %v2762, %v2743
          %v3372 = vunpack.c.l.s4 1983009808
          %v3373 = vunpack.c.0.s8 %v3372
          %v3374 = vperm.slane %v3370, %v3373
          %v3375 = vrot.slane %v2763, 4
          %v3376 = vsel %vm2013, %v3375, %v2761
          %v3378 = vunpack.c.l.s4 1983009808
          %v3379 = vunpack.c.0.s8 %v3378
          %v3380 = vperm.slane %v3376, %v3379
          %v3381 = vsel %vm2013, %v2766, %v2755
          %v3383 = vunpack.c.l.s4 1983009808
          %v3384 = vunpack.c.0.s8 %v3383
          %v3385 = vperm.slane %v3381, %v3384
          %v3386 = vrot.slane %v2767, 4
          %v3387 = vsel %vm2013, %v3386, %v2765
          %v3389 = vunpack.c.l.s4 1983009808
          %v3390 = vunpack.c.0.s8 %v3389
          %v3391 = vperm.slane %v3387, %v3390
          %v3392 = vrot.slane %v3380, 4
          %v3393 = vsel %vm2013, %v3392, %v3374
          %v3395 = vunpack.c.l.s4 1934713408
          %v3396 = vunpack.c.0.s8 %v3395
          %v3397 = vperm.slane %v3393, %v3396
          %v3398 = vrot.slane %v3391, 4
          %v3399 = vsel %vm2013, %v3398, %v3385
          %v3401 = vunpack.c.l.s4 1934713408
          %v3402 = vunpack.c.0.s8 %v3401
          %v3403 = vperm.slane %v3399, %v3402
          %v3404 = vrot.slane %v3403, 4
          %v3405 = vsel %vm2013, %v3404, %v3397
          %v3406 = vrot.slane %v3397, 4
          %v3407 = vsel %vm2013, %v3403, %v3406
          %v3408 = vsel %vm2013, %v2816, %v2797
          %v3410 = vunpack.c.l.s4 1983009808
          %v3411 = vunpack.c.0.s8 %v3410
          %v3412 = vperm.slane %v3408, %v3411
          %v3413 = vrot.slane %v2817, 4
          %v3414 = vsel %vm2013, %v3413, %v2815
          %v3416 = vunpack.c.l.s4 1983009808
          %v3417 = vunpack.c.0.s8 %v3416
          %v3418 = vperm.slane %v3414, %v3417
          %v3419 = vsel %vm2013, %v2820, %v2809
          %v3421 = vunpack.c.l.s4 1983009808
          %v3422 = vunpack.c.0.s8 %v3421
          %v3423 = vperm.slane %v3419, %v3422
          %v3424 = vrot.slane %v2821, 4
          %v3425 = vsel %vm2013, %v3424, %v2819
          %v3427 = vunpack.c.l.s4 1983009808
          %v3428 = vunpack.c.0.s8 %v3427
          %v3429 = vperm.slane %v3425, %v3428
          %v3430 = vrot.slane %v3418, 4
          %v3431 = vsel %vm2013, %v3430, %v3412
          %v3433 = vunpack.c.l.s4 1934713408
          %v3434 = vunpack.c.0.s8 %v3433
          %v3435 = vperm.slane %v3431, %v3434
          %v3436 = vrot.slane %v3429, 4
          %v3437 = vsel %vm2013, %v3436, %v3423
          %v3439 = vunpack.c.l.s4 1934713408
          %v3440 = vunpack.c.0.s8 %v3439
          %v3441 = vperm.slane %v3437, %v3440
          %v3442 = vrot.slane %v3441, 4
          %v3443 = vsel %vm2013, %v3442, %v3435
          %v3444 = vrot.slane %v3435, 4
          %v3445 = vsel %vm2013, %v3441, %v3444
          %v3446 = vsel %vm2013, %v2870, %v2851
          %v3448 = vunpack.c.l.s4 1983009808
          %v3449 = vunpack.c.0.s8 %v3448
          %v3450 = vperm.slane %v3446, %v3449
          %v3451 = vrot.slane %v2871, 4
          %v3452 = vsel %vm2013, %v3451, %v2869
          %v3454 = vunpack.c.l.s4 1983009808
          %v3455 = vunpack.c.0.s8 %v3454
          %v3456 = vperm.slane %v3452, %v3455
          %v3457 = vsel %vm2013, %v2874, %v2863
          %v3459 = vunpack.c.l.s4 1983009808
          %v3460 = vunpack.c.0.s8 %v3459
          %v3461 = vperm.slane %v3457, %v3460
          %v3462 = vrot.slane %v2875, 4
          %v3463 = vsel %vm2013, %v3462, %v2873
          %v3465 = vunpack.c.l.s4 1983009808
          %v3466 = vunpack.c.0.s8 %v3465
          %v3467 = vperm.slane %v3463, %v3466
          %v3468 = vrot.slane %v3456, 4
          %v3469 = vsel %vm2013, %v3468, %v3450
          %v3471 = vunpack.c.l.s4 1934713408
          %v3472 = vunpack.c.0.s8 %v3471
          %v3473 = vperm.slane %v3469, %v3472
          %v3474 = vrot.slane %v3467, 4
          %v3475 = vsel %vm2013, %v3474, %v3461
          %v3477 = vunpack.c.l.s4 1934713408
          %v3478 = vunpack.c.0.s8 %v3477
          %v3479 = vperm.slane %v3475, %v3478
          %v3480 = vrot.slane %v3479, 4
          %v3481 = vsel %vm2013, %v3480, %v3473
          %v3482 = vrot.slane %v3473, 4
          %v3483 = vsel %vm2013, %v3479, %v3482
          %v3484 = vsel %vm2013, 0.0, 0.0
          %v3486 = vunpack.c.l.s4 1983009808
          %v3487 = vunpack.c.0.s8 %v3486
          %v3488 = vperm.slane %v3484, %v3487
          %v3489 = vrot.slane %v3488, 4
          %v3490 = vsel %vm2013, %v3489, %v3488
          %v3492 = vunpack.c.l.s4 1934713408
          %v3493 = vunpack.c.0.s8 %v3492
          %v3494 = vperm.slane %v3490, %v3493
          %v3495 = vrot.slane %v3494, 4
          %v3496 = vsel %vm2013, %v3495, %v3494
          %v3497 = vsel %vm2013, %v3494, %v3495
          %3498 = vmatpush.msra.mxu0 %v3481
          %3499 = vmatpush.msra.mxu0 %v3443
          %3500 = vmatpush.msra.mxu0 %v3405
          %3501 = vmatpush.msra.mxu0 %v3367
          %3502 = vmatpush.msra.mxu0 %v3329
          %3503 = vmatpush.msra.mxu0 %v3291
          %3504 = vmatpush.msra.mxu0 %v3253
          %3505 = vmatpush.msra.mxu0 %v3215
          %3506 = vmatpush.msra.mxu0 %v3177
          %3507 = vmatpush.msra.mxu0 %v3139
          %3508 = vmatpush.msra.mxu0 %v3101
          %3509 = vmatpush.msra.mxu0 %v3063
          %3510 = vmatpush.msra.mxu0 %v3025
          %3511 = vmatpush.msra.mxu0 %v2987
          %3512 = vmatpush.msra.mxu0 %v2949
          %3513 = vmatpush.msra.mxu0 %v2911
          %3514 = vmatmul.f32.gmra.mxu0 %v1955
          %v3515 = vpop.f32.mrf.mxu0
          %v3516 = vadd.f32 %v3496, %v3515
          %3517 = vdwg.mxu0
          %3518 = vmatpush.msra.mxu0 %v3483
          %3519 = vmatpush.msra.mxu0 %v3445
          %3520 = vmatpush.msra.mxu0 %v3407
          %3521 = vmatpush.msra.mxu0 %v3369
          %3522 = vmatpush.msra.mxu0 %v3331
          %3523 = vmatpush.msra.mxu0 %v3293
          %3524 = vmatpush.msra.mxu0 %v3255
          %3525 = vmatpush.msra.mxu0 %v3217
          %3526 = vmatpush.msra.mxu0 %v3179
          %3527 = vmatpush.msra.mxu0 %v3141
          %3528 = vmatpush.msra.mxu0 %v3103
          %3529 = vmatpush.msra.mxu0 %v3065
          %3530 = vmatpush.msra.mxu0 %v3027
          %3531 = vmatpush.msra.mxu0 %v2989
          %3532 = vmatpush.msra.mxu0 %v2951
          %3533 = vmatpush.msra.mxu0 %v2913
          %3534 = vmatmul.f32.gmra.mxu0 %v1955
          %v3535 = vpop.f32.mrf.mxu0
          %v3536 = vadd.f32 %v3497, %v3535
          %3537 = vdwg.mxu0
          %v3538 = vrot.slane %v3516, 4
          %v3539 = vsel %vm2013, 0.0, %v3538
          %v3541 = vunpack.c.l.s4 1983009808
          %v3542 = vunpack.c.0.s8 %v3541
          %v3543 = vperm.slane %v3516, %v3542
          %v3545 = vunpack.c.l.s4 1983009808
          %v3546 = vunpack.c.0.s8 %v3545
          %v3547 = vperm.slane %v3539, %v3546
          %v3548 = vrot.slane %v3536, 4
          %v3549 = vsel %vm2013, 0.0, %v3548
          %v3551 = vunpack.c.l.s4 1983009808
          %v3552 = vunpack.c.0.s8 %v3551
          %v3553 = vperm.slane %v3536, %v3552
          %v3555 = vunpack.c.l.s4 1983009808
          %v3556 = vunpack.c.0.s8 %v3555
          %v3557 = vperm.slane %v3549, %v3556
          %v3558 = vrot.slane %v3553, 4
          %v3559 = vsel %vm2013, %v3558, %v3543
          %v3560 = vrot.slane %v3543, 4
          %v3561 = vsel %vm2013, %v3553, %v3560
          %v3563 = vunpack.c.l.s4 1934713408
          %v3564 = vunpack.c.0.s8 %v3563
          %v3565 = vperm.slane %v3559, %v3564
          %v3567 = vunpack.c.l.s4 1934713408
          %v3568 = vunpack.c.0.s8 %v3567
          %v3569 = vperm.slane %v3561, %v3568
          %v3570 = vrot.slane %v3557, 4
          %v3571 = vsel %vm2013, %v3570, %v3547
          %v3572 = vrot.slane %v3547, 4
          %v3573 = vsel %vm2013, %v3557, %v3572
          %v3575 = vunpack.c.l.s4 1934713408
          %v3576 = vunpack.c.0.s8 %v3575
          %v3577 = vperm.slane %v3571, %v3576
          %v3579 = vunpack.c.l.s4 1934713408
          %v3580 = vunpack.c.0.s8 %v3579
          %v3581 = vperm.slane %v3573, %v3580
          %v3582 = vrot.slane %v3565, 4
          %v3583 = vsel %vm2013, 0.0, %v3582
          %v3584 = vrot.slane %v3569, 4
          %v3585 = vsel %vm2013, 0.0, %v3584
          %v3586 = vrot.slane %v3577, 4
          %v3587 = vsel %vm2013, 0.0, %v3586
          %v3588 = vrot.slane %v3581, 4
          %v3589 = vsel %vm2013, 0.0, %v3588
          %v3591 = vrot.slane %v1977, 1
          %v3592 = vrot.slane %v1977, 2
          %v3593 = vrot.slane %v1977, 3
          %v3594 = vrot.slane %v1977, 4
          %v3595 = vrot.slane %v1977, 5
          %v3596 = vrot.slane %v1977, 6
          %v3597 = vrot.slane %v1977, 7
          %v3598 = vperm.slane %v1977, 0
          %v3599 = vperm.slane %v3591, 0
          %v3600 = vperm.slane %v3592, 0
          %v3601 = vperm.slane %v3593, 0
          %v3602 = vperm.slane %v3594, 0
          %v3603 = vperm.slane %v3595, 0
          %v3604 = vperm.slane %v3596, 0
          %v3605 = vperm.slane %v3597, 0
          %v3614 = vmul.f32 %v3565, %v3598
          %v3615 = vmul.f32 %v3583, %v3599
          %v3616 = vmul.f32 %v3569, %v3600
          %v3617 = vmul.f32 %v3585, %v3601
          %v3618 = vmul.f32 %v3577, %v3602
          %v3619 = vmul.f32 %v3587, %v3603
          %v3620 = vmul.f32 %v3581, %v3604
          %v3621 = vmul.f32 %v3589, %v3605
          %vm3622 = vcmask 1041408
          %v3623 = vsel %vm3622, %v3614, 0.0
          %3624 = vadd.xlane.f32.xlu0 %v3623
          %v3625 = vpop.xlane.xlu0 %3624
          %v3626 = vsel %vm3622, %v3615, 0.0
          %3627 = vadd.xlane.f32.xlu0 %v3626
          %v3628 = vpop.xlane.xlu0 %3627
          %v3629 = vsel %vm3622, %v3616, 0.0
          %3630 = vadd.xlane.f32.xlu0 %v3629
          %v3631 = vpop.xlane.xlu0 %3630
          %v3632 = vsel %vm3622, %v3617, 0.0
          %3633 = vadd.xlane.f32.xlu0 %v3632
          %v3634 = vpop.xlane.xlu0 %3633
          %v3635 = vsel %vm3622, %v3618, 0.0
          %3636 = vadd.xlane.f32.xlu0 %v3635
          %v3637 = vpop.xlane.xlu0 %3636
          %v3638 = vsel %vm3622, %v3619, 0.0
          %3639 = vadd.xlane.f32.xlu0 %v3638
          %v3640 = vpop.xlane.xlu0 %3639
          %v3641 = vsel %vm3622, %v3620, 0.0
          %3642 = vadd.xlane.f32.xlu0 %v3641
          %v3643 = vpop.xlane.xlu0 %3642
          %v3644 = vsel %vm3622, %v3621, 0.0
          %3645 = vadd.xlane.f32.xlu0 %v3644
          %v3646 = vpop.xlane.xlu0 %3645
          %v3648 = vperm.slane %v2010, 0
          %v3649 = vlaneseq
          %v3650 = vshrl.u32 %v3649, 7
          %3652 = vset.pattern.permute.xlu0 %v3650
          %3653 = vperm.xlu0 %3652, %v3648
          %v3654 = vpop.permute.xlu0 %3653
          %v3656 = vadd.f32 %v3625, %v3654
          %v3657 = vadd.f32 %v3628, %v3654
          %v3658 = vadd.f32 %v3631, %v3654
          %v3659 = vadd.f32 %v3634, %v3654
          %v3660 = vadd.f32 %v3637, %v3654
          %v3661 = vadd.f32 %v3640, %v3654
          %v3662 = vadd.f32 %v3643, %v3654
          %v3663 = vadd.f32 %v3646, %v3654
          %3672 = vset.pattern.permute.xlu0 0
          %3673 = vperm.xlu0 %3672, %v3656
          %v3674 = vpop.permute.xlu0 %3673
          %3675 = vset.pattern.permute.xlu0 0
          %3676 = vperm.xlu0 %3675, %v3657
          %v3677 = vpop.permute.xlu0 %3676
          %3678 = vset.pattern.permute.xlu0 0
          %3679 = vperm.xlu0 %3678, %v3658
          %v3680 = vpop.permute.xlu0 %3679
          %3681 = vset.pattern.permute.xlu0 0
          %3682 = vperm.xlu0 %3681, %v3659
          %v3683 = vpop.permute.xlu0 %3682
          %3684 = vset.pattern.permute.xlu0 0
          %3685 = vperm.xlu0 %3684, %v3660
          %v3686 = vpop.permute.xlu0 %3685
          %3687 = vset.pattern.permute.xlu0 0
          %3688 = vperm.xlu0 %3687, %v3661
          %v3689 = vpop.permute.xlu0 %3688
          %3690 = vset.pattern.permute.xlu0 0
          %3691 = vperm.xlu0 %3690, %v3662
          %v3692 = vpop.permute.xlu0 %3691
          %3693 = vset.pattern.permute.xlu0 0
          %3694 = vperm.xlu0 %3693, %v3663
          %v3695 = vpop.permute.xlu0 %3694
          %v3696 = vlaneseq
          %v3697 = vand.u32 %v3696, 127
          %v3698 = vperm.slane %v3674, %v3697
          %v3699 = vperm.slane %v3677, %v3697
          %v3700 = vperm.slane %v3680, %v3697
          %v3701 = vperm.slane %v3683, %v3697
          %v3702 = vperm.slane %v3686, %v3697
          %v3703 = vperm.slane %v3689, %v3697
          %v3704 = vperm.slane %v3692, %v3697
          %v3705 = vperm.slane %v3695, %v3697
          %v3706 = vsel %vm1359, %v3699, %v3698
          %v3707 = vsel %vm1362, %v3700, %v3706
          %v3708 = vsel %vm1365, %v3701, %v3707
          %v3709 = vsel %vm1368, %v3702, %v3708
          %v3710 = vsel %vm1371, %v3703, %v3709
          %v3711 = vsel %vm1374, %v3704, %v3710
          %v3712 = vsel %vm1377, %v3705, %v3711
          %vm3714 = vcmask 15360
          %3715 = vst.msk [vmem:[%s566] sm:$0xff] %vm3714, %v3712
          %v3716 = vld [vmem:[%s558] sm:$0xff]
          %3717 = vset.pattern.permute.xlu0 0
          %3718 = vperm.xlu0 %3717, %v3716
          %v3719 = vpop.permute.xlu0 %3718
          %vm3720 = vcmp.eq.s32.totalorder %v3697, %v3719
          %v3721 = vsel %vm3720, 1, 0
          %v3722 = vcvt.s32.f32 %v3721
          %v3723 = vsel %vm3714, %v3712, -inf
          %3724 = vmax.xlane.f32.xlu0 %v3723
          %v3725 = vpop.xlane.xlu0 %3724
          %v3727 = vperm.slane %v3725, 0
          %v3728 = vperm.slane %v3725, 1
          %v3729 = vperm.slane %v3725, 2
          %v3730 = vperm.slane %v3725, 3
          %v3731 = vperm.slane %v3725, 4
          %v3732 = vperm.slane %v3725, 5
          %v3733 = vperm.slane %v3725, 6
          %v3734 = vperm.slane %v3725, 7
          %v3743 = vsub.f32 %v3656, %v3727
          %v3744 = vsub.f32 %v3657, %v3728
          %v3745 = vsub.f32 %v3658, %v3729
          %v3746 = vsub.f32 %v3659, %v3730
          %v3747 = vsub.f32 %v3660, %v3731
          %v3748 = vsub.f32 %v3661, %v3732
          %v3749 = vsub.f32 %v3662, %v3733
          %v3750 = vsub.f32 %v3663, %v3734
          %v3751 = vmul.f32 %v3743, 1.442695
          %v3752 = vpow.pop %v3751
          %v3753 = vmul.f32 %v3744, 1.442695
          %v3754 = vpow.pop %v3753
          %v3755 = vmul.f32 %v3745, 1.442695
          %v3756 = vpow.pop %v3755
          %v3757 = vmul.f32 %v3746, 1.442695
          %v3758 = vpow.pop %v3757
          %v3759 = vmul.f32 %v3747, 1.442695
          %v3760 = vpow.pop %v3759
          %v3761 = vmul.f32 %v3748, 1.442695
          %v3762 = vpow.pop %v3761
          %v3763 = vmul.f32 %v3749, 1.442695
          %v3764 = vpow.pop %v3763
          %v3765 = vmul.f32 %v3750, 1.442695
          %v3766 = vpow.pop %v3765
          %3775 = vset.pattern.permute.xlu0 0
          %3776 = vperm.xlu0 %3775, %v3752
          %v3777 = vpop.permute.xlu0 %3776
          %3778 = vset.pattern.permute.xlu0 0
          %3779 = vperm.xlu0 %3778, %v3754
          %v3780 = vpop.permute.xlu0 %3779
          %3781 = vset.pattern.permute.xlu0 0
          %3782 = vperm.xlu0 %3781, %v3756
          %v3783 = vpop.permute.xlu0 %3782
          %3784 = vset.pattern.permute.xlu0 0
          %3785 = vperm.xlu0 %3784, %v3758
          %v3786 = vpop.permute.xlu0 %3785
          %3787 = vset.pattern.permute.xlu0 0
          %3788 = vperm.xlu0 %3787, %v3760
          %v3789 = vpop.permute.xlu0 %3788
          %3790 = vset.pattern.permute.xlu0 0
          %3791 = vperm.xlu0 %3790, %v3762
          %v3792 = vpop.permute.xlu0 %3791
          %3793 = vset.pattern.permute.xlu0 0
          %3794 = vperm.xlu0 %3793, %v3764
          %v3795 = vpop.permute.xlu0 %3794
          %3796 = vset.pattern.permute.xlu0 0
          %3797 = vperm.xlu0 %3796, %v3766
          %v3798 = vpop.permute.xlu0 %3797
          %v3799 = vperm.slane %v3777, %v3697
          %v3800 = vperm.slane %v3780, %v3697
          %v3801 = vperm.slane %v3783, %v3697
          %v3802 = vperm.slane %v3786, %v3697
          %v3803 = vperm.slane %v3789, %v3697
          %v3804 = vperm.slane %v3792, %v3697
          %v3805 = vperm.slane %v3795, %v3697
          %v3806 = vperm.slane %v3798, %v3697
          %v3807 = vsel %vm1359, %v3800, %v3799
          %v3808 = vsel %vm1362, %v3801, %v3807
          %v3809 = vsel %vm1365, %v3802, %v3808
          %v3810 = vsel %vm1368, %v3803, %v3809
          %v3811 = vsel %vm1371, %v3804, %v3810
          %v3812 = vsel %vm1374, %v3805, %v3811
          %v3813 = vsel %vm1377, %v3806, %v3812
          %v3815 = vsel %vm3714, %v3813, 0.0
          %3816 = vadd.xlane.f32.xlu0 %v3815
          %v3817 = vpop.xlane.xlu0 %3816
          %v3818 = vlog2.pop %v3817
          %v3819 = vmul.f32 %v3818, 0.6931472
          %v3820 = vadd.f32 %v3725, %v3819
          %v3821 = vsub.f32 %v3820, %v3712
          %v3822 = vmul.f32 %v3722, %v3821
          %v3823 = vsel %vm3714, %v3822, 0.0
          %3824 = vadd.xlane.f32.xlu0 %v3823
          %v3825 = vpop.xlane.xlu0 %3824
          %3826 = vst.msk [vmem:[%s570] sm:$0xff] %vm1923, %v3825
        $region76: #{tpu_custom_call.1} parent=47 // pred_fallthru
          _
        %p3827 = scmp.lt.s32.totalorder %s33, 1
        %s3828 = scalar_select %p3827, %s33, 1
        %s3829 = smul.addr %s3828, 8
        %s3830 = scalar_lea.vmem %s7, %s3829
        %p3831 = scmp.lt.s32.totalorder %s33, 1
        %s3832 = scalar_select %p3831, %s33, 1
        %s3833 = smul.addr %s3832, 8
        %s3834 = scalar_lea.vmem %s8, %s3833
        // Predicated region
        $region77: #{tpu_custom_call.1} parent=47 // pred_check
          %p3835 = pneg %p239
        $region78: #{tpu_custom_call.1} parent=47 // pred_check_branch
          %3837 = sbr.rel (%p3835) target = $region80
        $region79: #{tpu_custom_call.1} parent=47 // pred_region
          _
        $region80: #{tpu_custom_call.1} parent=47 // pred_fallthru
          _
        // Predicated region
        $region81: #{tpu_custom_call.1} parent=47 // pred_check
          %p3838 = pneg %p265
        $region82: #{tpu_custom_call.1} parent=47 // pred_check_branch
          %3840 = sbr.rel (%p3838) target = $region84
        $region83: #{tpu_custom_call.1} parent=47 // pred_region
          _
        $region84: #{tpu_custom_call.1} parent=47 // pred_fallthru
          _
      $region48: #{tpu_custom_call.1} parent=5 // pred_fallthru
        _
      %p3841 = scmp.le.s32.totalorder 2, %s24
      // Predicated region
      $region85: #{tpu_custom_call.1} parent=5 // pred_check
        %p3842 = pneg %p3841
      $region86: #{tpu_custom_call.1} parent=5 // pred_check_branch
        %3844 = sbr.rel (%p3842) target = $region88
      $region87: #{tpu_custom_call.1} parent=5 // pred_region
        %s3845 = ssub.s32 %s24, 2
        // Predicated region
        $region89: #{tpu_custom_call.1} parent=87 // pred_check
          %p3846 = pneg %p245
        $region90: #{tpu_custom_call.1} parent=87 // pred_check_branch
          %3848 = sbr.rel (%p3846) target = $region92
        $region91: #{tpu_custom_call.1} parent=87 // pred_region
          %p3849 = scmp.lt.s32.totalorder %s35, 1
          %s3850 = scalar_select %p3849, %s35, 1
          %s3851 = smul.addr %s3850, 8
          %s3852 = scalar_lea.vmem %s7, %s3851
        $region92: #{tpu_custom_call.1} parent=87 // pred_fallthru
          _
        // Predicated region
        $region93: #{tpu_custom_call.1} parent=87 // pred_check
          %p3853 = pneg %p271
        $region94: #{tpu_custom_call.1} parent=87 // pred_check_branch
          %3855 = sbr.rel (%p3853) target = $region96
        $region95: #{tpu_custom_call.1} parent=87 // pred_region
          %p3856 = scmp.lt.s32.totalorder %s35, 1
          %s3857 = scalar_select %p3856, %s35, 1
          %s3858 = smul.addr %s3857, 8
          %s3859 = scalar_lea.vmem %s8, %s3858
        $region96: #{tpu_custom_call.1} parent=87 // pred_fallthru
          _
      $region88: #{tpu_custom_call.1} parent=5 // pred_fallthru
        _
    $region6: #{tpu_custom_call.1} parent=1 // loop_footer
      %s28 = sadd.s32 1, %s24
    $region7: #{tpu_custom_call.1} parent=1 // loop_footer_branch
      %23 = sbr.rel target = $region3
    $region8: #{tpu_custom_call.1} parent=1 // loop_exit
      _
    %3860 = vsyncpa [#allocation7], 1
    %s3861 = scalar_lea.sflag [#allocation7], 1
    %3862 = vsyncpa %s3861, 1
    %3863 = vsyncpa [#allocation9], 1
    %s3864 = scalar_lea.sflag [#allocation9], 1
    %3865 = vsyncpa %s3864, 1
    %3866 = vsyncpa [#allocation12], 1
    %s3867 = scalar_lea.sflag [#allocation12], 1
    %3868 = vsyncpa %s3867, 1

</llo_original>
